<compile_context>
chip_gen: v7x
topology: tpu7x:2x2x1
jax: 0.10.0
libtpu: 0.0.40
codegen_flags: <defaults>
</compile_context>

<pallas_src>
import math
from functools import partial

import numpy as np
import jax
import jax.numpy as jnp
from jax.experimental import pallas as pl
from jax.experimental.pallas import tpu as pltpu

# ---- small hyper-parameters consistent with Synthesis.__init__ -------------
W_DIM = 32
RESOLUTION = 16                       # -> block_res = [4, 8, 16]
RGB_N = 3
CH_BASE = 64
CH_MAX = 32
BLOCK_RES = [4, 8, 16]
BLOCK_CH = [min(CH_BASE // r, CH_MAX) for r in BLOCK_RES]   # [16, 8, 4]
NUM_WS = 1 + 2 + 2 + 1                # conv counts per block + last torgb = 6

LRELU_ALPHA = 0.2
LRELU_GAIN = math.sqrt(2.0)
LRELU_CLAMP = 256.0

# 3x3 tap offsets (dy, dx), row-major — matches the stacked weight layout.
TAPS = tuple((dy, dx) for dy in (-1, 0, 1) for dx in (-1, 0, 1))

# setup_filter([1,3,3,1]) -> outer(f1d, f1d), f1d = [1,3,3,1]/8.  With the
# up=2 gain of 4 the separable 1D factor becomes g1 = [1,3,3,1]/4.
_G1 = (0.25, 0.75, 0.75, 0.25)
# 1D per-phase taps of upfirdn2d.upsample2d (up=2, pad [2,1], gain 4),
# indexed [phase r][d] for source offset d-1 in {-1,0,+1}.
_IMGUP_1D = ((0.25, 0.75, 0.0), (0.0, 0.75, 0.25))


def _phase_transfer():
    """T[r, d, k]: contribution of 3x3 weight tap k to per-phase tap (d-1) of
    the folded (conv_transpose stride-2 + 4*f low-pass) up=2 convolution."""
    t = []
    for r in (0, 1):
        rows = []
        for di in range(3):
            taps = []
            for k in range(3):
                j = k + 2 * (di - 1) + 1 - r
                taps.append(_G1[j] if 0 <= j < 4 else 0.0)
            rows.append(taps)
        t.append(rows)
    return jnp.asarray(t, jnp.float32)           # [2, 3, 3]


def _scatter_mats(n):
    """0/1 matrices S[ph]: [n*n, (2n)*(2n)] placing phase ph=(2*ry+rx) of the
    4-phase up=2 conv output at merged pixel (2y+ry, 2x+rx)."""
    hw = n * n
    s = np.zeros((4, hw, 4 * hw), np.float32)
    for ry in range(2):
        for rx in range(2):
            ph = 2 * ry + rx
            for y in range(n):
                for x in range(n):
                    s[ph, y * n + x, (2 * y + ry) * (2 * n) + (2 * x + rx)] = 1.0
    return s


def _upsample_mat(n):
    """[n*n, (2n)*(2n)] matrix of upfirdn2d.upsample2d(img, [1,3,3,1], up=2):
    img_up_flat = img_flat @ U  (borders zero-padded, gain 4 folded in)."""
    k1 = np.asarray(_IMGUP_1D, np.float32)       # [2, 3]
    hw = n * n
    u = np.zeros((hw, 4 * hw), np.float32)
    for yy in range(2 * n):
        for xx in range(2 * n):
            for dy in range(3):
                sy = yy // 2 + dy - 1
                if not 0 <= sy < n:
                    continue
                cy = k1[yy % 2, dy]
                if cy == 0.0:
                    continue
                for dx in range(3):
                    sx = xx // 2 + dx - 1
                    if not 0 <= sx < n:
                        continue
                    u[sy * n + sx, yy * (2 * n) + xx] += cy * k1[xx % 2, dx]
    return u


# Layout of the per-sample modulation-scale vector (one VMEM column per grid
# step): input style scales + demod coefficients per conv, torgb styles.
def _scl_layout():
    fields = []
    for bi, (res, ch) in enumerate(zip(BLOCK_RES, BLOCK_CH)):
        if bi > 0:
            fields.append((f'sin_c0_{res}', BLOCK_CH[bi - 1]))
            fields.append((f'dmod_c0_{res}', ch))
        fields.append((f'sin_c1_{res}', ch))
        fields.append((f'dmod_c1_{res}', ch))
        fields.append((f'srgb_{res}', ch))
    return fields


_SCL_FIELDS = _scl_layout()
_SCL_OFF = {}
_off = 0
for _n, _s in _SCL_FIELDS:
    _SCL_OFF[_n] = (_off, _s)
    _off += _s
SCL_TOTAL = _off


# ---------------------------------------------------------------------------
# Kernel helpers (trace into the single fused kernel)
# ---------------------------------------------------------------------------
def _lrelu_clamp(y):
    y = jnp.maximum(y, LRELU_ALPHA * y) * LRELU_GAIN
    return jnp.clip(y, -LRELU_CLAMP, LRELU_CLAMP)


def _tap_cols(x, img_w):
    """x: [C, H*W] (H == W == img_w, power of two) -> im2col operand [9*C, H*W].

    9 shifted views of the zero-padded flattened image stacked along K.
    Row (dy) borders are absorbed by the zero padding of width W+1; column
    (dx) borders are masked with a lane-index mask."""
    c, hw = x.shape
    pad = img_w + 1
    zeros = jnp.zeros((c, pad), x.dtype)
    xp = jnp.concatenate([zeros, x, zeros], axis=1)          # [C, hw + 2*pad]
    col = jax.lax.broadcasted_iota(jnp.int32, (1, hw), 1)
    xcoord = jnp.bitwise_and(col, img_w - 1)                 # col % W (W = 2^k)
    pieces = []
    for dy, dx in TAPS:
        a = pad + dy * img_w + dx
        v = xp[:, a:a + hw]
        if dx == 1:
            v = jnp.where(xcoord < img_w - 1, v, 0.0)
        elif dx == -1:
            v = jnp.where(xcoord > 0, v, 0.0)
        pieces.append(v)
    return jnp.concatenate(pieces, axis=0)                   # [9*C, hw]


def _synthesis_kernel(*refs):
    """Whole Synthesis forward for one sample (grid step = one batch element).

    Ref order: [scl, <plan per block>], out.  Plan per block:
      block 0 :  const,                         W1, add1, Wrgb, brgb
      block i :  W0, add0, Scatter, UpMat,      W1, add1, Wrgb, brgb
    """
    in_refs, out_ref = refs[:-1], refs[-1]
    scl = in_refs[0][...]                        # [SCL_TOTAL, 1] per-sample scales
    it = iter(in_refs[1:])

    def sc(name):
        o, n = _SCL_OFF[name]
        return scl[o:o + n]                      # [n, 1] column vector

    x = None
    img = None
    for bi, (res, ch) in enumerate(zip(BLOCK_RES, BLOCK_CH)):
        if bi == 0:
            x = next(it)[...]                    # learned const  [ch, hw]
        else:
            prev_res = BLOCK_RES[bi - 1]
            w0 = next(it)[...]                   # [4*ch, 9*prev_ch]  (4 phases)
            add0 = next(it)[...]                 # [ch, hw]  (noise + bias)
            s_ref = next(it)                     # [4, prev_hw, hw] phase scatter
            up_mat = next(it)[...]               # [prev_hw, hw] img upsample

            # skip-image upsample: one constant matmul (upfirdn2d folded).
            img = jnp.dot(img, up_mat, preferred_element_type=jnp.float32)

            # conv0 (up=2): 4 subpixel phases folded into the weight, then the
            # phase->pixel merge done as 4 tiny 0/1 scatter matmuls (MXU idle).
            xs = x * sc(f'sin_c0_{res}')
            xcol = _tap_cols(xs, prev_res)       # [9*prev_ch, prev_hw]
            y4 = jnp.dot(w0, xcol, preferred_element_type=jnp.float32)
            y = None
            for ph in range(4):
                part = jnp.dot(y4[ph * ch:(ph + 1) * ch, :], s_ref[ph],
                               preferred_element_type=jnp.float32)
                y = part if y is None else y + part
            y = y * sc(f'dmod_c0_{res}') + add0
            x = _lrelu_clamp(y)

        # conv1 (3x3, up=1): stacked-K single matmul.
        w1 = next(it)[...]                       # [ch, 9*ch]
        add1 = next(it)[...]                     # [ch, hw]
        xs = x * sc(f'sin_c1_{res}')
        xcol = _tap_cols(xs, res)
        y = jnp.dot(w1, xcol, preferred_element_type=jnp.float32)
        y = y * sc(f'dmod_c1_{res}') + add1
        x = _lrelu_clamp(y)

        # torgb (1x1, demodulate=False) + skip add.
        w_rgb = next(it)[...]                    # [3, ch]
        b_rgb = next(it)[...]                    # [3, 1]
        rgb = jnp.dot(w_rgb, x * sc(f'srgb_{res}'),
                      preferred_element_type=jnp.float32) + b_rgb
        img = rgb if img is None else img + rgb

    out_ref[...] = img                           # [3, RESOLUTION^2], lane-dense


# ---------------------------------------------------------------------------
# JAX glue (tiny: affine styles, demod normalization, weight stacking)
# ---------------------------------------------------------------------------
def dense_fwd(x, weight, bias):
    # PyTorch `dense`: y = x @ (weight / sqrt(in_features)).T + bias
    in_f = weight.shape[1]
    return x @ (weight.T * (1.0 / math.sqrt(in_f))) + bias


def _prep_modconv(p, wvec, up):
    """Demodulated modulated conv prep using the reference's non-fused
    decomposition: scale x by styles, conv with the shared normalized weight,
    scale the output by dcoefs.  Returns (stacked shared weight,
    per-sample input scale [B, IC], per-sample output scale [B, OC])."""
    styles = dense_fwd(wvec, p['affine_w'], p['affine_b'])            # [B, IC]
    weight = p['weight']                                              # [OC,IC,3,3]
    w_n = weight * jax.lax.rsqrt(
        jnp.mean(weight * weight, axis=(1, 2, 3), keepdims=True))
    s_n = styles * jax.lax.rsqrt(jnp.mean(styles * styles))
    dcoef = jax.lax.rsqrt(
        jnp.einsum('oikl,bi->bo', w_n * w_n, s_n * s_n) + 1e-8)       # [B, OC]
    oc, ic = weight.shape[0], weight.shape[1]
    if up:
        t = _phase_transfer()                                         # [2, 3, 3]
        w4 = jnp.einsum('pdk,qel,oikl->pqodei', t, t, w_n)            # phases
        w_stk = w4.reshape(4 * oc, 9 * ic)     # rows = (ry, rx, oc); cols = (t, ic)
    else:
        w_stk = jnp.transpose(w_n, (0, 2, 3, 1)).reshape(oc, 9 * ic)
    return w_stk, s_n, dcoef


# ---------------------------------------------------------------------------
# Synthesis forward
# ---------------------------------------------------------------------------
def synthesis_fwd(params, ws, noise_mode='const'):
    # ws: [B, NUM_WS, W_DIM]
    ws = ws.astype(jnp.float32)
    B = ws.shape[0]
    assert ws.shape[1] == NUM_WS and ws.shape[2] == W_DIM, ws.shape

    def layer_noise(p, res):
        if noise_mode == 'const':
            return p['noise_const'] * p['noise_strength']
        if noise_mode == 'none':
            return jnp.zeros((res, res), jnp.float32)
        # TODO(synk): noise_mode='random' needs a torch.randn-compatible RNG stream.
        raise NotImplementedError("use noise_mode='const' or 'none'")

    shared = []          # batch-invariant kernel operands, in kernel plan order
    scl = {}             # per-sample modulation scale vectors
    w_idx = 0
    for bi, (res, ch) in enumerate(zip(BLOCK_RES, BLOCK_CH)):
        bp = params[f'b{res}']
        num_conv = 1 if bi == 0 else 2
        cur_ws = ws[:, w_idx:w_idx + num_conv + 1]
        w_idx += num_conv

        if bi == 0:
            shared.append(bp['const'].reshape(ch, res * res))
            wi = 0
        else:
            prev_res = BLOCK_RES[bi - 1]
            p0 = bp['conv0']
            w0, scl[f'sin_c0_{res}'], scl[f'dmod_c0_{res}'] = _prep_modconv(
                p0, cur_ws[:, 0], up=True)
            add0 = layer_noise(p0, res).reshape(1, res * res) + p0['bias'][:, None]
            shared += [w0, add0,
                       jnp.asarray(_scatter_mats(prev_res)),
                       jnp.asarray(_upsample_mat(prev_res))]
            wi = 1

        p1 = bp['conv1']
        w1, scl[f'sin_c1_{res}'], scl[f'dmod_c1_{res}'] = _prep_modconv(
            p1, cur_ws[:, wi], up=False)
        add1 = layer_noise(p1, res).reshape(1, res * res) + p1['bias'][:, None]
        shared += [w1, add1]

        pt = bp['torgb']
        scl[f'srgb_{res}'] = dense_fwd(cur_ws[:, wi + 1], pt['affine_w'],
                                       pt['affine_b']) * (1.0 / math.sqrt(ch))
        shared += [pt['weight'][:, :, 0, 0], pt['bias'][:, None]]

    scl_all = jnp.concatenate(
        [scl[n] for n, _ in _SCL_FIELDS], axis=1)[:, :, None]   # [B, SCL_TOTAL, 1]

    def _shared_spec(a):
        nd = len(a.shape)
        return pl.BlockSpec(tuple(a.shape), lambda b, _nd=nd: (0,) * _nd)

    hw_out = RESOLUTION * RESOLUTION
    out = pl.pallas_call(
        _synthesis_kernel,
        out_shape=jax.ShapeDtypeStruct((B, RGB_N, hw_out), jnp.float32),
        grid=(B,),
        in_specs=[pl.BlockSpec((None, SCL_TOTAL, 1), lambda b: (b, 0, 0))]
                 + [_shared_spec(a) for a in shared],
        out_specs=pl.BlockSpec((None, RGB_N, hw_out), lambda b: (b, 0, 0)),
        # batch is independent per grid step -> "parallel" lets v7x put one
        # sample on each of its two TensorCores; no-op on v5e/v6e.
        compiler_params=pltpu.CompilerParams(
            dimension_semantics=("parallel",)),
    )(scl_all, *shared)
    return out.reshape(B, RGB_N, RESOLUTION, RESOLUTION)       # NCHW


# ---------------------------------------------------------------------------
# Deterministic parameter init (shapes follow the module __init__)
# ---------------------------------------------------------------------------
def init_params(key):
    def nxt():
        nonlocal key
        key, sub = jax.random.split(key)
        return sub

    def synth_layer(ic, oc, res):
        return dict(
            weight=jax.random.normal(nxt(), (oc, ic, 3, 3), jnp.float32),
            bias=jnp.zeros((oc,), jnp.float32),
            affine_w=jax.random.normal(nxt(), (ic, W_DIM), jnp.float32),
            affine_b=jnp.ones((ic,), jnp.float32),              # bias_init = 1
            noise_const=jax.random.normal(nxt(), (res, res), jnp.float32),
            noise_strength=jnp.zeros((), jnp.float32),          # matches __init__
        )

    def torgb_layer(ic, oc):
        return dict(
            weight=jax.random.normal(nxt(), (oc, ic, 1, 1), jnp.float32),
            bias=jnp.zeros((oc,), jnp.float32),
            affine_w=jax.random.normal(nxt(), (ic, W_DIM), jnp.float32),
            affine_b=jnp.ones((ic,), jnp.float32),
        )

    params = {}
    prev_ch = 0
    for res, ch in zip(BLOCK_RES, BLOCK_CH):
        bp = {}
        if prev_ch == 0:
            bp['const'] = jax.random.normal(nxt(), (ch, res, res), jnp.float32)
        else:
            bp['conv0'] = synth_layer(prev_ch, ch, res)
        bp['conv1'] = synth_layer(ch, ch, res)
        bp['torgb'] = torgb_layer(ch, RGB_N)
        params[f'b{res}'] = bp
        prev_ch = ch
    return params


if __name__ == "__main__":
    key = jax.random.PRNGKey(0)
    kp, kw = jax.random.split(key)
    params = init_params(kp)
    B = 2
    ws = jax.random.normal(kw, (B, NUM_WS, W_DIM), jnp.float32)

    fwd = jax.jit(partial(synthesis_fwd, noise_mode='const'))
    img = jax.block_until_ready(fwd(params, ws))
    assert img.shape == (B, RGB_N, RESOLUTION, RESOLUTION), img.shape
    assert bool(jnp.all(jnp.isfinite(img)))
    print("KERNEL_OK")
</pallas_src>

<mosaic_0001>
module attributes {stable_mosaic.version = 11 : i64} {
  func.func @_synthesis_kernel(%arg0: i32, %arg1: memref<1x120x1xf32, #tpu.memory_space<vmem>>, %arg2: memref<16x16xf32, #tpu.memory_space<vmem>>, %arg3: memref<16x144xf32, #tpu.memory_space<vmem>>, %arg4: memref<16x16xf32, #tpu.memory_space<vmem>>, %arg5: memref<3x16xf32, #tpu.memory_space<vmem>>, %arg6: memref<3x1xf32, #tpu.memory_space<vmem>>, %arg7: memref<32x144xf32, #tpu.memory_space<vmem>>, %arg8: memref<8x64xf32, #tpu.memory_space<vmem>>, %arg9: memref<4x16x64xf32, #tpu.memory_space<vmem>>, %arg10: memref<16x64xf32, #tpu.memory_space<vmem>>, %arg11: memref<8x72xf32, #tpu.memory_space<vmem>>, %arg12: memref<8x64xf32, #tpu.memory_space<vmem>>, %arg13: memref<3x8xf32, #tpu.memory_space<vmem>>, %arg14: memref<3x1xf32, #tpu.memory_space<vmem>>, %arg15: memref<16x72xf32, #tpu.memory_space<vmem>>, %arg16: memref<4x256xf32, #tpu.memory_space<vmem>>, %arg17: memref<4x64x256xf32, #tpu.memory_space<vmem>>, %arg18: memref<64x256xf32, #tpu.memory_space<vmem>>, %arg19: memref<4x36xf32, #tpu.memory_space<vmem>>, %arg20: memref<4x256xf32, #tpu.memory_space<vmem>>, %arg21: memref<3x4xf32, #tpu.memory_space<vmem>>, %arg22: memref<3x1xf32, #tpu.memory_space<vmem>>, %arg23: memref<1x3x256xf32, #tpu.memory_space<vmem>>) attributes {dimension_semantics = [#tpu.dimension_semantics<parallel>], iteration_bounds = array<i64: 2>, scalar_prefetch = 0 : i64, scratch_operands = 0 : i64, tpu.core_type = #tpu.core_type<tc>, window_params = [{transform_indices = @transform_0, window_bounds = array<i64: 1, 120, 1>}, {pipeline_mode = #tpu.pipeline_mode<synchronous>, transform_indices = @transform_1, window_bounds = array<i64: 16, 16>}, {pipeline_mode = #tpu.pipeline_mode<synchronous>, transform_indices = @transform_2, window_bounds = array<i64: 16, 144>}, {pipeline_mode = #tpu.pipeline_mode<synchronous>, transform_indices = @transform_3, window_bounds = array<i64: 16, 16>}, {pipeline_mode = #tpu.pipeline_mode<synchronous>, transform_indices = @transform_4, window_bounds = array<i64: 3, 16>}, {pipeline_mode = #tpu.pipeline_mode<synchronous>, transform_indices = @transform_5, window_bounds = array<i64: 3, 1>}, {pipeline_mode = #tpu.pipeline_mode<synchronous>, transform_indices = @transform_6, window_bounds = array<i64: 32, 144>}, {pipeline_mode = #tpu.pipeline_mode<synchronous>, transform_indices = @transform_7, window_bounds = array<i64: 8, 64>}, {pipeline_mode = #tpu.pipeline_mode<synchronous>, transform_indices = @transform_8, window_bounds = array<i64: 4, 16, 64>}, {pipeline_mode = #tpu.pipeline_mode<synchronous>, transform_indices = @transform_9, window_bounds = array<i64: 16, 64>}, {pipeline_mode = #tpu.pipeline_mode<synchronous>, transform_indices = @transform_10, window_bounds = array<i64: 8, 72>}, {pipeline_mode = #tpu.pipeline_mode<synchronous>, transform_indices = @transform_11, window_bounds = array<i64: 8, 64>}, {pipeline_mode = #tpu.pipeline_mode<synchronous>, transform_indices = @transform_12, window_bounds = array<i64: 3, 8>}, {pipeline_mode = #tpu.pipeline_mode<synchronous>, transform_indices = @transform_13, window_bounds = array<i64: 3, 1>}, {pipeline_mode = #tpu.pipeline_mode<synchronous>, transform_indices = @transform_14, window_bounds = array<i64: 16, 72>}, {pipeline_mode = #tpu.pipeline_mode<synchronous>, transform_indices = @transform_15, window_bounds = array<i64: 4, 256>}, {pipeline_mode = #tpu.pipeline_mode<synchronous>, transform_indices = @transform_16, window_bounds = array<i64: 4, 64, 256>}, {pipeline_mode = #tpu.pipeline_mode<synchronous>, transform_indices = @transform_17, window_bounds = array<i64: 64, 256>}, {pipeline_mode = #tpu.pipeline_mode<synchronous>, transform_indices = @transform_18, window_bounds = array<i64: 4, 36>}, {pipeline_mode = #tpu.pipeline_mode<synchronous>, transform_indices = @transform_19, window_bounds = array<i64: 4, 256>}, {pipeline_mode = #tpu.pipeline_mode<synchronous>, transform_indices = @transform_20, window_bounds = array<i64: 3, 4>}, {pipeline_mode = #tpu.pipeline_mode<synchronous>, transform_indices = @transform_21, window_bounds = array<i64: 3, 1>}, {transform_indices = @transform_22, window_bounds = array<i64: 1, 3, 256>}]} {
    %c0 = arith.constant 0 : index
    %c0_0 = arith.constant 0 : index
    %c0_1 = arith.constant 0 : index
    %0 = vector.load %arg1[%c0, %c0_0, %c0_1] : memref<1x120x1xf32, #tpu.memory_space<vmem>>, vector<1x120x1xf32>
    %1 = vector.shape_cast %0 : vector<1x120x1xf32> to vector<120x1xf32>
    %c0_2 = arith.constant 0 : index
    %c0_3 = arith.constant 0 : index
    %2 = vector.load %arg2[%c0_2, %c0_3] : memref<16x16xf32, #tpu.memory_space<vmem>>, vector<16x16xf32>
    %c0_4 = arith.constant 0 : index
    %c0_5 = arith.constant 0 : index
    %3 = vector.load %arg3[%c0_4, %c0_5] : memref<16x144xf32, #tpu.memory_space<vmem>>, vector<16x144xf32>
    %c0_6 = arith.constant 0 : index
    %c0_7 = arith.constant 0 : index
    %4 = vector.load %arg4[%c0_6, %c0_7] : memref<16x16xf32, #tpu.memory_space<vmem>>, vector<16x16xf32>
    %5 = vector.extract_strided_slice %1 {offsets = [0, 0], sizes = [16, 1], strides = [1, 1]} : vector<120x1xf32> to vector<16x1xf32>
    %6 = vector.broadcast %5 : vector<16x1xf32> to vector<16x16xf32>
    %7 = arith.mulf %2, %6 : vector<16x16xf32>
    %cst = arith.constant 0.000000e+00 : f32
    %8 = vector.broadcast %cst : f32 to vector<16x5xf32>
    %9 = tpu.concatenate %8, %7, %8 in 1 : vector<16x5xf32>, vector<16x16xf32>, vector<16x5xf32> -> vector<16x26xf32>
    %10 = tpu.iota {dimensions = array<i32: 1>} : vector<1x16xi32>
    %c3_i32 = arith.constant 3 : i32
    %11 = vector.broadcast %c3_i32 : i32 to vector<1x16xi32>
    %12 = arith.andi %10, %11 : vector<1x16xi32>
    %13 = vector.extract_strided_slice %9 {offsets = [0, 0], sizes = [16, 16], strides = [1, 1]} : vector<16x26xf32> to vector<16x16xf32>
    %c0_i32 = arith.constant 0 : i32
    %14 = vector.broadcast %c0_i32 : i32 to vector<1x16xi32>
    %15 = arith.cmpi sgt, %12, %14 : vector<1x16xi32>
    %cst_8 = arith.constant 0.000000e+00 : f32
    %16 = vector.shape_cast %15 : vector<1x16xi1> to vector<1x16xi1>
    %17 = vector.broadcast %16 : vector<1x16xi1> to vector<16x16xi1>
    %18 = vector.broadcast %cst_8 : f32 to vector<16x16xf32>
    %19 = arith.select %17, %13, %18 : vector<16x16xi1>, vector<16x16xf32>
    %20 = vector.extract_strided_slice %9 {offsets = [0, 1], sizes = [16, 16], strides = [1, 1]} : vector<16x26xf32> to vector<16x16xf32>
    %21 = vector.extract_strided_slice %9 {offsets = [0, 2], sizes = [16, 16], strides = [1, 1]} : vector<16x26xf32> to vector<16x16xf32>
    %c3_i32_9 = arith.constant 3 : i32
    %22 = vector.broadcast %c3_i32_9 : i32 to vector<1x16xi32>
    %23 = arith.cmpi slt, %12, %22 : vector<1x16xi32>
    %cst_10 = arith.constant 0.000000e+00 : f32
    %24 = vector.shape_cast %23 : vector<1x16xi1> to vector<1x16xi1>
    %25 = vector.broadcast %24 : vector<1x16xi1> to vector<16x16xi1>
    %26 = vector.broadcast %cst_10 : f32 to vector<16x16xf32>
    %27 = arith.select %25, %21, %26 : vector<16x16xi1>, vector<16x16xf32>
    %28 = vector.extract_strided_slice %9 {offsets = [0, 4], sizes = [16, 16], strides = [1, 1]} : vector<16x26xf32> to vector<16x16xf32>
    %c0_i32_11 = arith.constant 0 : i32
    %29 = vector.broadcast %c0_i32_11 : i32 to vector<1x16xi32>
    %30 = arith.cmpi sgt, %12, %29 : vector<1x16xi32>
    %cst_12 = arith.constant 0.000000e+00 : f32
    %31 = vector.shape_cast %30 : vector<1x16xi1> to vector<1x16xi1>
    %32 = vector.broadcast %31 : vector<1x16xi1> to vector<16x16xi1>
    %33 = vector.broadcast %cst_12 : f32 to vector<16x16xf32>
    %34 = arith.select %32, %28, %33 : vector<16x16xi1>, vector<16x16xf32>
    %35 = vector.extract_strided_slice %9 {offsets = [0, 5], sizes = [16, 16], strides = [1, 1]} : vector<16x26xf32> to vector<16x16xf32>
    %36 = vector.extract_strided_slice %9 {offsets = [0, 6], sizes = [16, 16], strides = [1, 1]} : vector<16x26xf32> to vector<16x16xf32>
    %c3_i32_13 = arith.constant 3 : i32
    %37 = vector.broadcast %c3_i32_13 : i32 to vector<1x16xi32>
    %38 = arith.cmpi slt, %12, %37 : vector<1x16xi32>
    %cst_14 = arith.constant 0.000000e+00 : f32
    %39 = vector.shape_cast %38 : vector<1x16xi1> to vector<1x16xi1>
    %40 = vector.broadcast %39 : vector<1x16xi1> to vector<16x16xi1>
    %41 = vector.broadcast %cst_14 : f32 to vector<16x16xf32>
    %42 = arith.select %40, %36, %41 : vector<16x16xi1>, vector<16x16xf32>
    %43 = vector.extract_strided_slice %9 {offsets = [0, 8], sizes = [16, 16], strides = [1, 1]} : vector<16x26xf32> to vector<16x16xf32>
    %c0_i32_15 = arith.constant 0 : i32
    %44 = vector.broadcast %c0_i32_15 : i32 to vector<1x16xi32>
    %45 = arith.cmpi sgt, %12, %44 : vector<1x16xi32>
    %cst_16 = arith.constant 0.000000e+00 : f32
    %46 = vector.shape_cast %45 : vector<1x16xi1> to vector<1x16xi1>
    %47 = vector.broadcast %46 : vector<1x16xi1> to vector<16x16xi1>
    %48 = vector.broadcast %cst_16 : f32 to vector<16x16xf32>
    %49 = arith.select %47, %43, %48 : vector<16x16xi1>, vector<16x16xf32>
    %50 = vector.extract_strided_slice %9 {offsets = [0, 9], sizes = [16, 16], strides = [1, 1]} : vector<16x26xf32> to vector<16x16xf32>
    %51 = vector.extract_strided_slice %9 {offsets = [0, 10], sizes = [16, 16], strides = [1, 1]} : vector<16x26xf32> to vector<16x16xf32>
    %c3_i32_17 = arith.constant 3 : i32
    %52 = vector.broadcast %c3_i32_17 : i32 to vector<1x16xi32>
    %53 = arith.cmpi slt, %12, %52 : vector<1x16xi32>
    %cst_18 = arith.constant 0.000000e+00 : f32
    %54 = vector.shape_cast %53 : vector<1x16xi1> to vector<1x16xi1>
    %55 = vector.broadcast %54 : vector<1x16xi1> to vector<16x16xi1>
    %56 = vector.broadcast %cst_18 : f32 to vector<16x16xf32>
    %57 = arith.select %55, %51, %56 : vector<16x16xi1>, vector<16x16xf32>
    %58 = tpu.concatenate %19, %20, %27, %34, %35, %42, %49, %50, %57 in 0 : vector<16x16xf32>, vector<16x16xf32>, vector<16x16xf32>, vector<16x16xf32>, vector<16x16xf32>, vector<16x16xf32>, vector<16x16xf32>, vector<16x16xf32>, vector<16x16xf32> -> vector<144x16xf32>
    %cst_19 = arith.constant dense<0.000000e+00> : vector<16x16xf32>
    %59 = tpu.matmul %3, %58, %cst_19 {dimension_numbers = #tpu.dot_dimension_numbers<[1], [0], [0], [1], [0, 0, 1, 1], [], []>} : vector<16x144xf32>, vector<144x16xf32>, vector<16x16xf32> -> vector<16x16xf32>
    %60 = vector.extract_strided_slice %1 {offsets = [16, 0], sizes = [16, 1], strides = [1, 1]} : vector<120x1xf32> to vector<16x1xf32>
    %61 = vector.broadcast %60 : vector<16x1xf32> to vector<16x16xf32>
    %62 = arith.mulf %59, %61 : vector<16x16xf32>
    %63 = arith.addf %62, %4 : vector<16x16xf32>
    %cst_20 = arith.constant 2.000000e-01 : f32
    %64 = vector.broadcast %cst_20 : f32 to vector<16x16xf32>
    %65 = arith.mulf %64, %63 : vector<16x16xf32>
    %66 = arith.maximumf %63, %65 : vector<16x16xf32>
    %cst_21 = arith.constant 1.41421354 : f32
    %67 = vector.broadcast %cst_21 : f32 to vector<16x16xf32>
    %68 = arith.mulf %66, %67 : vector<16x16xf32>
    %cst_22 = arith.constant -2.560000e+02 : f32
    %cst_23 = arith.constant 2.560000e+02 : f32
    %69 = vector.broadcast %cst_22 : f32 to vector<16x16xf32>
    %70 = arith.maximumf %69, %68 : vector<16x16xf32>
    %71 = vector.broadcast %cst_23 : f32 to vector<16x16xf32>
    %72 = arith.minimumf %71, %70 : vector<16x16xf32>
    %c0_24 = arith.constant 0 : index
    %c0_25 = arith.constant 0 : index
    %73 = vector.load %arg5[%c0_24, %c0_25] : memref<3x16xf32, #tpu.memory_space<vmem>>, vector<3x16xf32>
    %c0_26 = arith.constant 0 : index
    %c0_27 = arith.constant 0 : index
    %74 = vector.load %arg6[%c0_26, %c0_27] : memref<3x1xf32, #tpu.memory_space<vmem>>, vector<3x1xf32>
    %75 = vector.extract_strided_slice %1 {offsets = [32, 0], sizes = [16, 1], strides = [1, 1]} : vector<120x1xf32> to vector<16x1xf32>
    %76 = vector.broadcast %75 : vector<16x1xf32> to vector<16x16xf32>
    %77 = arith.mulf %72, %76 : vector<16x16xf32>
    %cst_28 = arith.constant dense<0.000000e+00> : vector<3x16xf32>
    %78 = tpu.matmul %73, %77, %cst_28 {dimension_numbers = #tpu.dot_dimension_numbers<[1], [0], [0], [1], [0, 0, 1, 1], [], []>} : vector<3x16xf32>, vector<16x16xf32>, vector<3x16xf32> -> vector<3x16xf32>
    %79 = vector.broadcast %74 : vector<3x1xf32> to vector<3x16xf32>
    %80 = arith.addf %78, %79 : vector<3x16xf32>
    %c0_29 = arith.constant 0 : index
    %c0_30 = arith.constant 0 : index
    %81 = vector.load %arg7[%c0_29, %c0_30] : memref<32x144xf32, #tpu.memory_space<vmem>>, vector<32x144xf32>
    %c0_31 = arith.constant 0 : index
    %c0_32 = arith.constant 0 : index
    %82 = vector.load %arg8[%c0_31, %c0_32] : memref<8x64xf32, #tpu.memory_space<vmem>>, vector<8x64xf32>
    %c0_33 = arith.constant 0 : index
    %c0_34 = arith.constant 0 : index
    %83 = vector.load %arg10[%c0_33, %c0_34] : memref<16x64xf32, #tpu.memory_space<vmem>>, vector<16x64xf32>
    %cst_35 = arith.constant dense<0.000000e+00> : vector<3x64xf32>
    %84 = tpu.matmul %80, %83, %cst_35 {dimension_numbers = #tpu.dot_dimension_numbers<[1], [0], [0], [1], [0, 0, 1, 1], [], []>} : vector<3x16xf32>, vector<16x64xf32>, vector<3x64xf32> -> vector<3x64xf32>
    %85 = vector.extract_strided_slice %1 {offsets = [48, 0], sizes = [16, 1], strides = [1, 1]} : vector<120x1xf32> to vector<16x1xf32>
    %86 = vector.broadcast %85 : vector<16x1xf32> to vector<16x16xf32>
    %87 = arith.mulf %72, %86 : vector<16x16xf32>
    %cst_36 = arith.constant 0.000000e+00 : f32
    %88 = vector.broadcast %cst_36 : f32 to vector<16x5xf32>
    %89 = tpu.concatenate %88, %87, %88 in 1 : vector<16x5xf32>, vector<16x16xf32>, vector<16x5xf32> -> vector<16x26xf32>
    %90 = tpu.iota {dimensions = array<i32: 1>} : vector<1x16xi32>
    %c3_i32_37 = arith.constant 3 : i32
    %91 = vector.broadcast %c3_i32_37 : i32 to vector<1x16xi32>
    %92 = arith.andi %90, %91 : vector<1x16xi32>
    %93 = vector.extract_strided_slice %89 {offsets = [0, 0], sizes = [16, 16], strides = [1, 1]} : vector<16x26xf32> to vector<16x16xf32>
    %c0_i32_38 = arith.constant 0 : i32
    %94 = vector.broadcast %c0_i32_38 : i32 to vector<1x16xi32>
    %95 = arith.cmpi sgt, %92, %94 : vector<1x16xi32>
    %cst_39 = arith.constant 0.000000e+00 : f32
    %96 = vector.shape_cast %95 : vector<1x16xi1> to vector<1x16xi1>
    %97 = vector.broadcast %96 : vector<1x16xi1> to vector<16x16xi1>
    %98 = vector.broadcast %cst_39 : f32 to vector<16x16xf32>
    %99 = arith.select %97, %93, %98 : vector<16x16xi1>, vector<16x16xf32>
    %100 = vector.extract_strided_slice %89 {offsets = [0, 1], sizes = [16, 16], strides = [1, 1]} : vector<16x26xf32> to vector<16x16xf32>
    %101 = vector.extract_strided_slice %89 {offsets = [0, 2], sizes = [16, 16], strides = [1, 1]} : vector<16x26xf32> to vector<16x16xf32>
    %c3_i32_40 = arith.constant 3 : i32
    %102 = vector.broadcast %c3_i32_40 : i32 to vector<1x16xi32>
    %103 = arith.cmpi slt, %92, %102 : vector<1x16xi32>
    %cst_41 = arith.constant 0.000000e+00 : f32
    %104 = vector.shape_cast %103 : vector<1x16xi1> to vector<1x16xi1>
    %105 = vector.broadcast %104 : vector<1x16xi1> to vector<16x16xi1>
    %106 = vector.broadcast %cst_41 : f32 to vector<16x16xf32>
    %107 = arith.select %105, %101, %106 : vector<16x16xi1>, vector<16x16xf32>
    %108 = vector.extract_strided_slice %89 {offsets = [0, 4], sizes = [16, 16], strides = [1, 1]} : vector<16x26xf32> to vector<16x16xf32>
    %c0_i32_42 = arith.constant 0 : i32
    %109 = vector.broadcast %c0_i32_42 : i32 to vector<1x16xi32>
    %110 = arith.cmpi sgt, %92, %109 : vector<1x16xi32>
    %cst_43 = arith.constant 0.000000e+00 : f32
    %111 = vector.shape_cast %110 : vector<1x16xi1> to vector<1x16xi1>
    %112 = vector.broadcast %111 : vector<1x16xi1> to vector<16x16xi1>
    %113 = vector.broadcast %cst_43 : f32 to vector<16x16xf32>
    %114 = arith.select %112, %108, %113 : vector<16x16xi1>, vector<16x16xf32>
    %115 = vector.extract_strided_slice %89 {offsets = [0, 5], sizes = [16, 16], strides = [1, 1]} : vector<16x26xf32> to vector<16x16xf32>
    %116 = vector.extract_strided_slice %89 {offsets = [0, 6], sizes = [16, 16], strides = [1, 1]} : vector<16x26xf32> to vector<16x16xf32>
    %c3_i32_44 = arith.constant 3 : i32
    %117 = vector.broadcast %c3_i32_44 : i32 to vector<1x16xi32>
    %118 = arith.cmpi slt, %92, %117 : vector<1x16xi32>
    %cst_45 = arith.constant 0.000000e+00 : f32
    %119 = vector.shape_cast %118 : vector<1x16xi1> to vector<1x16xi1>
    %120 = vector.broadcast %119 : vector<1x16xi1> to vector<16x16xi1>
    %121 = vector.broadcast %cst_45 : f32 to vector<16x16xf32>
    %122 = arith.select %120, %116, %121 : vector<16x16xi1>, vector<16x16xf32>
    %123 = vector.extract_strided_slice %89 {offsets = [0, 8], sizes = [16, 16], strides = [1, 1]} : vector<16x26xf32> to vector<16x16xf32>
    %c0_i32_46 = arith.constant 0 : i32
    %124 = vector.broadcast %c0_i32_46 : i32 to vector<1x16xi32>
    %125 = arith.cmpi sgt, %92, %124 : vector<1x16xi32>
    %cst_47 = arith.constant 0.000000e+00 : f32
    %126 = vector.shape_cast %125 : vector<1x16xi1> to vector<1x16xi1>
    %127 = vector.broadcast %126 : vector<1x16xi1> to vector<16x16xi1>
    %128 = vector.broadcast %cst_47 : f32 to vector<16x16xf32>
    %129 = arith.select %127, %123, %128 : vector<16x16xi1>, vector<16x16xf32>
    %130 = vector.extract_strided_slice %89 {offsets = [0, 9], sizes = [16, 16], strides = [1, 1]} : vector<16x26xf32> to vector<16x16xf32>
    %131 = vector.extract_strided_slice %89 {offsets = [0, 10], sizes = [16, 16], strides = [1, 1]} : vector<16x26xf32> to vector<16x16xf32>
    %c3_i32_48 = arith.constant 3 : i32
    %132 = vector.broadcast %c3_i32_48 : i32 to vector<1x16xi32>
    %133 = arith.cmpi slt, %92, %132 : vector<1x16xi32>
    %cst_49 = arith.constant 0.000000e+00 : f32
    %134 = vector.shape_cast %133 : vector<1x16xi1> to vector<1x16xi1>
    %135 = vector.broadcast %134 : vector<1x16xi1> to vector<16x16xi1>
    %136 = vector.broadcast %cst_49 : f32 to vector<16x16xf32>
    %137 = arith.select %135, %131, %136 : vector<16x16xi1>, vector<16x16xf32>
    %138 = tpu.concatenate %99, %100, %107, %114, %115, %122, %129, %130, %137 in 0 : vector<16x16xf32>, vector<16x16xf32>, vector<16x16xf32>, vector<16x16xf32>, vector<16x16xf32>, vector<16x16xf32>, vector<16x16xf32>, vector<16x16xf32>, vector<16x16xf32> -> vector<144x16xf32>
    %cst_50 = arith.constant dense<0.000000e+00> : vector<32x16xf32>
    %139 = tpu.matmul %81, %138, %cst_50 {dimension_numbers = #tpu.dot_dimension_numbers<[1], [0], [0], [1], [0, 0, 1, 1], [], []>} : vector<32x144xf32>, vector<144x16xf32>, vector<32x16xf32> -> vector<32x16xf32>
    %140 = vector.extract_strided_slice %139 {offsets = [0, 0], sizes = [8, 16], strides = [1, 1]} : vector<32x16xf32> to vector<8x16xf32>
    %c0_51 = arith.constant 0 : index
    %c0_52 = arith.constant 0 : index
    %c0_53 = arith.constant 0 : index
    %141 = vector.load %arg9[%c0_51, %c0_52, %c0_53] : memref<4x16x64xf32, #tpu.memory_space<vmem>>, vector<1x16x64xf32>
    %142 = vector.shape_cast %141 : vector<1x16x64xf32> to vector<16x64xf32>
    %cst_54 = arith.constant dense<0.000000e+00> : vector<8x64xf32>
    %143 = tpu.matmul %140, %142, %cst_54 {dimension_numbers = #tpu.dot_dimension_numbers<[1], [0], [0], [1], [0, 0, 1, 1], [], []>} : vector<8x16xf32>, vector<16x64xf32>, vector<8x64xf32> -> vector<8x64xf32>
    %144 = vector.extract_strided_slice %139 {offsets = [8, 0], sizes = [8, 16], strides = [1, 1]} : vector<32x16xf32> to vector<8x16xf32>
    %c1 = arith.constant 1 : index
    %c0_55 = arith.constant 0 : index
    %c0_56 = arith.constant 0 : index
    %145 = vector.load %arg9[%c1, %c0_55, %c0_56] : memref<4x16x64xf32, #tpu.memory_space<vmem>>, vector<1x16x64xf32>
    %146 = vector.shape_cast %145 : vector<1x16x64xf32> to vector<16x64xf32>
    %cst_57 = arith.constant dense<0.000000e+00> : vector<8x64xf32>
    %147 = tpu.matmul %144, %146, %cst_57 {dimension_numbers = #tpu.dot_dimension_numbers<[1], [0], [0], [1], [0, 0, 1, 1], [], []>} : vector<8x16xf32>, vector<16x64xf32>, vector<8x64xf32> -> vector<8x64xf32>
    %148 = arith.addf %143, %147 : vector<8x64xf32>
    %149 = vector.extract_strided_slice %139 {offsets = [16, 0], sizes = [8, 16], strides = [1, 1]} : vector<32x16xf32> to vector<8x16xf32>
    %c2 = arith.constant 2 : index
    %c0_58 = arith.constant 0 : index
    %c0_59 = arith.constant 0 : index
    %150 = vector.load %arg9[%c2, %c0_58, %c0_59] : memref<4x16x64xf32, #tpu.memory_space<vmem>>, vector<1x16x64xf32>
    %151 = vector.shape_cast %150 : vector<1x16x64xf32> to vector<16x64xf32>
    %cst_60 = arith.constant dense<0.000000e+00> : vector<8x64xf32>
    %152 = tpu.matmul %149, %151, %cst_60 {dimension_numbers = #tpu.dot_dimension_numbers<[1], [0], [0], [1], [0, 0, 1, 1], [], []>} : vector<8x16xf32>, vector<16x64xf32>, vector<8x64xf32> -> vector<8x64xf32>
    %153 = arith.addf %148, %152 : vector<8x64xf32>
    %154 = vector.extract_strided_slice %139 {offsets = [24, 0], sizes = [8, 16], strides = [1, 1]} : vector<32x16xf32> to vector<8x16xf32>
    %c3 = arith.constant 3 : index
    %c0_61 = arith.constant 0 : index
    %c0_62 = arith.constant 0 : index
    %155 = vector.load %arg9[%c3, %c0_61, %c0_62] : memref<4x16x64xf32, #tpu.memory_space<vmem>>, vector<1x16x64xf32>
    %156 = vector.shape_cast %155 : vector<1x16x64xf32> to vector<16x64xf32>
    %cst_63 = arith.constant dense<0.000000e+00> : vector<8x64xf32>
    %157 = tpu.matmul %154, %156, %cst_63 {dimension_numbers = #tpu.dot_dimension_numbers<[1], [0], [0], [1], [0, 0, 1, 1], [], []>} : vector<8x16xf32>, vector<16x64xf32>, vector<8x64xf32> -> vector<8x64xf32>
    %158 = arith.addf %153, %157 : vector<8x64xf32>
    %159 = vector.extract_strided_slice %1 {offsets = [64, 0], sizes = [8, 1], strides = [1, 1]} : vector<120x1xf32> to vector<8x1xf32>
    %160 = vector.broadcast %159 : vector<8x1xf32> to vector<8x64xf32>
    %161 = arith.mulf %158, %160 : vector<8x64xf32>
    %162 = arith.addf %161, %82 : vector<8x64xf32>
    %cst_64 = arith.constant 2.000000e-01 : f32
    %163 = vector.broadcast %cst_64 : f32 to vector<8x64xf32>
    %164 = arith.mulf %163, %162 : vector<8x64xf32>
    %165 = arith.maximumf %162, %164 : vector<8x64xf32>
    %cst_65 = arith.constant 1.41421354 : f32
    %166 = vector.broadcast %cst_65 : f32 to vector<8x64xf32>
    %167 = arith.mulf %165, %166 : vector<8x64xf32>
    %cst_66 = arith.constant -2.560000e+02 : f32
    %cst_67 = arith.constant 2.560000e+02 : f32
    %168 = vector.broadcast %cst_66 : f32 to vector<8x64xf32>
    %169 = arith.maximumf %168, %167 : vector<8x64xf32>
    %170 = vector.broadcast %cst_67 : f32 to vector<8x64xf32>
    %171 = arith.minimumf %170, %169 : vector<8x64xf32>
    %c0_68 = arith.constant 0 : index
    %c0_69 = arith.constant 0 : index
    %172 = vector.load %arg11[%c0_68, %c0_69] : memref<8x72xf32, #tpu.memory_space<vmem>>, vector<8x72xf32>
    %c0_70 = arith.constant 0 : index
    %c0_71 = arith.constant 0 : index
    %173 = vector.load %arg12[%c0_70, %c0_71] : memref<8x64xf32, #tpu.memory_space<vmem>>, vector<8x64xf32>
    %174 = vector.extract_strided_slice %1 {offsets = [72, 0], sizes = [8, 1], strides = [1, 1]} : vector<120x1xf32> to vector<8x1xf32>
    %175 = vector.broadcast %174 : vector<8x1xf32> to vector<8x64xf32>
    %176 = arith.mulf %171, %175 : vector<8x64xf32>
    %cst_72 = arith.constant 0.000000e+00 : f32
    %177 = vector.broadcast %cst_72 : f32 to vector<8x9xf32>
    %178 = tpu.concatenate %177, %176, %177 in 1 : vector<8x9xf32>, vector<8x64xf32>, vector<8x9xf32> -> vector<8x82xf32>
    %179 = tpu.iota {dimensions = array<i32: 1>} : vector<1x64xi32>
    %c7_i32 = arith.constant 7 : i32
    %180 = vector.broadcast %c7_i32 : i32 to vector<1x64xi32>
    %181 = arith.andi %179, %180 : vector<1x64xi32>
    %182 = vector.extract_strided_slice %178 {offsets = [0, 0], sizes = [8, 64], strides = [1, 1]} : vector<8x82xf32> to vector<8x64xf32>
    %c0_i32_73 = arith.constant 0 : i32
    %183 = vector.broadcast %c0_i32_73 : i32 to vector<1x64xi32>
    %184 = arith.cmpi sgt, %181, %183 : vector<1x64xi32>
    %cst_74 = arith.constant 0.000000e+00 : f32
    %185 = vector.shape_cast %184 : vector<1x64xi1> to vector<1x64xi1>
    %186 = vector.broadcast %185 : vector<1x64xi1> to vector<8x64xi1>
    %187 = vector.broadcast %cst_74 : f32 to vector<8x64xf32>
    %188 = arith.select %186, %182, %187 : vector<8x64xi1>, vector<8x64xf32>
    %189 = vector.extract_strided_slice %178 {offsets = [0, 1], sizes = [8, 64], strides = [1, 1]} : vector<8x82xf32> to vector<8x64xf32>
    %190 = vector.extract_strided_slice %178 {offsets = [0, 2], sizes = [8, 64], strides = [1, 1]} : vector<8x82xf32> to vector<8x64xf32>
    %c7_i32_75 = arith.constant 7 : i32
    %191 = vector.broadcast %c7_i32_75 : i32 to vector<1x64xi32>
    %192 = arith.cmpi slt, %181, %191 : vector<1x64xi32>
    %cst_76 = arith.constant 0.000000e+00 : f32
    %193 = vector.shape_cast %192 : vector<1x64xi1> to vector<1x64xi1>
    %194 = vector.broadcast %193 : vector<1x64xi1> to vector<8x64xi1>
    %195 = vector.broadcast %cst_76 : f32 to vector<8x64xf32>
    %196 = arith.select %194, %190, %195 : vector<8x64xi1>, vector<8x64xf32>
    %197 = vector.extract_strided_slice %178 {offsets = [0, 8], sizes = [8, 64], strides = [1, 1]} : vector<8x82xf32> to vector<8x64xf32>
    %c0_i32_77 = arith.constant 0 : i32
    %198 = vector.broadcast %c0_i32_77 : i32 to vector<1x64xi32>
    %199 = arith.cmpi sgt, %181, %198 : vector<1x64xi32>
    %cst_78 = arith.constant 0.000000e+00 : f32
    %200 = vector.shape_cast %199 : vector<1x64xi1> to vector<1x64xi1>
    %201 = vector.broadcast %200 : vector<1x64xi1> to vector<8x64xi1>
    %202 = vector.broadcast %cst_78 : f32 to vector<8x64xf32>
    %203 = arith.select %201, %197, %202 : vector<8x64xi1>, vector<8x64xf32>
    %204 = vector.extract_strided_slice %178 {offsets = [0, 9], sizes = [8, 64], strides = [1, 1]} : vector<8x82xf32> to vector<8x64xf32>
    %205 = vector.extract_strided_slice %178 {offsets = [0, 10], sizes = [8, 64], strides = [1, 1]} : vector<8x82xf32> to vector<8x64xf32>
    %c7_i32_79 = arith.constant 7 : i32
    %206 = vector.broadcast %c7_i32_79 : i32 to vector<1x64xi32>
    %207 = arith.cmpi slt, %181, %206 : vector<1x64xi32>
    %cst_80 = arith.constant 0.000000e+00 : f32
    %208 = vector.shape_cast %207 : vector<1x64xi1> to vector<1x64xi1>
    %209 = vector.broadcast %208 : vector<1x64xi1> to vector<8x64xi1>
    %210 = vector.broadcast %cst_80 : f32 to vector<8x64xf32>
    %211 = arith.select %209, %205, %210 : vector<8x64xi1>, vector<8x64xf32>
    %212 = vector.extract_strided_slice %178 {offsets = [0, 16], sizes = [8, 64], strides = [1, 1]} : vector<8x82xf32> to vector<8x64xf32>
    %c0_i32_81 = arith.constant 0 : i32
    %213 = vector.broadcast %c0_i32_81 : i32 to vector<1x64xi32>
    %214 = arith.cmpi sgt, %181, %213 : vector<1x64xi32>
    %cst_82 = arith.constant 0.000000e+00 : f32
    %215 = vector.shape_cast %214 : vector<1x64xi1> to vector<1x64xi1>
    %216 = vector.broadcast %215 : vector<1x64xi1> to vector<8x64xi1>
    %217 = vector.broadcast %cst_82 : f32 to vector<8x64xf32>
    %218 = arith.select %216, %212, %217 : vector<8x64xi1>, vector<8x64xf32>
    %219 = vector.extract_strided_slice %178 {offsets = [0, 17], sizes = [8, 64], strides = [1, 1]} : vector<8x82xf32> to vector<8x64xf32>
    %220 = vector.extract_strided_slice %178 {offsets = [0, 18], sizes = [8, 64], strides = [1, 1]} : vector<8x82xf32> to vector<8x64xf32>
    %c7_i32_83 = arith.constant 7 : i32
    %221 = vector.broadcast %c7_i32_83 : i32 to vector<1x64xi32>
    %222 = arith.cmpi slt, %181, %221 : vector<1x64xi32>
    %cst_84 = arith.constant 0.000000e+00 : f32
    %223 = vector.shape_cast %222 : vector<1x64xi1> to vector<1x64xi1>
    %224 = vector.broadcast %223 : vector<1x64xi1> to vector<8x64xi1>
    %225 = vector.broadcast %cst_84 : f32 to vector<8x64xf32>
    %226 = arith.select %224, %220, %225 : vector<8x64xi1>, vector<8x64xf32>
    %227 = tpu.concatenate %188, %189, %196, %203, %204, %211, %218, %219, %226 in 0 : vector<8x64xf32>, vector<8x64xf32>, vector<8x64xf32>, vector<8x64xf32>, vector<8x64xf32>, vector<8x64xf32>, vector<8x64xf32>, vector<8x64xf32>, vector<8x64xf32> -> vector<72x64xf32>
    %cst_85 = arith.constant dense<0.000000e+00> : vector<8x64xf32>
    %228 = tpu.matmul %172, %227, %cst_85 {dimension_numbers = #tpu.dot_dimension_numbers<[1], [0], [0], [1], [0, 0, 1, 1], [], []>} : vector<8x72xf32>, vector<72x64xf32>, vector<8x64xf32> -> vector<8x64xf32>
    %229 = vector.extract_strided_slice %1 {offsets = [80, 0], sizes = [8, 1], strides = [1, 1]} : vector<120x1xf32> to vector<8x1xf32>
    %230 = vector.broadcast %229 : vector<8x1xf32> to vector<8x64xf32>
    %231 = arith.mulf %228, %230 : vector<8x64xf32>
    %232 = arith.addf %231, %173 : vector<8x64xf32>
    %cst_86 = arith.constant 2.000000e-01 : f32
    %233 = vector.broadcast %cst_86 : f32 to vector<8x64xf32>
    %234 = arith.mulf %233, %232 : vector<8x64xf32>
    %235 = arith.maximumf %232, %234 : vector<8x64xf32>
    %cst_87 = arith.constant 1.41421354 : f32
    %236 = vector.broadcast %cst_87 : f32 to vector<8x64xf32>
    %237 = arith.mulf %235, %236 : vector<8x64xf32>
    %cst_88 = arith.constant -2.560000e+02 : f32
    %cst_89 = arith.constant 2.560000e+02 : f32
    %238 = vector.broadcast %cst_88 : f32 to vector<8x64xf32>
    %239 = arith.maximumf %238, %237 : vector<8x64xf32>
    %240 = vector.broadcast %cst_89 : f32 to vector<8x64xf32>
    %241 = arith.minimumf %240, %239 : vector<8x64xf32>
    %c0_90 = arith.constant 0 : index
    %c0_91 = arith.constant 0 : index
    %242 = vector.load %arg13[%c0_90, %c0_91] : memref<3x8xf32, #tpu.memory_space<vmem>>, vector<3x8xf32>
    %c0_92 = arith.constant 0 : index
    %c0_93 = arith.constant 0 : index
    %243 = vector.load %arg14[%c0_92, %c0_93] : memref<3x1xf32, #tpu.memory_space<vmem>>, vector<3x1xf32>
    %244 = vector.extract_strided_slice %1 {offsets = [88, 0], sizes = [8, 1], strides = [1, 1]} : vector<120x1xf32> to vector<8x1xf32>
    %245 = vector.broadcast %244 : vector<8x1xf32> to vector<8x64xf32>
    %246 = arith.mulf %241, %245 : vector<8x64xf32>
    %cst_94 = arith.constant dense<0.000000e+00> : vector<3x64xf32>
    %247 = tpu.matmul %242, %246, %cst_94 {dimension_numbers = #tpu.dot_dimension_numbers<[1], [0], [0], [1], [0, 0, 1, 1], [], []>} : vector<3x8xf32>, vector<8x64xf32>, vector<3x64xf32> -> vector<3x64xf32>
    %248 = vector.broadcast %243 : vector<3x1xf32> to vector<3x64xf32>
    %249 = arith.addf %247, %248 : vector<3x64xf32>
    %250 = arith.addf %84, %249 : vector<3x64xf32>
    %c0_95 = arith.constant 0 : index
    %c0_96 = arith.constant 0 : index
    %251 = vector.load %arg15[%c0_95, %c0_96] : memref<16x72xf32, #tpu.memory_space<vmem>>, vector<16x72xf32>
    %c0_97 = arith.constant 0 : index
    %c0_98 = arith.constant 0 : index
    %252 = vector.load %arg16[%c0_97, %c0_98] : memref<4x256xf32, #tpu.memory_space<vmem>>, vector<4x256xf32>
    %c0_99 = arith.constant 0 : index
    %c0_100 = arith.constant 0 : index
    %253 = vector.load %arg18[%c0_99, %c0_100] : memref<64x256xf32, #tpu.memory_space<vmem>>, vector<64x256xf32>
    %cst_101 = arith.constant dense<0.000000e+00> : vector<3x256xf32>
    %254 = tpu.matmul %250, %253, %cst_101 {dimension_numbers = #tpu.dot_dimension_numbers<[1], [0], [0], [1], [0, 0, 1, 1], [], []>} : vector<3x64xf32>, vector<64x256xf32>, vector<3x256xf32> -> vector<3x256xf32>
    %255 = vector.extract_strided_slice %1 {offsets = [96, 0], sizes = [8, 1], strides = [1, 1]} : vector<120x1xf32> to vector<8x1xf32>
    %256 = vector.broadcast %255 : vector<8x1xf32> to vector<8x64xf32>
    %257 = arith.mulf %241, %256 : vector<8x64xf32>
    %cst_102 = arith.constant 0.000000e+00 : f32
    %258 = vector.broadcast %cst_102 : f32 to vector<8x9xf32>
    %259 = tpu.concatenate %258, %257, %258 in 1 : vector<8x9xf32>, vector<8x64xf32>, vector<8x9xf32> -> vector<8x82xf32>
    %260 = tpu.iota {dimensions = array<i32: 1>} : vector<1x64xi32>
    %c7_i32_103 = arith.constant 7 : i32
    %261 = vector.broadcast %c7_i32_103 : i32 to vector<1x64xi32>
    %262 = arith.andi %260, %261 : vector<1x64xi32>
    %263 = vector.extract_strided_slice %259 {offsets = [0, 0], sizes = [8, 64], strides = [1, 1]} : vector<8x82xf32> to vector<8x64xf32>
    %c0_i32_104 = arith.constant 0 : i32
    %264 = vector.broadcast %c0_i32_104 : i32 to vector<1x64xi32>
    %265 = arith.cmpi sgt, %262, %264 : vector<1x64xi32>
    %cst_105 = arith.constant 0.000000e+00 : f32
    %266 = vector.shape_cast %265 : vector<1x64xi1> to vector<1x64xi1>
    %267 = vector.broadcast %266 : vector<1x64xi1> to vector<8x64xi1>
    %268 = vector.broadcast %cst_105 : f32 to vector<8x64xf32>
    %269 = arith.select %267, %263, %268 : vector<8x64xi1>, vector<8x64xf32>
    %270 = vector.extract_strided_slice %259 {offsets = [0, 1], sizes = [8, 64], strides = [1, 1]} : vector<8x82xf32> to vector<8x64xf32>
    %271 = vector.extract_strided_slice %259 {offsets = [0, 2], sizes = [8, 64], strides = [1, 1]} : vector<8x82xf32> to vector<8x64xf32>
    %c7_i32_106 = arith.constant 7 : i32
    %272 = vector.broadcast %c7_i32_106 : i32 to vector<1x64xi32>
    %273 = arith.cmpi slt, %262, %272 : vector<1x64xi32>
    %cst_107 = arith.constant 0.000000e+00 : f32
    %274 = vector.shape_cast %273 : vector<1x64xi1> to vector<1x64xi1>
    %275 = vector.broadcast %274 : vector<1x64xi1> to vector<8x64xi1>
    %276 = vector.broadcast %cst_107 : f32 to vector<8x64xf32>
    %277 = arith.select %275, %271, %276 : vector<8x64xi1>, vector<8x64xf32>
    %278 = vector.extract_strided_slice %259 {offsets = [0, 8], sizes = [8, 64], strides = [1, 1]} : vector<8x82xf32> to vector<8x64xf32>
    %c0_i32_108 = arith.constant 0 : i32
    %279 = vector.broadcast %c0_i32_108 : i32 to vector<1x64xi32>
    %280 = arith.cmpi sgt, %262, %279 : vector<1x64xi32>
    %cst_109 = arith.constant 0.000000e+00 : f32
    %281 = vector.shape_cast %280 : vector<1x64xi1> to vector<1x64xi1>
    %282 = vector.broadcast %281 : vector<1x64xi1> to vector<8x64xi1>
    %283 = vector.broadcast %cst_109 : f32 to vector<8x64xf32>
    %284 = arith.select %282, %278, %283 : vector<8x64xi1>, vector<8x64xf32>
    %285 = vector.extract_strided_slice %259 {offsets = [0, 9], sizes = [8, 64], strides = [1, 1]} : vector<8x82xf32> to vector<8x64xf32>
    %286 = vector.extract_strided_slice %259 {offsets = [0, 10], sizes = [8, 64], strides = [1, 1]} : vector<8x82xf32> to vector<8x64xf32>
    %c7_i32_110 = arith.constant 7 : i32
    %287 = vector.broadcast %c7_i32_110 : i32 to vector<1x64xi32>
    %288 = arith.cmpi slt, %262, %287 : vector<1x64xi32>
    %cst_111 = arith.constant 0.000000e+00 : f32
    %289 = vector.shape_cast %288 : vector<1x64xi1> to vector<1x64xi1>
    %290 = vector.broadcast %289 : vector<1x64xi1> to vector<8x64xi1>
    %291 = vector.broadcast %cst_111 : f32 to vector<8x64xf32>
    %292 = arith.select %290, %286, %291 : vector<8x64xi1>, vector<8x64xf32>
    %293 = vector.extract_strided_slice %259 {offsets = [0, 16], sizes = [8, 64], strides = [1, 1]} : vector<8x82xf32> to vector<8x64xf32>
    %c0_i32_112 = arith.constant 0 : i32
    %294 = vector.broadcast %c0_i32_112 : i32 to vector<1x64xi32>
    %295 = arith.cmpi sgt, %262, %294 : vector<1x64xi32>
    %cst_113 = arith.constant 0.000000e+00 : f32
    %296 = vector.shape_cast %295 : vector<1x64xi1> to vector<1x64xi1>
    %297 = vector.broadcast %296 : vector<1x64xi1> to vector<8x64xi1>
    %298 = vector.broadcast %cst_113 : f32 to vector<8x64xf32>
    %299 = arith.select %297, %293, %298 : vector<8x64xi1>, vector<8x64xf32>
    %300 = vector.extract_strided_slice %259 {offsets = [0, 17], sizes = [8, 64], strides = [1, 1]} : vector<8x82xf32> to vector<8x64xf32>
    %301 = vector.extract_strided_slice %259 {offsets = [0, 18], sizes = [8, 64], strides = [1, 1]} : vector<8x82xf32> to vector<8x64xf32>
    %c7_i32_114 = arith.constant 7 : i32
    %302 = vector.broadcast %c7_i32_114 : i32 to vector<1x64xi32>
    %303 = arith.cmpi slt, %262, %302 : vector<1x64xi32>
    %cst_115 = arith.constant 0.000000e+00 : f32
    %304 = vector.shape_cast %303 : vector<1x64xi1> to vector<1x64xi1>
    %305 = vector.broadcast %304 : vector<1x64xi1> to vector<8x64xi1>
    %306 = vector.broadcast %cst_115 : f32 to vector<8x64xf32>
    %307 = arith.select %305, %301, %306 : vector<8x64xi1>, vector<8x64xf32>
    %308 = tpu.concatenate %269, %270, %277, %284, %285, %292, %299, %300, %307 in 0 : vector<8x64xf32>, vector<8x64xf32>, vector<8x64xf32>, vector<8x64xf32>, vector<8x64xf32>, vector<8x64xf32>, vector<8x64xf32>, vector<8x64xf32>, vector<8x64xf32> -> vector<72x64xf32>
    %cst_116 = arith.constant dense<0.000000e+00> : vector<16x64xf32>
    %309 = tpu.matmul %251, %308, %cst_116 {dimension_numbers = #tpu.dot_dimension_numbers<[1], [0], [0], [1], [0, 0, 1, 1], [], []>} : vector<16x72xf32>, vector<72x64xf32>, vector<16x64xf32> -> vector<16x64xf32>
    %310 = vector.extract_strided_slice %309 {offsets = [0, 0], sizes = [4, 64], strides = [1, 1]} : vector<16x64xf32> to vector<4x64xf32>
    %c0_117 = arith.constant 0 : index
    %c0_118 = arith.constant 0 : index
    %c0_119 = arith.constant 0 : index
    %311 = vector.load %arg17[%c0_117, %c0_118, %c0_119] : memref<4x64x256xf32, #tpu.memory_space<vmem>>, vector<1x64x256xf32>
    %312 = vector.shape_cast %311 : vector<1x64x256xf32> to vector<64x256xf32>
    %cst_120 = arith.constant dense<0.000000e+00> : vector<4x256xf32>
    %313 = tpu.matmul %310, %312, %cst_120 {dimension_numbers = #tpu.dot_dimension_numbers<[1], [0], [0], [1], [0, 0, 1, 1], [], []>} : vector<4x64xf32>, vector<64x256xf32>, vector<4x256xf32> -> vector<4x256xf32>
    %314 = vector.extract_strided_slice %309 {offsets = [4, 0], sizes = [4, 64], strides = [1, 1]} : vector<16x64xf32> to vector<4x64xf32>
    %c1_121 = arith.constant 1 : index
    %c0_122 = arith.constant 0 : index
    %c0_123 = arith.constant 0 : index
    %315 = vector.load %arg17[%c1_121, %c0_122, %c0_123] : memref<4x64x256xf32, #tpu.memory_space<vmem>>, vector<1x64x256xf32>
    %316 = vector.shape_cast %315 : vector<1x64x256xf32> to vector<64x256xf32>
    %cst_124 = arith.constant dense<0.000000e+00> : vector<4x256xf32>
    %317 = tpu.matmul %314, %316, %cst_124 {dimension_numbers = #tpu.dot_dimension_numbers<[1], [0], [0], [1], [0, 0, 1, 1], [], []>} : vector<4x64xf32>, vector<64x256xf32>, vector<4x256xf32> -> vector<4x256xf32>
    %318 = arith.addf %313, %317 : vector<4x256xf32>
    %319 = vector.extract_strided_slice %309 {offsets = [8, 0], sizes = [4, 64], strides = [1, 1]} : vector<16x64xf32> to vector<4x64xf32>
    %c2_125 = arith.constant 2 : index
    %c0_126 = arith.constant 0 : index
    %c0_127 = arith.constant 0 : index
    %320 = vector.load %arg17[%c2_125, %c0_126, %c0_127] : memref<4x64x256xf32, #tpu.memory_space<vmem>>, vector<1x64x256xf32>
    %321 = vector.shape_cast %320 : vector<1x64x256xf32> to vector<64x256xf32>
    %cst_128 = arith.constant dense<0.000000e+00> : vector<4x256xf32>
    %322 = tpu.matmul %319, %321, %cst_128 {dimension_numbers = #tpu.dot_dimension_numbers<[1], [0], [0], [1], [0, 0, 1, 1], [], []>} : vector<4x64xf32>, vector<64x256xf32>, vector<4x256xf32> -> vector<4x256xf32>
    %323 = arith.addf %318, %322 : vector<4x256xf32>
    %324 = vector.extract_strided_slice %309 {offsets = [12, 0], sizes = [4, 64], strides = [1, 1]} : vector<16x64xf32> to vector<4x64xf32>
    %c3_129 = arith.constant 3 : index
    %c0_130 = arith.constant 0 : index
    %c0_131 = arith.constant 0 : index
    %325 = vector.load %arg17[%c3_129, %c0_130, %c0_131] : memref<4x64x256xf32, #tpu.memory_space<vmem>>, vector<1x64x256xf32>
    %326 = vector.shape_cast %325 : vector<1x64x256xf32> to vector<64x256xf32>
    %cst_132 = arith.constant dense<0.000000e+00> : vector<4x256xf32>
    %327 = tpu.matmul %324, %326, %cst_132 {dimension_numbers = #tpu.dot_dimension_numbers<[1], [0], [0], [1], [0, 0, 1, 1], [], []>} : vector<4x64xf32>, vector<64x256xf32>, vector<4x256xf32> -> vector<4x256xf32>
    %328 = arith.addf %323, %327 : vector<4x256xf32>
    %329 = vector.extract_strided_slice %1 {offsets = [104, 0], sizes = [4, 1], strides = [1, 1]} : vector<120x1xf32> to vector<4x1xf32>
    %330 = vector.broadcast %329 : vector<4x1xf32> to vector<4x256xf32>
    %331 = arith.mulf %328, %330 : vector<4x256xf32>
    %332 = arith.addf %331, %252 : vector<4x256xf32>
    %cst_133 = arith.constant 2.000000e-01 : f32
    %333 = vector.broadcast %cst_133 : f32 to vector<4x256xf32>
    %334 = arith.mulf %333, %332 : vector<4x256xf32>
    %335 = arith.maximumf %332, %334 : vector<4x256xf32>
    %cst_134 = arith.constant 1.41421354 : f32
    %336 = vector.broadcast %cst_134 : f32 to vector<4x256xf32>
    %337 = arith.mulf %335, %336 : vector<4x256xf32>
    %cst_135 = arith.constant -2.560000e+02 : f32
    %cst_136 = arith.constant 2.560000e+02 : f32
    %338 = vector.broadcast %cst_135 : f32 to vector<4x256xf32>
    %339 = arith.maximumf %338, %337 : vector<4x256xf32>
    %340 = vector.broadcast %cst_136 : f32 to vector<4x256xf32>
    %341 = arith.minimumf %340, %339 : vector<4x256xf32>
    %c0_137 = arith.constant 0 : index
    %c0_138 = arith.constant 0 : index
    %342 = vector.load %arg19[%c0_137, %c0_138] : memref<4x36xf32, #tpu.memory_space<vmem>>, vector<4x36xf32>
    %c0_139 = arith.constant 0 : index
    %c0_140 = arith.constant 0 : index
    %343 = vector.load %arg20[%c0_139, %c0_140] : memref<4x256xf32, #tpu.memory_space<vmem>>, vector<4x256xf32>
    %344 = vector.extract_strided_slice %1 {offsets = [108, 0], sizes = [4, 1], strides = [1, 1]} : vector<120x1xf32> to vector<4x1xf32>
    %345 = vector.broadcast %344 : vector<4x1xf32> to vector<4x256xf32>
    %346 = arith.mulf %341, %345 : vector<4x256xf32>
    %cst_141 = arith.constant 0.000000e+00 : f32
    %347 = vector.broadcast %cst_141 : f32 to vector<4x17xf32>
    %348 = tpu.concatenate %347, %346, %347 in 1 : vector<4x17xf32>, vector<4x256xf32>, vector<4x17xf32> -> vector<4x290xf32>
    %349 = tpu.iota {dimensions = array<i32: 1>} : vector<1x256xi32>
    %c15_i32 = arith.constant 15 : i32
    %350 = vector.broadcast %c15_i32 : i32 to vector<1x256xi32>
    %351 = arith.andi %349, %350 : vector<1x256xi32>
    %352 = vector.extract_strided_slice %348 {offsets = [0, 0], sizes = [4, 256], strides = [1, 1]} : vector<4x290xf32> to vector<4x256xf32>
    %c0_i32_142 = arith.constant 0 : i32
    %353 = vector.broadcast %c0_i32_142 : i32 to vector<1x256xi32>
    %354 = arith.cmpi sgt, %351, %353 : vector<1x256xi32>
    %cst_143 = arith.constant 0.000000e+00 : f32
    %355 = vector.shape_cast %354 : vector<1x256xi1> to vector<1x256xi1>
    %356 = vector.broadcast %355 : vector<1x256xi1> to vector<4x256xi1>
    %357 = vector.broadcast %cst_143 : f32 to vector<4x256xf32>
    %358 = arith.select %356, %352, %357 : vector<4x256xi1>, vector<4x256xf32>
    %359 = vector.extract_strided_slice %348 {offsets = [0, 1], sizes = [4, 256], strides = [1, 1]} : vector<4x290xf32> to vector<4x256xf32>
    %360 = vector.extract_strided_slice %348 {offsets = [0, 2], sizes = [4, 256], strides = [1, 1]} : vector<4x290xf32> to vector<4x256xf32>
    %c15_i32_144 = arith.constant 15 : i32
    %361 = vector.broadcast %c15_i32_144 : i32 to vector<1x256xi32>
    %362 = arith.cmpi slt, %351, %361 : vector<1x256xi32>
    %cst_145 = arith.constant 0.000000e+00 : f32
    %363 = vector.shape_cast %362 : vector<1x256xi1> to vector<1x256xi1>
    %364 = vector.broadcast %363 : vector<1x256xi1> to vector<4x256xi1>
    %365 = vector.broadcast %cst_145 : f32 to vector<4x256xf32>
    %366 = arith.select %364, %360, %365 : vector<4x256xi1>, vector<4x256xf32>
    %367 = vector.extract_strided_slice %348 {offsets = [0, 16], sizes = [4, 256], strides = [1, 1]} : vector<4x290xf32> to vector<4x256xf32>
    %c0_i32_146 = arith.constant 0 : i32
    %368 = vector.broadcast %c0_i32_146 : i32 to vector<1x256xi32>
    %369 = arith.cmpi sgt, %351, %368 : vector<1x256xi32>
    %cst_147 = arith.constant 0.000000e+00 : f32
    %370 = vector.shape_cast %369 : vector<1x256xi1> to vector<1x256xi1>
    %371 = vector.broadcast %370 : vector<1x256xi1> to vector<4x256xi1>
    %372 = vector.broadcast %cst_147 : f32 to vector<4x256xf32>
    %373 = arith.select %371, %367, %372 : vector<4x256xi1>, vector<4x256xf32>
    %374 = vector.extract_strided_slice %348 {offsets = [0, 17], sizes = [4, 256], strides = [1, 1]} : vector<4x290xf32> to vector<4x256xf32>
    %375 = vector.extract_strided_slice %348 {offsets = [0, 18], sizes = [4, 256], strides = [1, 1]} : vector<4x290xf32> to vector<4x256xf32>
    %c15_i32_148 = arith.constant 15 : i32
    %376 = vector.broadcast %c15_i32_148 : i32 to vector<1x256xi32>
    %377 = arith.cmpi slt, %351, %376 : vector<1x256xi32>
    %cst_149 = arith.constant 0.000000e+00 : f32
    %378 = vector.shape_cast %377 : vector<1x256xi1> to vector<1x256xi1>
    %379 = vector.broadcast %378 : vector<1x256xi1> to vector<4x256xi1>
    %380 = vector.broadcast %cst_149 : f32 to vector<4x256xf32>
    %381 = arith.select %379, %375, %380 : vector<4x256xi1>, vector<4x256xf32>
    %382 = vector.extract_strided_slice %348 {offsets = [0, 32], sizes = [4, 256], strides = [1, 1]} : vector<4x290xf32> to vector<4x256xf32>
    %c0_i32_150 = arith.constant 0 : i32
    %383 = vector.broadcast %c0_i32_150 : i32 to vector<1x256xi32>
    %384 = arith.cmpi sgt, %351, %383 : vector<1x256xi32>
    %cst_151 = arith.constant 0.000000e+00 : f32
    %385 = vector.shape_cast %384 : vector<1x256xi1> to vector<1x256xi1>
    %386 = vector.broadcast %385 : vector<1x256xi1> to vector<4x256xi1>
    %387 = vector.broadcast %cst_151 : f32 to vector<4x256xf32>
    %388 = arith.select %386, %382, %387 : vector<4x256xi1>, vector<4x256xf32>
    %389 = vector.extract_strided_slice %348 {offsets = [0, 33], sizes = [4, 256], strides = [1, 1]} : vector<4x290xf32> to vector<4x256xf32>
    %390 = vector.extract_strided_slice %348 {offsets = [0, 34], sizes = [4, 256], strides = [1, 1]} : vector<4x290xf32> to vector<4x256xf32>
    %c15_i32_152 = arith.constant 15 : i32
    %391 = vector.broadcast %c15_i32_152 : i32 to vector<1x256xi32>
    %392 = arith.cmpi slt, %351, %391 : vector<1x256xi32>
    %cst_153 = arith.constant 0.000000e+00 : f32
    %393 = vector.shape_cast %392 : vector<1x256xi1> to vector<1x256xi1>
    %394 = vector.broadcast %393 : vector<1x256xi1> to vector<4x256xi1>
    %395 = vector.broadcast %cst_153 : f32 to vector<4x256xf32>
    %396 = arith.select %394, %390, %395 : vector<4x256xi1>, vector<4x256xf32>
    %397 = tpu.concatenate %358, %359, %366, %373, %374, %381, %388, %389, %396 in 0 : vector<4x256xf32>, vector<4x256xf32>, vector<4x256xf32>, vector<4x256xf32>, vector<4x256xf32>, vector<4x256xf32>, vector<4x256xf32>, vector<4x256xf32>, vector<4x256xf32> -> vector<36x256xf32>
    %cst_154 = arith.constant dense<0.000000e+00> : vector<4x256xf32>
    %398 = tpu.matmul %342, %397, %cst_154 {dimension_numbers = #tpu.dot_dimension_numbers<[1], [0], [0], [1], [0, 0, 1, 1], [], []>} : vector<4x36xf32>, vector<36x256xf32>, vector<4x256xf32> -> vector<4x256xf32>
    %399 = vector.extract_strided_slice %1 {offsets = [112, 0], sizes = [4, 1], strides = [1, 1]} : vector<120x1xf32> to vector<4x1xf32>
    %400 = vector.broadcast %399 : vector<4x1xf32> to vector<4x256xf32>
    %401 = arith.mulf %398, %400 : vector<4x256xf32>
    %402 = arith.addf %401, %343 : vector<4x256xf32>
    %cst_155 = arith.constant 2.000000e-01 : f32
    %403 = vector.broadcast %cst_155 : f32 to vector<4x256xf32>
    %404 = arith.mulf %403, %402 : vector<4x256xf32>
    %405 = arith.maximumf %402, %404 : vector<4x256xf32>
    %cst_156 = arith.constant 1.41421354 : f32
    %406 = vector.broadcast %cst_156 : f32 to vector<4x256xf32>
    %407 = arith.mulf %405, %406 : vector<4x256xf32>
    %cst_157 = arith.constant -2.560000e+02 : f32
    %cst_158 = arith.constant 2.560000e+02 : f32
    %408 = vector.broadcast %cst_157 : f32 to vector<4x256xf32>
    %409 = arith.maximumf %408, %407 : vector<4x256xf32>
    %410 = vector.broadcast %cst_158 : f32 to vector<4x256xf32>
    %411 = arith.minimumf %410, %409 : vector<4x256xf32>
    %c0_159 = arith.constant 0 : index
    %c0_160 = arith.constant 0 : index
    %412 = vector.load %arg21[%c0_159, %c0_160] : memref<3x4xf32, #tpu.memory_space<vmem>>, vector<3x4xf32>
    %c0_161 = arith.constant 0 : index
    %c0_162 = arith.constant 0 : index
    %413 = vector.load %arg22[%c0_161, %c0_162] : memref<3x1xf32, #tpu.memory_space<vmem>>, vector<3x1xf32>
    %414 = vector.extract_strided_slice %1 {offsets = [116, 0], sizes = [4, 1], strides = [1, 1]} : vector<120x1xf32> to vector<4x1xf32>
    %415 = vector.broadcast %414 : vector<4x1xf32> to vector<4x256xf32>
    %416 = arith.mulf %411, %415 : vector<4x256xf32>
    %cst_163 = arith.constant dense<0.000000e+00> : vector<3x256xf32>
    %417 = tpu.matmul %412, %416, %cst_163 {dimension_numbers = #tpu.dot_dimension_numbers<[1], [0], [0], [1], [0, 0, 1, 1], [], []>} : vector<3x4xf32>, vector<4x256xf32>, vector<3x256xf32> -> vector<3x256xf32>
    %418 = vector.broadcast %413 : vector<3x1xf32> to vector<3x256xf32>
    %419 = arith.addf %417, %418 : vector<3x256xf32>
    %420 = arith.addf %254, %419 : vector<3x256xf32>
    %c0_164 = arith.constant 0 : index
    %c0_165 = arith.constant 0 : index
    %c0_166 = arith.constant 0 : index
    %421 = vector.load %arg23[%c0_164, %c0_165, %c0_166] : memref<1x3x256xf32, #tpu.memory_space<vmem>>, vector<1x3x256xf32>
    %422 = vector.shape_cast %421 : vector<1x3x256xf32> to vector<3x256xf32>
    %423 = vector.shape_cast %420 : vector<3x256xf32> to vector<1x3x256xf32>
    tpu.vector_store %arg23[%c0_164, %c0_165, %c0_166], %423 {strides = array<i32>} : memref<1x3x256xf32, #tpu.memory_space<vmem>>, vector<1x3x256xf32>,
    return
  }
  func.func @transform_0(%arg0: i32) -> (i32, i32, i32) {
    %c0_i32 = arith.constant 0 : i32
    %c0_i32_0 = arith.constant 0 : i32
    %c0_i32_1 = arith.constant 0 : i32
    return %arg0, %c0_i32, %c0_i32_0 : i32, i32, i32
  }
  func.func @transform_1(%arg0: i32) -> (i32, i32) {
    %c0_i32 = arith.constant 0 : i32
    %c0_i32_0 = arith.constant 0 : i32
    %c0_i32_1 = arith.constant 0 : i32
    return %c0_i32, %c0_i32_0 : i32, i32
  }
  func.func @transform_2(%arg0: i32) -> (i32, i32) {
    %c0_i32 = arith.constant 0 : i32
    %c0_i32_0 = arith.constant 0 : i32
    %c0_i32_1 = arith.constant 0 : i32
    return %c0_i32, %c0_i32_0 : i32, i32
  }
  func.func @transform_3(%arg0: i32) -> (i32, i32) {
    %c0_i32 = arith.constant 0 : i32
    %c0_i32_0 = arith.constant 0 : i32
    %c0_i32_1 = arith.constant 0 : i32
    return %c0_i32, %c0_i32_0 : i32, i32
  }
  func.func @transform_4(%arg0: i32) -> (i32, i32) {
    %c0_i32 = arith.constant 0 : i32
    %c0_i32_0 = arith.constant 0 : i32
    %c0_i32_1 = arith.constant 0 : i32
    return %c0_i32, %c0_i32_0 : i32, i32
  }
  func.func @transform_5(%arg0: i32) -> (i32, i32) {
    %c0_i32 = arith.constant 0 : i32
    %c0_i32_0 = arith.constant 0 : i32
    %c0_i32_1 = arith.constant 0 : i32
    return %c0_i32, %c0_i32_0 : i32, i32
  }
  func.func @transform_6(%arg0: i32) -> (i32, i32) {
    %c0_i32 = arith.constant 0 : i32
    %c0_i32_0 = arith.constant 0 : i32
    %c0_i32_1 = arith.constant 0 : i32
    return %c0_i32, %c0_i32_0 : i32, i32
  }
  func.func @transform_7(%arg0: i32) -> (i32, i32) {
    %c0_i32 = arith.constant 0 : i32
    %c0_i32_0 = arith.constant 0 : i32
    %c0_i32_1 = arith.constant 0 : i32
    return %c0_i32, %c0_i32_0 : i32, i32
  }
  func.func @transform_8(%arg0: i32) -> (i32, i32, i32) {
    %c0_i32 = arith.constant 0 : i32
    %c0_i32_0 = arith.constant 0 : i32
    %c0_i32_1 = arith.constant 0 : i32
    %c0_i32_2 = arith.constant 0 : i32
    return %c0_i32, %c0_i32_0, %c0_i32_1 : i32, i32, i32
  }
  func.func @transform_9(%arg0: i32) -> (i32, i32) {
    %c0_i32 = arith.constant 0 : i32
    %c0_i32_0 = arith.constant 0 : i32
    %c0_i32_1 = arith.constant 0 : i32
    return %c0_i32, %c0_i32_0 : i32, i32
  }
  func.func @transform_10(%arg0: i32) -> (i32, i32) {
    %c0_i32 = arith.constant 0 : i32
    %c0_i32_0 = arith.constant 0 : i32
    %c0_i32_1 = arith.constant 0 : i32
    return %c0_i32, %c0_i32_0 : i32, i32
  }
  func.func @transform_11(%arg0: i32) -> (i32, i32) {
    %c0_i32 = arith.constant 0 : i32
    %c0_i32_0 = arith.constant 0 : i32
    %c0_i32_1 = arith.constant 0 : i32
    return %c0_i32, %c0_i32_0 : i32, i32
  }
  func.func @transform_12(%arg0: i32) -> (i32, i32) {
    %c0_i32 = arith.constant 0 : i32
    %c0_i32_0 = arith.constant 0 : i32
    %c0_i32_1 = arith.constant 0 : i32
    return %c0_i32, %c0_i32_0 : i32, i32
  }
  func.func @transform_13(%arg0: i32) -> (i32, i32) {
    %c0_i32 = arith.constant 0 : i32
    %c0_i32_0 = arith.constant 0 : i32
    %c0_i32_1 = arith.constant 0 : i32
    return %c0_i32, %c0_i32_0 : i32, i32
  }
  func.func @transform_14(%arg0: i32) -> (i32, i32) {
    %c0_i32 = arith.constant 0 : i32
    %c0_i32_0 = arith.constant 0 : i32
    %c0_i32_1 = arith.constant 0 : i32
    return %c0_i32, %c0_i32_0 : i32, i32
  }
  func.func @transform_15(%arg0: i32) -> (i32, i32) {
    %c0_i32 = arith.constant 0 : i32
    %c0_i32_0 = arith.constant 0 : i32
    %c0_i32_1 = arith.constant 0 : i32
    return %c0_i32, %c0_i32_0 : i32, i32
  }
  func.func @transform_16(%arg0: i32) -> (i32, i32, i32) {
    %c0_i32 = arith.constant 0 : i32
    %c0_i32_0 = arith.constant 0 : i32
    %c0_i32_1 = arith.constant 0 : i32
    %c0_i32_2 = arith.constant 0 : i32
    return %c0_i32, %c0_i32_0, %c0_i32_1 : i32, i32, i32
  }
  func.func @transform_17(%arg0: i32) -> (i32, i32) {
    %c0_i32 = arith.constant 0 : i32
    %c0_i32_0 = arith.constant 0 : i32
    %c0_i32_1 = arith.constant 0 : i32
    return %c0_i32, %c0_i32_0 : i32, i32
  }
  func.func @transform_18(%arg0: i32) -> (i32, i32) {
    %c0_i32 = arith.constant 0 : i32
    %c0_i32_0 = arith.constant 0 : i32
    %c0_i32_1 = arith.constant 0 : i32
    return %c0_i32, %c0_i32_0 : i32, i32
  }
  func.func @transform_19(%arg0: i32) -> (i32, i32) {
    %c0_i32 = arith.constant 0 : i32
    %c0_i32_0 = arith.constant 0 : i32
    %c0_i32_1 = arith.constant 0 : i32
    return %c0_i32, %c0_i32_0 : i32, i32
  }
  func.func @transform_20(%arg0: i32) -> (i32, i32) {
    %c0_i32 = arith.constant 0 : i32
    %c0_i32_0 = arith.constant 0 : i32
    %c0_i32_1 = arith.constant 0 : i32
    return %c0_i32, %c0_i32_0 : i32, i32
  }
  func.func @transform_21(%arg0: i32) -> (i32, i32) {
    %c0_i32 = arith.constant 0 : i32
    %c0_i32_0 = arith.constant 0 : i32
    %c0_i32_1 = arith.constant 0 : i32
    return %c0_i32, %c0_i32_0 : i32, i32
  }
  func.func @transform_22(%arg0: i32) -> (i32, i32, i32) {
    %c0_i32 = arith.constant 0 : i32
    %c0_i32_0 = arith.constant 0 : i32
    %c0_i32_1 = arith.constant 0 : i32
    return %arg0, %c0_i32, %c0_i32_0 : i32, i32, i32
  }
}

</mosaic_0001>

<llo_original>
// kernel: synthesis_fwd.1
$region0: #{synthesis_fwd.1}
  #allocation0 [shape = 'u32[]', space=smem, size = 0x4, offset = 0x4, fixed_abs, tag = 'smem constant byte address 0x4 - core index']
  #allocation1 [shape = 'u32[144,128]{1,0:T(1,128)}', space=vmem, size = 0x12000, scoped, tag = 'internal scratch']
  %s0 = inlined_call_operand.vmem [shape: f32[2,120,1], index: 0, kind: input, shape index: {}]
  %s1 = inlined_call_operand.vmem [shape: f32[16,16], index: 1, kind: input, shape index: {}]
  %s2 = inlined_call_operand.vmem [shape: f32[16,144], index: 2, kind: input, shape index: {}]
  %s3 = inlined_call_operand.vmem [shape: f32[16,16], index: 3, kind: input, shape index: {}]
  %s4 = inlined_call_operand.vmem [shape: f32[3,16], index: 4, kind: input, shape index: {}]
  %s5 = inlined_call_operand.vmem [shape: f32[3,1], index: 5, kind: input, shape index: {}]
  %s6 = inlined_call_operand.vmem [shape: f32[32,144], index: 6, kind: input, shape index: {}]
  %s7 = inlined_call_operand.vmem [shape: f32[8,64], index: 7, kind: input, shape index: {}]
  %s8 = inlined_call_operand.vmem [shape: f32[4,16,64], index: 8, kind: input, shape index: {}]
  %s9 = inlined_call_operand.vmem [shape: f32[16,64], index: 9, kind: input, shape index: {}]
  %s10 = inlined_call_operand.vmem [shape: f32[8,72], index: 10, kind: input, shape index: {}]
  %s11 = inlined_call_operand.vmem [shape: f32[8,64], index: 11, kind: input, shape index: {}]
  %s12 = inlined_call_operand.vmem [shape: f32[3,8], index: 12, kind: input, shape index: {}]
  %s13 = inlined_call_operand.vmem [shape: f32[3,1], index: 13, kind: input, shape index: {}]
  %s14 = inlined_call_operand.vmem [shape: f32[16,72], index: 14, kind: input, shape index: {}]
  %s15 = inlined_call_operand.vmem [shape: f32[4,256], index: 15, kind: input, shape index: {}]
  %s16 = inlined_call_operand.vmem [shape: f32[4,64,256], index: 16, kind: input, shape index: {}]
  %s17 = inlined_call_operand.vmem [shape: f32[64,256], index: 17, kind: input, shape index: {}]
  %s18 = inlined_call_operand.vmem [shape: f32[4,36], index: 18, kind: input, shape index: {}]
  %s19 = inlined_call_operand.vmem [shape: f32[4,256], index: 19, kind: input, shape index: {}]
  %s20 = inlined_call_operand.vmem [shape: f32[3,4], index: 20, kind: input, shape index: {}]
  %s21 = inlined_call_operand.vmem [shape: f32[3,1], index: 21, kind: input, shape index: {}]
  %s22 = inlined_call_operand.vmem [shape: f32[2,3,256], index: 22, kind: output, shape index: {}]
  %s23 = sld [smem:[#allocation0]]
  $region121: #{synthesis_fwd.1} parent=0
    _
  %s25 = ssub.s32 1, %s23
  %s26 = scalar_select 0, %s25, %s23
  loop: start=0, step=1, limit=4
  $region2: #{synthesis_fwd.1} parent=0 // loop_pre_header
    _
  $region3: #{synthesis_fwd.1} parent=0 // loop_header
    %s28 = sphi 0, %s32
    %p29 = scmp.ge.s32.totalorder %s28, 4
    %s38 = sphi 0, %s40
    %s41 = sphi 0, %s38
    %s42 = sphi 0, %s41
    %s58 = sphi 0, %s42
    %s62 = sphi 0, %s62
    %s64 = sphi 0, %s62
    %s65 = sphi 0, %s64
    %s79 = sphi 0, %s65
    %s83 = sphi 0, %s83
    %s85 = sphi 0, %s83
    %s86 = sphi 0, %s85
    %s100 = sphi 0, %s86
    %s104 = sphi 0, %s104
    %s106 = sphi 0, %s104
    %s107 = sphi 0, %s106
    %s121 = sphi 0, %s107
    %s125 = sphi 0, %s125
    %s127 = sphi 0, %s125
    %s128 = sphi 0, %s127
    %s142 = sphi 0, %s128
    %s146 = sphi 0, %s146
    %s148 = sphi 0, %s146
    %s149 = sphi 0, %s148
    %s163 = sphi 0, %s149
    %s167 = sphi 0, %s167
    %s169 = sphi 0, %s167
    %s170 = sphi 0, %s169
    %s184 = sphi 0, %s170
    %s188 = sphi 0, %s188
    %s190 = sphi 0, %s188
    %s191 = sphi 0, %s190
    %s205 = sphi 0, %s191
    %s209 = sphi 0, %s209
    %s211 = sphi 0, %s209
    %s212 = sphi 0, %s211
    %s226 = sphi 0, %s212
    %s230 = sphi 0, %s230
    %s232 = sphi 0, %s230
    %s233 = sphi 0, %s232
    %s247 = sphi 0, %s233
    %s251 = sphi 0, %s251
    %s253 = sphi 0, %s251
    %s254 = sphi 0, %s253
    %s268 = sphi 0, %s254
    %s272 = sphi 0, %s272
    %s274 = sphi 0, %s272
    %s275 = sphi 0, %s274
    %s289 = sphi 0, %s275
    %s293 = sphi 0, %s293
    %s295 = sphi 0, %s293
    %s296 = sphi 0, %s295
    %s310 = sphi 0, %s296
    %s314 = sphi 0, %s314
    %s316 = sphi 0, %s314
    %s317 = sphi 0, %s316
    %s331 = sphi 0, %s317
    %s335 = sphi 0, %s335
    %s337 = sphi 0, %s335
    %s338 = sphi 0, %s337
    %s352 = sphi 0, %s338
    %s356 = sphi 0, %s356
    %s358 = sphi 0, %s356
    %s359 = sphi 0, %s358
    %s373 = sphi 0, %s359
    %s377 = sphi 0, %s377
    %s379 = sphi 0, %s377
    %s380 = sphi 0, %s379
    %s394 = sphi 0, %s380
    %s398 = sphi 0, %s398
    %s400 = sphi 0, %s398
    %s401 = sphi 0, %s400
    %s415 = sphi 0, %s401
    %s419 = sphi 0, %s419
    %s421 = sphi 0, %s419
    %s422 = sphi 0, %s421
    %s436 = sphi 0, %s422
    %s440 = sphi 0, %s440
    %s442 = sphi 0, %s440
    %s443 = sphi 0, %s442
    %s457 = sphi 0, %s443
    %s461 = sphi 0, %s461
    %s463 = sphi 0, %s461
    %s464 = sphi 0, %s463
    %s478 = sphi 0, %s464
    %s482 = sphi 0, %s482
    %s484 = sphi 0, %s482
    %s485 = sphi 0, %s484
    %s499 = sphi 0, %s485
    %s505 = sphi 0, %s507
    %s508 = sphi 0, %s505
    %s509 = sphi 0, %s508
    %s525 = sphi 0, %s509
  $region4: #{synthesis_fwd.1} parent=0 // loop_header_branch
    %31 = sbr.rel (%p29) target = $region8
  $region5: #{synthesis_fwd.1} parent=0 // loop_body
    %s33 = ssub.s32 %s28, 1
    %s34 = ssub.s32 %s28, 2
    %s35 = sadd.s32 %s28, 1
    %s36 = ssub.s32 %s28, %s35
    %p37 = scmp.eq.s32.totalorder %s36, 0
    %s39 = sadd.s32 %s38, 1
    %s40 = scalar_select %p37, %s38, %s39
    %p43 = pneg %p37
    %p44 = scmp.eq.s32.totalorder %s28, 1
    %p45 = por %p43, %p44
    %p46 = scmp.ne.s32.totalorder %s38, %s41
    %p47 = scmp.eq.s32.totalorder %s28, 0
    %p48 = por %p46, %p47
    %p49 = scmp.ne.s32.totalorder %s38, %s41
    %p50 = scmp.eq.s32.totalorder %s33, 1
    %p51 = por %p49, %p50
    %p52 = scmp.ne.s32.totalorder %s41, %s42
    %p53 = scmp.eq.s32.totalorder %s33, 0
    %p54 = por %p52, %p53
    %p55 = scmp.ne.s32.totalorder %s41, %s42
    %p56 = scmp.eq.s32.totalorder %s34, 1
    %p57 = por %p55, %p56
    %p59 = scmp.ne.s32.totalorder %s42, %s58
    %p60 = scmp.eq.s32.totalorder %s34, 0
    %p61 = por %p59, %p60
    %s63 = sadd.s32 %s62, 1
    %p66 = scmp.eq.s32.totalorder %s28, 1
    %p67 = scmp.ne.s32.totalorder %s62, %s64
    %p68 = scmp.eq.s32.totalorder %s28, 0
    %p69 = por %p67, %p68
    %p70 = scmp.ne.s32.totalorder %s62, %s64
    %p71 = scmp.eq.s32.totalorder %s33, 1
    %p72 = por %p70, %p71
    %p73 = scmp.ne.s32.totalorder %s64, %s65
    %p74 = scmp.eq.s32.totalorder %s33, 0
    %p75 = por %p73, %p74
    %p76 = scmp.ne.s32.totalorder %s64, %s65
    %p77 = scmp.eq.s32.totalorder %s34, 1
    %p78 = por %p76, %p77
    %p80 = scmp.ne.s32.totalorder %s65, %s79
    %p81 = scmp.eq.s32.totalorder %s34, 0
    %p82 = por %p80, %p81
    %s84 = sadd.s32 %s83, 1
    %p87 = scmp.eq.s32.totalorder %s28, 1
    %p88 = scmp.ne.s32.totalorder %s83, %s85
    %p89 = scmp.eq.s32.totalorder %s28, 0
    %p90 = por %p88, %p89
    %p91 = scmp.ne.s32.totalorder %s83, %s85
    %p92 = scmp.eq.s32.totalorder %s33, 1
    %p93 = por %p91, %p92
    %p94 = scmp.ne.s32.totalorder %s85, %s86
    %p95 = scmp.eq.s32.totalorder %s33, 0
    %p96 = por %p94, %p95
    %p97 = scmp.ne.s32.totalorder %s85, %s86
    %p98 = scmp.eq.s32.totalorder %s34, 1
    %p99 = por %p97, %p98
    %p101 = scmp.ne.s32.totalorder %s86, %s100
    %p102 = scmp.eq.s32.totalorder %s34, 0
    %p103 = por %p101, %p102
    %s105 = sadd.s32 %s104, 1
    %p108 = scmp.eq.s32.totalorder %s28, 1
    %p109 = scmp.ne.s32.totalorder %s104, %s106
    %p110 = scmp.eq.s32.totalorder %s28, 0
    %p111 = por %p109, %p110
    %p112 = scmp.ne.s32.totalorder %s104, %s106
    %p113 = scmp.eq.s32.totalorder %s33, 1
    %p114 = por %p112, %p113
    %p115 = scmp.ne.s32.totalorder %s106, %s107
    %p116 = scmp.eq.s32.totalorder %s33, 0
    %p117 = por %p115, %p116
    %p118 = scmp.ne.s32.totalorder %s106, %s107
    %p119 = scmp.eq.s32.totalorder %s34, 1
    %p120 = por %p118, %p119
    %p122 = scmp.ne.s32.totalorder %s107, %s121
    %p123 = scmp.eq.s32.totalorder %s34, 0
    %p124 = por %p122, %p123
    %s126 = sadd.s32 %s125, 1
    %p129 = scmp.eq.s32.totalorder %s28, 1
    %p130 = scmp.ne.s32.totalorder %s125, %s127
    %p131 = scmp.eq.s32.totalorder %s28, 0
    %p132 = por %p130, %p131
    %p133 = scmp.ne.s32.totalorder %s125, %s127
    %p134 = scmp.eq.s32.totalorder %s33, 1
    %p135 = por %p133, %p134
    %p136 = scmp.ne.s32.totalorder %s127, %s128
    %p137 = scmp.eq.s32.totalorder %s33, 0
    %p138 = por %p136, %p137
    %p139 = scmp.ne.s32.totalorder %s127, %s128
    %p140 = scmp.eq.s32.totalorder %s34, 1
    %p141 = por %p139, %p140
    %p143 = scmp.ne.s32.totalorder %s128, %s142
    %p144 = scmp.eq.s32.totalorder %s34, 0
    %p145 = por %p143, %p144
    %s147 = sadd.s32 %s146, 1
    %p150 = scmp.eq.s32.totalorder %s28, 1
    %p151 = scmp.ne.s32.totalorder %s146, %s148
    %p152 = scmp.eq.s32.totalorder %s28, 0
    %p153 = por %p151, %p152
    %p154 = scmp.ne.s32.totalorder %s146, %s148
    %p155 = scmp.eq.s32.totalorder %s33, 1
    %p156 = por %p154, %p155
    %p157 = scmp.ne.s32.totalorder %s148, %s149
    %p158 = scmp.eq.s32.totalorder %s33, 0
    %p159 = por %p157, %p158
    %p160 = scmp.ne.s32.totalorder %s148, %s149
    %p161 = scmp.eq.s32.totalorder %s34, 1
    %p162 = por %p160, %p161
    %p164 = scmp.ne.s32.totalorder %s149, %s163
    %p165 = scmp.eq.s32.totalorder %s34, 0
    %p166 = por %p164, %p165
    %s168 = sadd.s32 %s167, 1
    %p171 = scmp.eq.s32.totalorder %s28, 1
    %p172 = scmp.ne.s32.totalorder %s167, %s169
    %p173 = scmp.eq.s32.totalorder %s28, 0
    %p174 = por %p172, %p173
    %p175 = scmp.ne.s32.totalorder %s167, %s169
    %p176 = scmp.eq.s32.totalorder %s33, 1
    %p177 = por %p175, %p176
    %p178 = scmp.ne.s32.totalorder %s169, %s170
    %p179 = scmp.eq.s32.totalorder %s33, 0
    %p180 = por %p178, %p179
    %p181 = scmp.ne.s32.totalorder %s169, %s170
    %p182 = scmp.eq.s32.totalorder %s34, 1
    %p183 = por %p181, %p182
    %p185 = scmp.ne.s32.totalorder %s170, %s184
    %p186 = scmp.eq.s32.totalorder %s34, 0
    %p187 = por %p185, %p186
    %s189 = sadd.s32 %s188, 1
    %p192 = scmp.eq.s32.totalorder %s28, 1
    %p193 = scmp.ne.s32.totalorder %s188, %s190
    %p194 = scmp.eq.s32.totalorder %s28, 0
    %p195 = por %p193, %p194
    %p196 = scmp.ne.s32.totalorder %s188, %s190
    %p197 = scmp.eq.s32.totalorder %s33, 1
    %p198 = por %p196, %p197
    %p199 = scmp.ne.s32.totalorder %s190, %s191
    %p200 = scmp.eq.s32.totalorder %s33, 0
    %p201 = por %p199, %p200
    %p202 = scmp.ne.s32.totalorder %s190, %s191
    %p203 = scmp.eq.s32.totalorder %s34, 1
    %p204 = por %p202, %p203
    %p206 = scmp.ne.s32.totalorder %s191, %s205
    %p207 = scmp.eq.s32.totalorder %s34, 0
    %p208 = por %p206, %p207
    %s210 = sadd.s32 %s209, 1
    %p213 = scmp.eq.s32.totalorder %s28, 1
    %p214 = scmp.ne.s32.totalorder %s209, %s211
    %p215 = scmp.eq.s32.totalorder %s28, 0
    %p216 = por %p214, %p215
    %p217 = scmp.ne.s32.totalorder %s209, %s211
    %p218 = scmp.eq.s32.totalorder %s33, 1
    %p219 = por %p217, %p218
    %p220 = scmp.ne.s32.totalorder %s211, %s212
    %p221 = scmp.eq.s32.totalorder %s33, 0
    %p222 = por %p220, %p221
    %p223 = scmp.ne.s32.totalorder %s211, %s212
    %p224 = scmp.eq.s32.totalorder %s34, 1
    %p225 = por %p223, %p224
    %p227 = scmp.ne.s32.totalorder %s212, %s226
    %p228 = scmp.eq.s32.totalorder %s34, 0
    %p229 = por %p227, %p228
    %s231 = sadd.s32 %s230, 1
    %p234 = scmp.eq.s32.totalorder %s28, 1
    %p235 = scmp.ne.s32.totalorder %s230, %s232
    %p236 = scmp.eq.s32.totalorder %s28, 0
    %p237 = por %p235, %p236
    %p238 = scmp.ne.s32.totalorder %s230, %s232
    %p239 = scmp.eq.s32.totalorder %s33, 1
    %p240 = por %p238, %p239
    %p241 = scmp.ne.s32.totalorder %s232, %s233
    %p242 = scmp.eq.s32.totalorder %s33, 0
    %p243 = por %p241, %p242
    %p244 = scmp.ne.s32.totalorder %s232, %s233
    %p245 = scmp.eq.s32.totalorder %s34, 1
    %p246 = por %p244, %p245
    %p248 = scmp.ne.s32.totalorder %s233, %s247
    %p249 = scmp.eq.s32.totalorder %s34, 0
    %p250 = por %p248, %p249
    %s252 = sadd.s32 %s251, 1
    %p255 = scmp.eq.s32.totalorder %s28, 1
    %p256 = scmp.ne.s32.totalorder %s251, %s253
    %p257 = scmp.eq.s32.totalorder %s28, 0
    %p258 = por %p256, %p257
    %p259 = scmp.ne.s32.totalorder %s251, %s253
    %p260 = scmp.eq.s32.totalorder %s33, 1
    %p261 = por %p259, %p260
    %p262 = scmp.ne.s32.totalorder %s253, %s254
    %p263 = scmp.eq.s32.totalorder %s33, 0
    %p264 = por %p262, %p263
    %p265 = scmp.ne.s32.totalorder %s253, %s254
    %p266 = scmp.eq.s32.totalorder %s34, 1
    %p267 = por %p265, %p266
    %p269 = scmp.ne.s32.totalorder %s254, %s268
    %p270 = scmp.eq.s32.totalorder %s34, 0
    %p271 = por %p269, %p270
    %s273 = sadd.s32 %s272, 1
    %p276 = scmp.eq.s32.totalorder %s28, 1
    %p277 = scmp.ne.s32.totalorder %s272, %s274
    %p278 = scmp.eq.s32.totalorder %s28, 0
    %p279 = por %p277, %p278
    %p280 = scmp.ne.s32.totalorder %s272, %s274
    %p281 = scmp.eq.s32.totalorder %s33, 1
    %p282 = por %p280, %p281
    %p283 = scmp.ne.s32.totalorder %s274, %s275
    %p284 = scmp.eq.s32.totalorder %s33, 0
    %p285 = por %p283, %p284
    %p286 = scmp.ne.s32.totalorder %s274, %s275
    %p287 = scmp.eq.s32.totalorder %s34, 1
    %p288 = por %p286, %p287
    %p290 = scmp.ne.s32.totalorder %s275, %s289
    %p291 = scmp.eq.s32.totalorder %s34, 0
    %p292 = por %p290, %p291
    %s294 = sadd.s32 %s293, 1
    %p297 = scmp.eq.s32.totalorder %s28, 1
    %p298 = scmp.ne.s32.totalorder %s293, %s295
    %p299 = scmp.eq.s32.totalorder %s28, 0
    %p300 = por %p298, %p299
    %p301 = scmp.ne.s32.totalorder %s293, %s295
    %p302 = scmp.eq.s32.totalorder %s33, 1
    %p303 = por %p301, %p302
    %p304 = scmp.ne.s32.totalorder %s295, %s296
    %p305 = scmp.eq.s32.totalorder %s33, 0
    %p306 = por %p304, %p305
    %p307 = scmp.ne.s32.totalorder %s295, %s296
    %p308 = scmp.eq.s32.totalorder %s34, 1
    %p309 = por %p307, %p308
    %p311 = scmp.ne.s32.totalorder %s296, %s310
    %p312 = scmp.eq.s32.totalorder %s34, 0
    %p313 = por %p311, %p312
    %s315 = sadd.s32 %s314, 1
    %p318 = scmp.eq.s32.totalorder %s28, 1
    %p319 = scmp.ne.s32.totalorder %s314, %s316
    %p320 = scmp.eq.s32.totalorder %s28, 0
    %p321 = por %p319, %p320
    %p322 = scmp.ne.s32.totalorder %s314, %s316
    %p323 = scmp.eq.s32.totalorder %s33, 1
    %p324 = por %p322, %p323
    %p325 = scmp.ne.s32.totalorder %s316, %s317
    %p326 = scmp.eq.s32.totalorder %s33, 0
    %p327 = por %p325, %p326
    %p328 = scmp.ne.s32.totalorder %s316, %s317
    %p329 = scmp.eq.s32.totalorder %s34, 1
    %p330 = por %p328, %p329
    %p332 = scmp.ne.s32.totalorder %s317, %s331
    %p333 = scmp.eq.s32.totalorder %s34, 0
    %p334 = por %p332, %p333
    %s336 = sadd.s32 %s335, 1
    %p339 = scmp.eq.s32.totalorder %s28, 1
    %p340 = scmp.ne.s32.totalorder %s335, %s337
    %p341 = scmp.eq.s32.totalorder %s28, 0
    %p342 = por %p340, %p341
    %p343 = scmp.ne.s32.totalorder %s335, %s337
    %p344 = scmp.eq.s32.totalorder %s33, 1
    %p345 = por %p343, %p344
    %p346 = scmp.ne.s32.totalorder %s337, %s338
    %p347 = scmp.eq.s32.totalorder %s33, 0
    %p348 = por %p346, %p347
    %p349 = scmp.ne.s32.totalorder %s337, %s338
    %p350 = scmp.eq.s32.totalorder %s34, 1
    %p351 = por %p349, %p350
    %p353 = scmp.ne.s32.totalorder %s338, %s352
    %p354 = scmp.eq.s32.totalorder %s34, 0
    %p355 = por %p353, %p354
    %s357 = sadd.s32 %s356, 1
    %p360 = scmp.eq.s32.totalorder %s28, 1
    %p361 = scmp.ne.s32.totalorder %s356, %s358
    %p362 = scmp.eq.s32.totalorder %s28, 0
    %p363 = por %p361, %p362
    %p364 = scmp.ne.s32.totalorder %s356, %s358
    %p365 = scmp.eq.s32.totalorder %s33, 1
    %p366 = por %p364, %p365
    %p367 = scmp.ne.s32.totalorder %s358, %s359
    %p368 = scmp.eq.s32.totalorder %s33, 0
    %p369 = por %p367, %p368
    %p370 = scmp.ne.s32.totalorder %s358, %s359
    %p371 = scmp.eq.s32.totalorder %s34, 1
    %p372 = por %p370, %p371
    %p374 = scmp.ne.s32.totalorder %s359, %s373
    %p375 = scmp.eq.s32.totalorder %s34, 0
    %p376 = por %p374, %p375
    %s378 = sadd.s32 %s377, 1
    %p381 = scmp.eq.s32.totalorder %s28, 1
    %p382 = scmp.ne.s32.totalorder %s377, %s379
    %p383 = scmp.eq.s32.totalorder %s28, 0
    %p384 = por %p382, %p383
    %p385 = scmp.ne.s32.totalorder %s377, %s379
    %p386 = scmp.eq.s32.totalorder %s33, 1
    %p387 = por %p385, %p386
    %p388 = scmp.ne.s32.totalorder %s379, %s380
    %p389 = scmp.eq.s32.totalorder %s33, 0
    %p390 = por %p388, %p389
    %p391 = scmp.ne.s32.totalorder %s379, %s380
    %p392 = scmp.eq.s32.totalorder %s34, 1
    %p393 = por %p391, %p392
    %p395 = scmp.ne.s32.totalorder %s380, %s394
    %p396 = scmp.eq.s32.totalorder %s34, 0
    %p397 = por %p395, %p396
    %s399 = sadd.s32 %s398, 1
    %p402 = scmp.eq.s32.totalorder %s28, 1
    %p403 = scmp.ne.s32.totalorder %s398, %s400
    %p404 = scmp.eq.s32.totalorder %s28, 0
    %p405 = por %p403, %p404
    %p406 = scmp.ne.s32.totalorder %s398, %s400
    %p407 = scmp.eq.s32.totalorder %s33, 1
    %p408 = por %p406, %p407
    %p409 = scmp.ne.s32.totalorder %s400, %s401
    %p410 = scmp.eq.s32.totalorder %s33, 0
    %p411 = por %p409, %p410
    %p412 = scmp.ne.s32.totalorder %s400, %s401
    %p413 = scmp.eq.s32.totalorder %s34, 1
    %p414 = por %p412, %p413
    %p416 = scmp.ne.s32.totalorder %s401, %s415
    %p417 = scmp.eq.s32.totalorder %s34, 0
    %p418 = por %p416, %p417
    %s420 = sadd.s32 %s419, 1
    %p423 = scmp.eq.s32.totalorder %s28, 1
    %p424 = scmp.ne.s32.totalorder %s419, %s421
    %p425 = scmp.eq.s32.totalorder %s28, 0
    %p426 = por %p424, %p425
    %p427 = scmp.ne.s32.totalorder %s419, %s421
    %p428 = scmp.eq.s32.totalorder %s33, 1
    %p429 = por %p427, %p428
    %p430 = scmp.ne.s32.totalorder %s421, %s422
    %p431 = scmp.eq.s32.totalorder %s33, 0
    %p432 = por %p430, %p431
    %p433 = scmp.ne.s32.totalorder %s421, %s422
    %p434 = scmp.eq.s32.totalorder %s34, 1
    %p435 = por %p433, %p434
    %p437 = scmp.ne.s32.totalorder %s422, %s436
    %p438 = scmp.eq.s32.totalorder %s34, 0
    %p439 = por %p437, %p438
    %s441 = sadd.s32 %s440, 1
    %p444 = scmp.eq.s32.totalorder %s28, 1
    %p445 = scmp.ne.s32.totalorder %s440, %s442
    %p446 = scmp.eq.s32.totalorder %s28, 0
    %p447 = por %p445, %p446
    %p448 = scmp.ne.s32.totalorder %s440, %s442
    %p449 = scmp.eq.s32.totalorder %s33, 1
    %p450 = por %p448, %p449
    %p451 = scmp.ne.s32.totalorder %s442, %s443
    %p452 = scmp.eq.s32.totalorder %s33, 0
    %p453 = por %p451, %p452
    %p454 = scmp.ne.s32.totalorder %s442, %s443
    %p455 = scmp.eq.s32.totalorder %s34, 1
    %p456 = por %p454, %p455
    %p458 = scmp.ne.s32.totalorder %s443, %s457
    %p459 = scmp.eq.s32.totalorder %s34, 0
    %p460 = por %p458, %p459
    %s462 = sadd.s32 %s461, 1
    %p465 = scmp.eq.s32.totalorder %s28, 1
    %p466 = scmp.ne.s32.totalorder %s461, %s463
    %p467 = scmp.eq.s32.totalorder %s28, 0
    %p468 = por %p466, %p467
    %p469 = scmp.ne.s32.totalorder %s461, %s463
    %p470 = scmp.eq.s32.totalorder %s33, 1
    %p471 = por %p469, %p470
    %p472 = scmp.ne.s32.totalorder %s463, %s464
    %p473 = scmp.eq.s32.totalorder %s33, 0
    %p474 = por %p472, %p473
    %p475 = scmp.ne.s32.totalorder %s463, %s464
    %p476 = scmp.eq.s32.totalorder %s34, 1
    %p477 = por %p475, %p476
    %p479 = scmp.ne.s32.totalorder %s464, %s478
    %p480 = scmp.eq.s32.totalorder %s34, 0
    %p481 = por %p479, %p480
    %s483 = sadd.s32 %s482, 1
    %p486 = scmp.eq.s32.totalorder %s28, 1
    %p487 = scmp.ne.s32.totalorder %s482, %s484
    %p488 = scmp.eq.s32.totalorder %s28, 0
    %p489 = por %p487, %p488
    %p490 = scmp.ne.s32.totalorder %s482, %s484
    %p491 = scmp.eq.s32.totalorder %s33, 1
    %p492 = por %p490, %p491
    %p493 = scmp.ne.s32.totalorder %s484, %s485
    %p494 = scmp.eq.s32.totalorder %s33, 0
    %p495 = por %p493, %p494
    %p496 = scmp.ne.s32.totalorder %s484, %s485
    %p497 = scmp.eq.s32.totalorder %s34, 1
    %p498 = por %p496, %p497
    %p500 = scmp.ne.s32.totalorder %s485, %s499
    %p501 = scmp.eq.s32.totalorder %s34, 0
    %p502 = por %p500, %p501
    %s503 = ssub.s32 %s28, %s35
    %p504 = scmp.eq.s32.totalorder %s503, 0
    %s506 = sadd.s32 %s505, 1
    %s507 = scalar_select %p504, %s505, %s506
    %p510 = pneg %p504
    %p511 = scmp.eq.s32.totalorder %s28, 1
    %p512 = por %p510, %p511
    %p513 = scmp.ne.s32.totalorder %s505, %s508
    %p514 = scmp.eq.s32.totalorder %s28, 0
    %p515 = por %p513, %p514
    %p516 = scmp.ne.s32.totalorder %s505, %s508
    %p517 = scmp.eq.s32.totalorder %s33, 1
    %p518 = por %p516, %p517
    %p519 = scmp.ne.s32.totalorder %s508, %s509
    %p520 = scmp.eq.s32.totalorder %s33, 0
    %p521 = por %p519, %p520
    %p522 = scmp.ne.s32.totalorder %s508, %s509
    %p523 = scmp.eq.s32.totalorder %s34, 1
    %p524 = por %p522, %p523
    %p526 = scmp.ne.s32.totalorder %s509, %s525
    %p527 = scmp.eq.s32.totalorder %s34, 0
    %p528 = por %p526, %p527
    %p529 = scmp.le.s32.totalorder 1, %s28
    %p530 = scmp.lt.s32.totalorder %s28, 3
    %p531 = pnand %p529, %p530
    %p532 = pneg %p531
    // Predicated region
    $region9: #{synthesis_fwd.1} parent=5 // pred_check
      _
    $region10: #{synthesis_fwd.1} parent=5 // pred_check_branch
      %534 = sbr.rel (%p531) target = $region12
    $region11: #{synthesis_fwd.1} parent=5 // pred_region
      %s535 = ssub.s32 %s28, 1
      // Predicated region
      $region13: #{synthesis_fwd.1} parent=11 // pred_check
        %p536 = pneg %p75
      $region14: #{synthesis_fwd.1} parent=11 // pred_check_branch
        %538 = sbr.rel (%p536) target = $region16
      $region15: #{synthesis_fwd.1} parent=11 // pred_region
        _
      $region16: #{synthesis_fwd.1} parent=11 // pred_fallthru
        _
      // Predicated region
      $region17: #{synthesis_fwd.1} parent=11 // pred_check
        %p539 = pneg %p96
      $region18: #{synthesis_fwd.1} parent=11 // pred_check_branch
        %541 = sbr.rel (%p539) target = $region20
      $region19: #{synthesis_fwd.1} parent=11 // pred_region
        _
      $region20: #{synthesis_fwd.1} parent=11 // pred_fallthru
        _
      // Predicated region
      $region21: #{synthesis_fwd.1} parent=11 // pred_check
        %p542 = pneg %p117
      $region22: #{synthesis_fwd.1} parent=11 // pred_check_branch
        %544 = sbr.rel (%p542) target = $region24
      $region23: #{synthesis_fwd.1} parent=11 // pred_region
        _
      $region24: #{synthesis_fwd.1} parent=11 // pred_fallthru
        _
      // Predicated region
      $region25: #{synthesis_fwd.1} parent=11 // pred_check
        %p545 = pneg %p138
      $region26: #{synthesis_fwd.1} parent=11 // pred_check_branch
        %547 = sbr.rel (%p545) target = $region28
      $region27: #{synthesis_fwd.1} parent=11 // pred_region
        _
      $region28: #{synthesis_fwd.1} parent=11 // pred_fallthru
        _
      // Predicated region
      $region29: #{synthesis_fwd.1} parent=11 // pred_check
        %p548 = pneg %p159
      $region30: #{synthesis_fwd.1} parent=11 // pred_check_branch
        %550 = sbr.rel (%p548) target = $region32
      $region31: #{synthesis_fwd.1} parent=11 // pred_region
        _
      $region32: #{synthesis_fwd.1} parent=11 // pred_fallthru
        _
      // Predicated region
      $region33: #{synthesis_fwd.1} parent=11 // pred_check
        %p551 = pneg %p180
      $region34: #{synthesis_fwd.1} parent=11 // pred_check_branch
        %553 = sbr.rel (%p551) target = $region36
      $region35: #{synthesis_fwd.1} parent=11 // pred_region
        _
      $region36: #{synthesis_fwd.1} parent=11 // pred_fallthru
        _
      // Predicated region
      $region37: #{synthesis_fwd.1} parent=11 // pred_check
        %p554 = pneg %p201
      $region38: #{synthesis_fwd.1} parent=11 // pred_check_branch
        %556 = sbr.rel (%p554) target = $region40
      $region39: #{synthesis_fwd.1} parent=11 // pred_region
        _
      $region40: #{synthesis_fwd.1} parent=11 // pred_fallthru
        _
      // Predicated region
      $region41: #{synthesis_fwd.1} parent=11 // pred_check
        %p557 = pneg %p222
      $region42: #{synthesis_fwd.1} parent=11 // pred_check_branch
        %559 = sbr.rel (%p557) target = $region44
      $region43: #{synthesis_fwd.1} parent=11 // pred_region
        _
      $region44: #{synthesis_fwd.1} parent=11 // pred_fallthru
        _
      // Predicated region
      $region45: #{synthesis_fwd.1} parent=11 // pred_check
        %p560 = pneg %p243
      $region46: #{synthesis_fwd.1} parent=11 // pred_check_branch
        %562 = sbr.rel (%p560) target = $region48
      $region47: #{synthesis_fwd.1} parent=11 // pred_region
        _
      $region48: #{synthesis_fwd.1} parent=11 // pred_fallthru
        _
      // Predicated region
      $region49: #{synthesis_fwd.1} parent=11 // pred_check
        %p563 = pneg %p264
      $region50: #{synthesis_fwd.1} parent=11 // pred_check_branch
        %565 = sbr.rel (%p563) target = $region52
      $region51: #{synthesis_fwd.1} parent=11 // pred_region
        _
      $region52: #{synthesis_fwd.1} parent=11 // pred_fallthru
        _
      // Predicated region
      $region53: #{synthesis_fwd.1} parent=11 // pred_check
        %p566 = pneg %p285
      $region54: #{synthesis_fwd.1} parent=11 // pred_check_branch
        %568 = sbr.rel (%p566) target = $region56
      $region55: #{synthesis_fwd.1} parent=11 // pred_region
        _
      $region56: #{synthesis_fwd.1} parent=11 // pred_fallthru
        _
      // Predicated region
      $region57: #{synthesis_fwd.1} parent=11 // pred_check
        %p569 = pneg %p306
      $region58: #{synthesis_fwd.1} parent=11 // pred_check_branch
        %571 = sbr.rel (%p569) target = $region60
      $region59: #{synthesis_fwd.1} parent=11 // pred_region
        _
      $region60: #{synthesis_fwd.1} parent=11 // pred_fallthru
        _
      // Predicated region
      $region61: #{synthesis_fwd.1} parent=11 // pred_check
        %p572 = pneg %p327
      $region62: #{synthesis_fwd.1} parent=11 // pred_check_branch
        %574 = sbr.rel (%p572) target = $region64
      $region63: #{synthesis_fwd.1} parent=11 // pred_region
        _
      $region64: #{synthesis_fwd.1} parent=11 // pred_fallthru
        _
      // Predicated region
      $region65: #{synthesis_fwd.1} parent=11 // pred_check
        %p575 = pneg %p348
      $region66: #{synthesis_fwd.1} parent=11 // pred_check_branch
        %577 = sbr.rel (%p575) target = $region68
      $region67: #{synthesis_fwd.1} parent=11 // pred_region
        _
      $region68: #{synthesis_fwd.1} parent=11 // pred_fallthru
        _
      // Predicated region
      $region69: #{synthesis_fwd.1} parent=11 // pred_check
        %p578 = pneg %p369
      $region70: #{synthesis_fwd.1} parent=11 // pred_check_branch
        %580 = sbr.rel (%p578) target = $region72
      $region71: #{synthesis_fwd.1} parent=11 // pred_region
        _
      $region72: #{synthesis_fwd.1} parent=11 // pred_fallthru
        _
      // Predicated region
      $region73: #{synthesis_fwd.1} parent=11 // pred_check
        %p581 = pneg %p390
      $region74: #{synthesis_fwd.1} parent=11 // pred_check_branch
        %583 = sbr.rel (%p581) target = $region76
      $region75: #{synthesis_fwd.1} parent=11 // pred_region
        _
      $region76: #{synthesis_fwd.1} parent=11 // pred_fallthru
        _
      // Predicated region
      $region77: #{synthesis_fwd.1} parent=11 // pred_check
        %p584 = pneg %p411
      $region78: #{synthesis_fwd.1} parent=11 // pred_check_branch
        %586 = sbr.rel (%p584) target = $region80
      $region79: #{synthesis_fwd.1} parent=11 // pred_region
        _
      $region80: #{synthesis_fwd.1} parent=11 // pred_fallthru
        _
      // Predicated region
      $region81: #{synthesis_fwd.1} parent=11 // pred_check
        %p587 = pneg %p432
      $region82: #{synthesis_fwd.1} parent=11 // pred_check_branch
        %589 = sbr.rel (%p587) target = $region84
      $region83: #{synthesis_fwd.1} parent=11 // pred_region
        _
      $region84: #{synthesis_fwd.1} parent=11 // pred_fallthru
        _
      // Predicated region
      $region85: #{synthesis_fwd.1} parent=11 // pred_check
        %p590 = pneg %p453
      $region86: #{synthesis_fwd.1} parent=11 // pred_check_branch
        %592 = sbr.rel (%p590) target = $region88
      $region87: #{synthesis_fwd.1} parent=11 // pred_region
        _
      $region88: #{synthesis_fwd.1} parent=11 // pred_fallthru
        _
      // Predicated region
      $region89: #{synthesis_fwd.1} parent=11 // pred_check
        %p593 = pneg %p474
      $region90: #{synthesis_fwd.1} parent=11 // pred_check_branch
        %595 = sbr.rel (%p593) target = $region92
      $region91: #{synthesis_fwd.1} parent=11 // pred_region
        _
      $region92: #{synthesis_fwd.1} parent=11 // pred_fallthru
        _
      // Predicated region
      $region93: #{synthesis_fwd.1} parent=11 // pred_check
        %p596 = pneg %p495
      $region94: #{synthesis_fwd.1} parent=11 // pred_check_branch
        %598 = sbr.rel (%p596) target = $region96
      $region95: #{synthesis_fwd.1} parent=11 // pred_region
        _
      $region96: #{synthesis_fwd.1} parent=11 // pred_fallthru
        _
    $region12: #{synthesis_fwd.1} parent=5 // pred_fallthru
      _
    %p599 = scmp.lt.s32.totalorder %s28, 2
    // Predicated region
    $region97: #{synthesis_fwd.1} parent=5 // pred_check
      %p600 = pneg %p599
    $region98: #{synthesis_fwd.1} parent=5 // pred_check_branch
      %602 = sbr.rel (%p600) target = $region100
    $region99: #{synthesis_fwd.1} parent=5 // pred_region
      // Predicated region
      $region101: #{synthesis_fwd.1} parent=99 // pred_check
        %p603 = pneg %p48
      $region102: #{synthesis_fwd.1} parent=99 // pred_check_branch
        %605 = sbr.rel (%p603) target = $region104
      $region103: #{synthesis_fwd.1} parent=99 // pred_region
        %p606 = scmp.lt.s32.totalorder %s28, 1
        %s607 = scalar_select %p606, %s28, 1
        %s608 = smul.addr %s607, 15
        %s609 = smul.addr %s608, 8
        %s610 = scalar_lea.vmem %s0, %s609
      $region104: #{synthesis_fwd.1} parent=99 // pred_fallthru
        _
    $region100: #{synthesis_fwd.1} parent=5 // pred_fallthru
      _
    %p611 = scmp.le.s32.totalorder 1, %s28
    %p612 = scmp.lt.s32.totalorder %s28, 3
    %p613 = pnand %p611, %p612
    %p614 = pneg %p613
    // Predicated region
    $region105: #{synthesis_fwd.1} parent=5 // pred_check
      _
    $region106: #{synthesis_fwd.1} parent=5 // pred_check_branch
      %616 = sbr.rel (%p613) target = $region108
    $region107: #{synthesis_fwd.1} parent=5 // pred_region
      %s617 = ssub.s32 %s28, 1
      %p618 = scmp.lt.s32.totalorder %s33, 1
      %s619 = scalar_select %p618, %s33, 1
      %s620 = smul.addr %s619, 15
      %s621 = smul.addr %s620, 8
      %s622 = scalar_lea.vmem %s0, %s621
      %p623 = pneg %p54
      %p624 = pneg %p51
      %p625 = pneg %p75
      %p626 = pneg %p72
      %p627 = pneg %p96
      %p628 = pneg %p93
      %p629 = pneg %p117
      %p630 = pneg %p114
      %p631 = pneg %p138
      %p632 = pneg %p135
      %p633 = pneg %p159
      %p634 = pneg %p156
      %p635 = pneg %p180
      %p636 = pneg %p177
      %p637 = pneg %p201
      %p638 = pneg %p198
      %p639 = pneg %p222
      %p640 = pneg %p219
      %p641 = pneg %p243
      %p642 = pneg %p240
      %p643 = pneg %p264
      %p644 = pneg %p261
      %p645 = pneg %p285
      %p646 = pneg %p282
      %p647 = pneg %p306
      %p648 = pneg %p303
      %p649 = pneg %p327
      %p650 = pneg %p324
      %p651 = pneg %p348
      %p652 = pneg %p345
      %p653 = pneg %p369
      %p654 = pneg %p366
      %p655 = pneg %p390
      %p656 = pneg %p387
      %p657 = pneg %p411
      %p658 = pneg %p408
      %p659 = pneg %p432
      %p660 = pneg %p429
      %p661 = pneg %p453
      %p662 = pneg %p450
      %p663 = pneg %p474
      %p664 = pneg %p471
      %p665 = pneg %p495
      %p666 = pneg %p492
      %p667 = pneg %p521
      %p668 = pneg %p518
      %p669 = scmp.lt.s32.totalorder %s33, 1
      %s670 = scalar_select %p669, %s33, 1
      %s671 = smul.addr %s670, 2
      %s672 = smul.addr %s671, 4
      %s673 = scalar_lea.vmem %s22, %s672
      %p674 = scmp.lt.s32.totalorder %s33, 1
      %s675 = scalar_select %p674, %s33, 1
      %s676 = smul.addr %s675, 15
      %s677 = smul.addr %s676, 8
      %s678 = scalar_lea.vmem %s0, %s677
      %p679 = scmp.lt.s32.totalorder %s33, 1
      %s680 = scalar_select %p679, %s33, 1
      %s681 = smul.addr %s680, 2
      %s682 = smul.addr %s681, 4
      %s683 = scalar_lea.vmem %s22, %s682
      %v684 = vld [vmem:[%s678] sm:$0xff]
      %v685 = vld [vmem:[%s678 + $0x8] sm:$0xff]
      %v686 = vld [vmem:[%s678 + $0x10] sm:$0xff]
      %v687 = vld [vmem:[%s678 + $0x18] sm:$0xff]
      %v688 = vld [vmem:[%s678 + $0x20] sm:$0xff]
      %v689 = vld [vmem:[%s678 + $0x28] sm:$0xff]
      %v690 = vld [vmem:[%s678 + $0x30] sm:$0xff]
      %v691 = vld [vmem:[%s678 + $0x38] sm:$0xff]
      %v692 = vld [vmem:[%s678 + $0x40] sm:$0xff]
      %v693 = vld [vmem:[%s678 + $0x48] sm:$0xff]
      %v694 = vld [vmem:[%s678 + $0x50] sm:$0xff]
      %v695 = vld [vmem:[%s678 + $0x58] sm:$0xff]
      %v696 = vld [vmem:[%s678 + $0x60] sm:$0xff]
      %v697 = vld [vmem:[%s678 + $0x68] sm:$0xff]
      %v698 = vld [vmem:[%s678 + $0x70] sm:$0xff]
      %v699 = vld [vmem:[%s1] sm:$0xff]
      %v700 = vld [vmem:[%s1 + $0x8] sm:$0xff]
      %v701 = vld [vmem:[%s2] sm:$0xff]
      %v702 = vld [vmem:[%s2 + $0x8] sm:$0xff]
      %v703 = vld [vmem:[%s2 + $0x10] sm:$0xff]
      %v704 = vld [vmem:[%s2 + $0x18] sm:$0xff]
      %v705 = vld [vmem:[%s3] sm:$0xff]
      %v706 = vld [vmem:[%s3 + $0x8] sm:$0xff]
      %708 = vset.pattern.permute.xlu0 0
      %709 = vperm.xlu0 %708, %v684
      %v710 = vpop.permute.xlu0 %709
      %713 = vset.pattern.permute.xlu0 0
      %714 = vperm.xlu0 %713, %v685
      %v715 = vpop.permute.xlu0 %714
      %v717 = vmul.f32 %v699, %v710
      %v718 = vmul.f32 %v700, %v715
      %721 = vrot.lane.b32.xlu0 %v717, 5
      %v722 = vpop.permute.xlu0 %721
      %723 = vrot.lane.b32.xlu0 %v718, 5
      %v724 = vpop.permute.xlu0 %723
      %vm727 = vcmask 39936
      %v728 = vsel %vm727, 0.0, %v722
      %v729 = vsel %vm727, 0.0, %v724
      %vm730 = vcmask 171008
      %v731 = vsel %vm730, %v728, 0.0
      %v732 = vsel %vm730, %v729, 0.0
      %v733 = vlaneseq
      %v734 = vand.u32 %v733, 127
      %v735 = vand.u32 %v734, 3
      %vm736 = vcmp.gt.s32.totalorder %v735, 0
      %v737 = vsel %vm736, 1, 0
      %vm738 = vcmp.eq.s32.totalorder %v737, 1
      %v739 = vsel %vm738, %v731, 0.0
      %v740 = vsel %vm738, %v732, 0.0
      %vm741 = vcmp.lt.s32.totalorder %v735, 3
      %v742 = vsel %vm741, 1, 0
      %vm743 = vcmp.eq.s32.totalorder %v742, 1
      %746 = vrot.lane.b32.xlu0 %v731, 126
      %v747 = vpop.permute.xlu0 %746
      %748 = vrot.lane.b32.xlu0 %v732, 126
      %v749 = vpop.permute.xlu0 %748
      %v752 = vsel %vm743, %v747, 0.0
      %v753 = vsel %vm743, %v749, 0.0
      %754 = vrot.lane.b32.xlu0 %v731, 124
      %v755 = vpop.permute.xlu0 %754
      %756 = vrot.lane.b32.xlu0 %v732, 124
      %v757 = vpop.permute.xlu0 %756
      %v760 = vsel %vm738, %v755, 0.0
      %v761 = vsel %vm738, %v757, 0.0
      %762 = vrot.lane.b32.xlu0 %v731, 122
      %v763 = vpop.permute.xlu0 %762
      %764 = vrot.lane.b32.xlu0 %v732, 122
      %v765 = vpop.permute.xlu0 %764
      %v768 = vsel %vm743, %v763, 0.0
      %v769 = vsel %vm743, %v765, 0.0
      %770 = vrot.lane.b32.xlu0 %v731, 120
      %v771 = vpop.permute.xlu0 %770
      %772 = vrot.lane.b32.xlu0 %v732, 120
      %v773 = vpop.permute.xlu0 %772
      %v776 = vsel %vm738, %v771, 0.0
      %v777 = vsel %vm738, %v773, 0.0
      %778 = vrot.lane.b32.xlu0 %v731, 118
      %v779 = vpop.permute.xlu0 %778
      %780 = vrot.lane.b32.xlu0 %v732, 118
      %v781 = vpop.permute.xlu0 %780
      %v784 = vsel %vm743, %v779, 0.0
      %v785 = vsel %vm743, %v781, 0.0
      %786 = vrot.lane.b32.xlu0 %v731, 127
      %v787 = vpop.permute.xlu0 %786
      %788 = vrot.lane.b32.xlu0 %v732, 127
      %v789 = vpop.permute.xlu0 %788
      %792 = vrot.lane.b32.xlu0 %v731, 123
      %v793 = vpop.permute.xlu0 %792
      %794 = vrot.lane.b32.xlu0 %v732, 123
      %v795 = vpop.permute.xlu0 %794
      %798 = vrot.lane.b32.xlu0 %v731, 119
      %v799 = vpop.permute.xlu0 %798
      %800 = vrot.lane.b32.xlu0 %v732, 119
      %v801 = vpop.permute.xlu0 %800
      %vm804 = vcmask 130048
      %v806 = vsel %vm804, %v702, 0
      %v809 = vsel %vm804, %v704, 0
      %811 = vmatprep.subr.mxu0 0.0
      %812 = vmatpush1.msra.mxu0 %v739
      %813 = vmatprep.subr.mxu0 0.0
      %814 = vmatpush1.msra.mxu0 %v740
      %815 = vmatprep.subr.mxu0 0.0
      %816 = vmatpush1.msra.mxu0 %v787
      %817 = vmatprep.subr.mxu0 0.0
      %818 = vmatpush1.msra.mxu0 %v789
      %819 = vmatprep.subr.mxu0 0.0
      %820 = vmatpush1.msra.mxu0 %v752
      %821 = vmatprep.subr.mxu0 0.0
      %822 = vmatpush1.msra.mxu0 %v753
      %823 = vmatprep.subr.mxu0 0.0
      %824 = vmatpush1.msra.mxu0 %v760
      %825 = vmatprep.subr.mxu0 0.0
      %826 = vmatpush1.msra.mxu0 %v761
      %827 = vmatprep.subr.mxu0 0.0
      %828 = vmatpush1.msra.mxu0 %v793
      %829 = vmatprep.subr.mxu0 0.0
      %830 = vmatpush1.msra.mxu0 %v795
      %831 = vmatprep.subr.mxu0 0.0
      %832 = vmatpush1.msra.mxu0 %v768
      %833 = vmatprep.subr.mxu0 0.0
      %834 = vmatpush1.msra.mxu0 %v769
      %835 = vmatprep.subr.mxu0 0.0
      %836 = vmatpush1.msra.mxu0 %v776
      %837 = vmatprep.subr.mxu0 0.0
      %838 = vmatpush1.msra.mxu0 %v777
      %839 = vmatprep.subr.mxu0 0.0
      %840 = vmatpush1.msra.mxu0 %v799
      %841 = vmatprep.subr.mxu0 0.0
      %842 = vmatpush1.msra.mxu0 %v801
      %843 = vmatprep.subr.mxu0 0.0
      %844 = vmatpush1.msra.mxu0 %v784
      %845 = vmatprep.subr.mxu0 0.0
      %846 = vmatpush1.msra.mxu0 %v785
      %847 = vmatprep.subr.mxu0 0.0
      %848 = vmatpush1.msra.mxu0 0.0
      %849 = vmatprep.subr.mxu0 0.0
      %850 = vmatpush1.msra.mxu0 0.0
      %851 = vmatprep.subr.mxu0 0.0
      %852 = vmatpush1.msra.mxu0 0.0
      %853 = vmatprep.subr.mxu0 0.0
      %854 = vmatpush1.msra.mxu0 0.0
      %855 = vmatprep.subr.mxu0 0.0
      %856 = vmatpush1.msra.mxu0 0.0
      %857 = vmatprep.subr.mxu0 0.0
      %858 = vmatpush1.msra.mxu0 0.0
      %859 = vmatprep.subr.mxu0 0.0
      %860 = vmatpush1.msra.mxu0 0.0
      %861 = vmatprep.subr.mxu0 0.0
      %862 = vmatpush1.msra.mxu0 0.0
      %863 = vmatprep.subr.mxu0 0.0
      %864 = vmatpush1.msra.mxu0 0.0
      %865 = vmatprep.subr.mxu0 0.0
      %866 = vmatpush1.msra.mxu0 0.0
      %867 = vmatprep.subr.mxu0 0.0
      %868 = vmatpush1.msra.mxu0 0.0
      %869 = vmatprep.subr.mxu0 0.0
      %870 = vmatpush1.msra.mxu0 0.0
      %871 = vmatprep.subr.mxu0 0.0
      %872 = vmatpush1.msra.mxu0 0.0
      %873 = vmatprep.subr.mxu0 0.0
      %874 = vmatpush1.msra.mxu0 0.0
      %875 = vmatprep.mubr.f32.mxu0 %v806
      %876 = vmatmul.mubr.f32.gmra.mrb[0].mxu0 %v701
      %v877 = vpop.f32.mrb[0].mxu0
      %v878 = vadd.f32 0.0, %v877
      %v879 = vpop.f32.mrb[0].mxu0
      %880 = vmatprep.mubr.f32.mxu0 %v809
      %881 = vmatmul.mubr.f32.gmra.mrb[0].mxu0 %v703
      %v882 = vpop.f32.mrb[0].mxu0
      %v883 = vadd.f32 0.0, %v882
      %v884 = vpop.f32.mrb[0].mxu0
      %885 = vdwg.mxu0
      %887 = vset.pattern.permute.xlu0 0
      %888 = vperm.xlu0 %887, %v686
      %v889 = vpop.permute.xlu0 %888
      %892 = vset.pattern.permute.xlu0 0
      %893 = vperm.xlu0 %892, %v687
      %v894 = vpop.permute.xlu0 %893
      %v896 = vmul.f32 %v878, %v889
      %v897 = vmul.f32 %v883, %v894
      %v898 = vadd.f32 %v896, %v705
      %v899 = vadd.f32 %v897, %v706
      %v900 = vmul.f32 %v898, 0.2
      %v901 = vmul.f32 %v899, 0.2
      %v902 = vmax.f32 %v898, %v900
      %v903 = vmax.f32 %v899, %v901
      %v904 = vmul.f32 %v902, 1.4142135
      %v905 = vmul.f32 %v903, 1.4142135
      %v906 = vmax.f32 %v904, -256.0
      %v907 = vmax.f32 %v905, -256.0
      %v908 = vmin.f32 %v906, 256.0
      %v909 = vmin.f32 %v907, 256.0
      %v910 = vld [vmem:[%s4] sm:$0x7]
      %v911 = vld [vmem:[%s5] sm:$0x7]
      %913 = vset.pattern.permute.xlu0 0
      %914 = vperm.xlu0 %913, %v688
      %v915 = vpop.permute.xlu0 %914
      %918 = vset.pattern.permute.xlu0 0
      %919 = vperm.xlu0 %918, %v689
      %v920 = vpop.permute.xlu0 %919
      %v922 = vmul.f32 %v908, %v915
      %v923 = vmul.f32 %v909, %v920
      %925 = vset.pattern.permute.xlu0 0
      %926 = vperm.xlu0 %925, %v911
      %v927 = vpop.permute.xlu0 %926
      %v930 = vsel %vm804, %v910, 0
      %932 = vmatprep.subr.mxu0 0.0
      %933 = vmatpush1.msra.mxu0 %v922
      %934 = vmatprep.subr.mxu0 0.0
      %935 = vmatpush1.msra.mxu0 %v923
      %936 = vmatprep.subr.mxu0 0.0
      %937 = vmatpush1.msra.mxu0 0.0
      %938 = vmatprep.subr.mxu0 0.0
      %939 = vmatpush1.msra.mxu0 0.0
      %940 = vmatprep.subr.mxu0 0.0
      %941 = vmatpush1.msra.mxu0 0.0
      %942 = vmatprep.subr.mxu0 0.0
      %943 = vmatpush1.msra.mxu0 0.0
      %944 = vmatprep.subr.mxu0 0.0
      %945 = vmatpush1.msra.mxu0 0.0
      %946 = vmatprep.subr.mxu0 0.0
      %947 = vmatpush1.msra.mxu0 0.0
      %948 = vmatprep.subr.mxu0 0.0
      %949 = vmatpush1.msra.mxu0 0.0
      %950 = vmatprep.subr.mxu0 0.0
      %951 = vmatpush1.msra.mxu0 0.0
      %952 = vmatprep.subr.mxu0 0.0
      %953 = vmatpush1.msra.mxu0 0.0
      %954 = vmatprep.subr.mxu0 0.0
      %955 = vmatpush1.msra.mxu0 0.0
      %956 = vmatprep.subr.mxu0 0.0
      %957 = vmatpush1.msra.mxu0 0.0
      %958 = vmatprep.subr.mxu0 0.0
      %959 = vmatpush1.msra.mxu0 0.0
      %960 = vmatprep.subr.mxu0 0.0
      %961 = vmatpush1.msra.mxu0 0.0
      %962 = vmatprep.subr.mxu0 0.0
      %963 = vmatpush1.msra.mxu0 0.0
      %964 = vmatprep.subr.mxu0 0.0
      %965 = vmatpush1.msra.mxu0 0.0
      %966 = vmatprep.subr.mxu0 0.0
      %967 = vmatpush1.msra.mxu0 0.0
      %968 = vmatprep.subr.mxu0 0.0
      %969 = vmatpush1.msra.mxu0 0.0
      %970 = vmatprep.subr.mxu0 0.0
      %971 = vmatpush1.msra.mxu0 0.0
      %972 = vmatprep.subr.mxu0 0.0
      %973 = vmatpush1.msra.mxu0 0.0
      %974 = vmatprep.subr.mxu0 0.0
      %975 = vmatpush1.msra.mxu0 0.0
      %976 = vmatprep.subr.mxu0 0.0
      %977 = vmatpush1.msra.mxu0 0.0
      %978 = vmatprep.subr.mxu0 0.0
      %979 = vmatpush1.msra.mxu0 0.0
      %980 = vmatprep.subr.mxu0 0.0
      %981 = vmatpush1.msra.mxu0 0.0
      %982 = vmatprep.subr.mxu0 0.0
      %983 = vmatpush1.msra.mxu0 0.0
      %984 = vmatprep.subr.mxu0 0.0
      %985 = vmatpush1.msra.mxu0 0.0
      %986 = vmatprep.subr.mxu0 0.0
      %987 = vmatpush1.msra.mxu0 0.0
      %988 = vmatprep.subr.mxu0 0.0
      %989 = vmatpush1.msra.mxu0 0.0
      %990 = vmatprep.subr.mxu0 0.0
      %991 = vmatpush1.msra.mxu0 0.0
      %992 = vmatprep.subr.mxu0 0.0
      %993 = vmatpush1.msra.mxu0 0.0
      %994 = vmatprep.subr.mxu0 0.0
      %995 = vmatpush1.msra.mxu0 0.0
      %996 = vmatprep.mubr.f32.mxu0 0.0
      %997 = vmatmul.mubr.f32.gmra.mrb[0].mxu0 %v930
      %v998 = vpop.f32.mrb[0].mxu0
      %v999 = vadd.f32 %v927, %v998
      %v1000 = vpop.f32.mrb[0].mxu0
      %1001 = vdwg.mxu0
      %v1002 = vld [vmem:[%s6] sm:$0xff]
      %v1003 = vld [vmem:[%s6 + $0x8] sm:$0xff]
      %v1004 = vld [vmem:[%s6 + $0x10] sm:$0xff]
      %v1005 = vld [vmem:[%s6 + $0x18] sm:$0xff]
      %v1006 = vld [vmem:[%s6 + $0x20] sm:$0xff]
      %v1007 = vld [vmem:[%s6 + $0x28] sm:$0xff]
      %v1008 = vld [vmem:[%s6 + $0x30] sm:$0xff]
      %v1009 = vld [vmem:[%s6 + $0x38] sm:$0xff]
      %v1010 = vld [vmem:[%s7] sm:$0xff]
      %v1011 = vld [vmem:[%s9] sm:$0xff]
      %v1012 = vld [vmem:[%s9 + $0x8] sm:$0xff]
      %1014 = vset.pattern.permute.xlu0 0
      %1015 = vperm.xlu0 %1014, %v690
      %v1016 = vpop.permute.xlu0 %1015
      %1019 = vset.pattern.permute.xlu0 0
      %1020 = vperm.xlu0 %1019, %v691
      %v1021 = vpop.permute.xlu0 %1020
      %v1023 = vmul.f32 %v908, %v1016
      %v1024 = vmul.f32 %v909, %v1021
      %1027 = vrot.lane.b32.xlu0 %v1023, 5
      %v1028 = vpop.permute.xlu0 %1027
      %1029 = vrot.lane.b32.xlu0 %v1024, 5
      %v1030 = vpop.permute.xlu0 %1029
      %v1033 = vsel %vm727, 0.0, %v1028
      %v1034 = vsel %vm727, 0.0, %v1030
      %v1035 = vsel %vm730, %v1033, 0.0
      %v1036 = vsel %vm730, %v1034, 0.0
      %v1037 = vsel %vm738, %v1035, 0.0
      %v1038 = vsel %vm738, %v1036, 0.0
      %1041 = vrot.lane.b32.xlu0 %v1035, 126
      %v1042 = vpop.permute.xlu0 %1041
      %1043 = vrot.lane.b32.xlu0 %v1036, 126
      %v1044 = vpop.permute.xlu0 %1043
      %v1047 = vsel %vm743, %v1042, 0.0
      %v1048 = vsel %vm743, %v1044, 0.0
      %1049 = vrot.lane.b32.xlu0 %v1035, 124
      %v1050 = vpop.permute.xlu0 %1049
      %1051 = vrot.lane.b32.xlu0 %v1036, 124
      %v1052 = vpop.permute.xlu0 %1051
      %v1055 = vsel %vm738, %v1050, 0.0
      %v1056 = vsel %vm738, %v1052, 0.0
      %1057 = vrot.lane.b32.xlu0 %v1035, 122
      %v1058 = vpop.permute.xlu0 %1057
      %1059 = vrot.lane.b32.xlu0 %v1036, 122
      %v1060 = vpop.permute.xlu0 %1059
      %v1063 = vsel %vm743, %v1058, 0.0
      %v1064 = vsel %vm743, %v1060, 0.0
      %1065 = vrot.lane.b32.xlu0 %v1035, 120
      %v1066 = vpop.permute.xlu0 %1065
      %1067 = vrot.lane.b32.xlu0 %v1036, 120
      %v1068 = vpop.permute.xlu0 %1067
      %v1071 = vsel %vm738, %v1066, 0.0
      %v1072 = vsel %vm738, %v1068, 0.0
      %1073 = vrot.lane.b32.xlu0 %v1035, 118
      %v1074 = vpop.permute.xlu0 %1073
      %1075 = vrot.lane.b32.xlu0 %v1036, 118
      %v1076 = vpop.permute.xlu0 %1075
      %v1079 = vsel %vm743, %v1074, 0.0
      %v1080 = vsel %vm743, %v1076, 0.0
      %1081 = vrot.lane.b32.xlu0 %v1035, 127
      %v1082 = vpop.permute.xlu0 %1081
      %1083 = vrot.lane.b32.xlu0 %v1036, 127
      %v1084 = vpop.permute.xlu0 %1083
      %1087 = vrot.lane.b32.xlu0 %v1035, 123
      %v1088 = vpop.permute.xlu0 %1087
      %1089 = vrot.lane.b32.xlu0 %v1036, 123
      %v1090 = vpop.permute.xlu0 %1089
      %1093 = vrot.lane.b32.xlu0 %v1035, 119
      %v1094 = vpop.permute.xlu0 %1093
      %1095 = vrot.lane.b32.xlu0 %v1036, 119
      %v1096 = vpop.permute.xlu0 %1095
      %v1100 = vsel %vm804, %v1003, 0
      %v1103 = vsel %vm804, %v1005, 0
      %v1106 = vsel %vm804, %v1007, 0
      %v1109 = vsel %vm804, %v1009, 0
      %1111 = vmatprep.subr.mxu0 0.0
      %1112 = vmatpush1.msra.mxu0 %v1037
      %1113 = vmatprep.subr.mxu0 0.0
      %1114 = vmatpush1.msra.mxu0 %v1038
      %1115 = vmatprep.subr.mxu0 0.0
      %1116 = vmatpush1.msra.mxu0 %v1082
      %1117 = vmatprep.subr.mxu0 0.0
      %1118 = vmatpush1.msra.mxu0 %v1084
      %1119 = vmatprep.subr.mxu0 0.0
      %1120 = vmatpush1.msra.mxu0 %v1047
      %1121 = vmatprep.subr.mxu0 0.0
      %1122 = vmatpush1.msra.mxu0 %v1048
      %1123 = vmatprep.subr.mxu0 0.0
      %1124 = vmatpush1.msra.mxu0 %v1055
      %1125 = vmatprep.subr.mxu0 0.0
      %1126 = vmatpush1.msra.mxu0 %v1056
      %1127 = vmatprep.subr.mxu0 0.0
      %1128 = vmatpush1.msra.mxu0 %v1088
      %1129 = vmatprep.subr.mxu0 0.0
      %1130 = vmatpush1.msra.mxu0 %v1090
      %1131 = vmatprep.subr.mxu0 0.0
      %1132 = vmatpush1.msra.mxu0 %v1063
      %1133 = vmatprep.subr.mxu0 0.0
      %1134 = vmatpush1.msra.mxu0 %v1064
      %1135 = vmatprep.subr.mxu0 0.0
      %1136 = vmatpush1.msra.mxu0 %v1071
      %1137 = vmatprep.subr.mxu0 0.0
      %1138 = vmatpush1.msra.mxu0 %v1072
      %1139 = vmatprep.subr.mxu0 0.0
      %1140 = vmatpush1.msra.mxu0 %v1094
      %1141 = vmatprep.subr.mxu0 0.0
      %1142 = vmatpush1.msra.mxu0 %v1096
      %1143 = vmatprep.subr.mxu0 0.0
      %1144 = vmatpush1.msra.mxu0 %v1079
      %1145 = vmatprep.subr.mxu0 0.0
      %1146 = vmatpush1.msra.mxu0 %v1080
      %1147 = vmatprep.subr.mxu0 0.0
      %1148 = vmatpush1.msra.mxu0 0.0
      %1149 = vmatprep.subr.mxu0 0.0
      %1150 = vmatpush1.msra.mxu0 0.0
      %1151 = vmatprep.subr.mxu0 0.0
      %1152 = vmatpush1.msra.mxu0 0.0
      %1153 = vmatprep.subr.mxu0 0.0
      %1154 = vmatpush1.msra.mxu0 0.0
      %1155 = vmatprep.subr.mxu0 0.0
      %1156 = vmatpush1.msra.mxu0 0.0
      %1157 = vmatprep.subr.mxu0 0.0
      %1158 = vmatpush1.msra.mxu0 0.0
      %1159 = vmatprep.subr.mxu0 0.0
      %1160 = vmatpush1.msra.mxu0 0.0
      %1161 = vmatprep.subr.mxu0 0.0
      %1162 = vmatpush1.msra.mxu0 0.0
      %1163 = vmatprep.subr.mxu0 0.0
      %1164 = vmatpush1.msra.mxu0 0.0
      %1165 = vmatprep.subr.mxu0 0.0
      %1166 = vmatpush1.msra.mxu0 0.0
      %1167 = vmatprep.subr.mxu0 0.0
      %1168 = vmatpush1.msra.mxu0 0.0
      %1169 = vmatprep.subr.mxu0 0.0
      %1170 = vmatpush1.msra.mxu0 0.0
      %1171 = vmatprep.subr.mxu0 0.0
      %1172 = vmatpush1.msra.mxu0 0.0
      %1173 = vmatprep.subr.mxu0 0.0
      %1174 = vmatpush1.msra.mxu0 0.0
      %1175 = vmatprep.mubr.f32.mxu0 %v1100
      %1176 = vmatmul.mubr.f32.gmra.mrb[0].mxu0 %v1002
      %v1177 = vpop.f32.mrb[0].mxu0
      %v1178 = vadd.f32 0.0, %v1177
      %v1179 = vpop.f32.mrb[0].mxu0
      %1180 = vmatprep.mubr.f32.mxu0 %v1103
      %1181 = vmatmul.mubr.f32.gmra.mrb[0].mxu0 %v1004
      %v1182 = vpop.f32.mrb[0].mxu0
      %v1183 = vadd.f32 0.0, %v1182
      %v1184 = vpop.f32.mrb[0].mxu0
      %1185 = vmatprep.mubr.f32.mxu0 %v1106
      %1186 = vmatmul.mubr.f32.gmra.mrb[0].mxu0 %v1006
      %v1187 = vpop.f32.mrb[0].mxu0
      %v1188 = vadd.f32 0.0, %v1187
      %v1189 = vpop.f32.mrb[0].mxu0
      %1190 = vmatprep.mubr.f32.mxu0 %v1109
      %1191 = vmatmul.mubr.f32.gmra.mrb[0].mxu0 %v1008
      %v1192 = vpop.f32.mrb[0].mxu0
      %v1193 = vadd.f32 0.0, %v1192
      %v1194 = vpop.f32.mrb[0].mxu0
      %1195 = vdwg.mxu0
      %v1196 = vld [vmem:[%s8] sm:$0xff]
      %v1197 = vld [vmem:[%s8 + $0x8] sm:$0xff]
      %s1198 = scalar_lea.vmem %s8, 16
      %v1199 = vld [vmem:[%s1198] sm:$0xff]
      %v1200 = vld [vmem:[%s1198 + $0x8] sm:$0xff]
      %v1202 = vsel %vm804, %v1183, 0
      %1204 = vmatprep.subr.mxu0 0.0
      %1205 = vmatpush1.msra.mxu0 %v1199
      %1206 = vmatprep.subr.mxu0 0.0
      %1207 = vmatpush1.msra.mxu0 %v1200
      %1208 = vmatprep.subr.mxu0 0.0
      %1209 = vmatpush1.msra.mxu0 0.0
      %1210 = vmatprep.subr.mxu0 0.0
      %1211 = vmatpush1.msra.mxu0 0.0
      %1212 = vmatprep.subr.mxu0 0.0
      %1213 = vmatpush1.msra.mxu0 0.0
      %1214 = vmatprep.subr.mxu0 0.0
      %1215 = vmatpush1.msra.mxu0 0.0
      %1216 = vmatprep.subr.mxu0 0.0
      %1217 = vmatpush1.msra.mxu0 0.0
      %1218 = vmatprep.subr.mxu0 0.0
      %1219 = vmatpush1.msra.mxu0 0.0
      %1220 = vmatprep.subr.mxu0 0.0
      %1221 = vmatpush1.msra.mxu0 0.0
      %1222 = vmatprep.subr.mxu0 0.0
      %1223 = vmatpush1.msra.mxu0 0.0
      %1224 = vmatprep.subr.mxu0 0.0
      %1225 = vmatpush1.msra.mxu0 0.0
      %1226 = vmatprep.subr.mxu0 0.0
      %1227 = vmatpush1.msra.mxu0 0.0
      %1228 = vmatprep.subr.mxu0 0.0
      %1229 = vmatpush1.msra.mxu0 0.0
      %1230 = vmatprep.subr.mxu0 0.0
      %1231 = vmatpush1.msra.mxu0 0.0
      %1232 = vmatprep.subr.mxu0 0.0
      %1233 = vmatpush1.msra.mxu0 0.0
      %1234 = vmatprep.subr.mxu0 0.0
      %1235 = vmatpush1.msra.mxu0 0.0
      %1236 = vmatprep.subr.mxu0 0.0
      %1237 = vmatpush1.msra.mxu0 0.0
      %1238 = vmatprep.subr.mxu0 0.0
      %1239 = vmatpush1.msra.mxu0 0.0
      %1240 = vmatprep.subr.mxu0 0.0
      %1241 = vmatpush1.msra.mxu0 0.0
      %1242 = vmatprep.subr.mxu0 0.0
      %1243 = vmatpush1.msra.mxu0 0.0
      %1244 = vmatprep.subr.mxu0 0.0
      %1245 = vmatpush1.msra.mxu0 0.0
      %1246 = vmatprep.subr.mxu0 0.0
      %1247 = vmatpush1.msra.mxu0 0.0
      %1248 = vmatprep.subr.mxu0 0.0
      %1249 = vmatpush1.msra.mxu0 0.0
      %1250 = vmatprep.subr.mxu0 0.0
      %1251 = vmatpush1.msra.mxu0 0.0
      %1252 = vmatprep.subr.mxu0 0.0
      %1253 = vmatpush1.msra.mxu0 0.0
      %1254 = vmatprep.subr.mxu0 0.0
      %1255 = vmatpush1.msra.mxu0 0.0
      %1256 = vmatprep.subr.mxu0 0.0
      %1257 = vmatpush1.msra.mxu0 0.0
      %1258 = vmatprep.subr.mxu0 0.0
      %1259 = vmatpush1.msra.mxu0 0.0
      %1260 = vmatprep.subr.mxu0 0.0
      %1261 = vmatpush1.msra.mxu0 0.0
      %1262 = vmatprep.subr.mxu0 0.0
      %1263 = vmatpush1.msra.mxu0 0.0
      %1264 = vmatprep.subr.mxu0 0.0
      %1265 = vmatpush1.msra.mxu0 0.0
      %1266 = vmatprep.subr.mxu0 0.0
      %1267 = vmatpush1.msra.mxu0 0.0
      %1268 = vmatprep.mubr.f32.mxu0 0.0
      %1269 = vmatmul.mubr.f32.gmra.mrb[0].mxu0 %v1202
      %v1270 = vpop.f32.mrb[0].mxu0
      %v1271 = vadd.f32 0.0, %v1270
      %v1272 = vpop.f32.mrb[0].mxu0
      %1273 = vdwg.mxu0
      %v1275 = vsel %vm804, %v1178, 0
      %1277 = vmatprep.subr.mxu0 0.0
      %1278 = vmatpush1.msra.mxu0 %v1196
      %1279 = vmatprep.subr.mxu0 0.0
      %1280 = vmatpush1.msra.mxu0 %v1197
      %1281 = vmatprep.subr.mxu0 0.0
      %1282 = vmatpush1.msra.mxu0 0.0
      %1283 = vmatprep.subr.mxu0 0.0
      %1284 = vmatpush1.msra.mxu0 0.0
      %1285 = vmatprep.subr.mxu0 0.0
      %1286 = vmatpush1.msra.mxu0 0.0
      %1287 = vmatprep.subr.mxu0 0.0
      %1288 = vmatpush1.msra.mxu0 0.0
      %1289 = vmatprep.subr.mxu0 0.0
      %1290 = vmatpush1.msra.mxu0 0.0
      %1291 = vmatprep.subr.mxu0 0.0
      %1292 = vmatpush1.msra.mxu0 0.0
      %1293 = vmatprep.subr.mxu0 0.0
      %1294 = vmatpush1.msra.mxu0 0.0
      %1295 = vmatprep.subr.mxu0 0.0
      %1296 = vmatpush1.msra.mxu0 0.0
      %1297 = vmatprep.subr.mxu0 0.0
      %1298 = vmatpush1.msra.mxu0 0.0
      %1299 = vmatprep.subr.mxu0 0.0
      %1300 = vmatpush1.msra.mxu0 0.0
      %1301 = vmatprep.subr.mxu0 0.0
      %1302 = vmatpush1.msra.mxu0 0.0
      %1303 = vmatprep.subr.mxu0 0.0
      %1304 = vmatpush1.msra.mxu0 0.0
      %1305 = vmatprep.subr.mxu0 0.0
      %1306 = vmatpush1.msra.mxu0 0.0
      %1307 = vmatprep.subr.mxu0 0.0
      %1308 = vmatpush1.msra.mxu0 0.0
      %1309 = vmatprep.subr.mxu0 0.0
      %1310 = vmatpush1.msra.mxu0 0.0
      %1311 = vmatprep.subr.mxu0 0.0
      %1312 = vmatpush1.msra.mxu0 0.0
      %1313 = vmatprep.subr.mxu0 0.0
      %1314 = vmatpush1.msra.mxu0 0.0
      %1315 = vmatprep.subr.mxu0 0.0
      %1316 = vmatpush1.msra.mxu0 0.0
      %1317 = vmatprep.subr.mxu0 0.0
      %1318 = vmatpush1.msra.mxu0 0.0
      %1319 = vmatprep.subr.mxu0 0.0
      %1320 = vmatpush1.msra.mxu0 0.0
      %1321 = vmatprep.subr.mxu0 0.0
      %1322 = vmatpush1.msra.mxu0 0.0
      %1323 = vmatprep.subr.mxu0 0.0
      %1324 = vmatpush1.msra.mxu0 0.0
      %1325 = vmatprep.subr.mxu0 0.0
      %1326 = vmatpush1.msra.mxu0 0.0
      %1327 = vmatprep.subr.mxu0 0.0
      %1328 = vmatpush1.msra.mxu0 0.0
      %1329 = vmatprep.subr.mxu0 0.0
      %1330 = vmatpush1.msra.mxu0 0.0
      %1331 = vmatprep.subr.mxu0 0.0
      %1332 = vmatpush1.msra.mxu0 0.0
      %1333 = vmatprep.subr.mxu0 0.0
      %1334 = vmatpush1.msra.mxu0 0.0
      %1335 = vmatprep.subr.mxu0 0.0
      %1336 = vmatpush1.msra.mxu0 0.0
      %1337 = vmatprep.subr.mxu0 0.0
      %1338 = vmatpush1.msra.mxu0 0.0
      %1339 = vmatprep.subr.mxu0 0.0
      %1340 = vmatpush1.msra.mxu0 0.0
      %1341 = vmatprep.mubr.f32.mxu0 0.0
      %1342 = vmatmul.mubr.f32.gmra.mrb[0].mxu0 %v1275
      %v1343 = vpop.f32.mrb[0].mxu0
      %v1344 = vadd.f32 %v1271, %v1343
      %v1345 = vpop.f32.mrb[0].mxu0
      %1346 = vdwg.mxu0
      %s1347 = scalar_lea.vmem %s8, 32
      %v1348 = vld [vmem:[%s1347] sm:$0xff]
      %v1349 = vld [vmem:[%s1347 + $0x8] sm:$0xff]
      %v1351 = vsel %vm804, %v1188, 0
      %1353 = vmatprep.subr.mxu0 0.0
      %1354 = vmatpush1.msra.mxu0 %v1348
      %1355 = vmatprep.subr.mxu0 0.0
      %1356 = vmatpush1.msra.mxu0 %v1349
      %1357 = vmatprep.subr.mxu0 0.0
      %1358 = vmatpush1.msra.mxu0 0.0
      %1359 = vmatprep.subr.mxu0 0.0
      %1360 = vmatpush1.msra.mxu0 0.0
      %1361 = vmatprep.subr.mxu0 0.0
      %1362 = vmatpush1.msra.mxu0 0.0
      %1363 = vmatprep.subr.mxu0 0.0
      %1364 = vmatpush1.msra.mxu0 0.0
      %1365 = vmatprep.subr.mxu0 0.0
      %1366 = vmatpush1.msra.mxu0 0.0
      %1367 = vmatprep.subr.mxu0 0.0
      %1368 = vmatpush1.msra.mxu0 0.0
      %1369 = vmatprep.subr.mxu0 0.0
      %1370 = vmatpush1.msra.mxu0 0.0
      %1371 = vmatprep.subr.mxu0 0.0
      %1372 = vmatpush1.msra.mxu0 0.0
      %1373 = vmatprep.subr.mxu0 0.0
      %1374 = vmatpush1.msra.mxu0 0.0
      %1375 = vmatprep.subr.mxu0 0.0
      %1376 = vmatpush1.msra.mxu0 0.0
      %1377 = vmatprep.subr.mxu0 0.0
      %1378 = vmatpush1.msra.mxu0 0.0
      %1379 = vmatprep.subr.mxu0 0.0
      %1380 = vmatpush1.msra.mxu0 0.0
      %1381 = vmatprep.subr.mxu0 0.0
      %1382 = vmatpush1.msra.mxu0 0.0
      %1383 = vmatprep.subr.mxu0 0.0
      %1384 = vmatpush1.msra.mxu0 0.0
      %1385 = vmatprep.subr.mxu0 0.0
      %1386 = vmatpush1.msra.mxu0 0.0
      %1387 = vmatprep.subr.mxu0 0.0
      %1388 = vmatpush1.msra.mxu0 0.0
      %1389 = vmatprep.subr.mxu0 0.0
      %1390 = vmatpush1.msra.mxu0 0.0
      %1391 = vmatprep.subr.mxu0 0.0
      %1392 = vmatpush1.msra.mxu0 0.0
      %1393 = vmatprep.subr.mxu0 0.0
      %1394 = vmatpush1.msra.mxu0 0.0
      %1395 = vmatprep.subr.mxu0 0.0
      %1396 = vmatpush1.msra.mxu0 0.0
      %1397 = vmatprep.subr.mxu0 0.0
      %1398 = vmatpush1.msra.mxu0 0.0
      %1399 = vmatprep.subr.mxu0 0.0
      %1400 = vmatpush1.msra.mxu0 0.0
      %1401 = vmatprep.subr.mxu0 0.0
      %1402 = vmatpush1.msra.mxu0 0.0
      %1403 = vmatprep.subr.mxu0 0.0
      %1404 = vmatpush1.msra.mxu0 0.0
      %1405 = vmatprep.subr.mxu0 0.0
      %1406 = vmatpush1.msra.mxu0 0.0
      %1407 = vmatprep.subr.mxu0 0.0
      %1408 = vmatpush1.msra.mxu0 0.0
      %1409 = vmatprep.subr.mxu0 0.0
      %1410 = vmatpush1.msra.mxu0 0.0
      %1411 = vmatprep.subr.mxu0 0.0
      %1412 = vmatpush1.msra.mxu0 0.0
      %1413 = vmatprep.subr.mxu0 0.0
      %1414 = vmatpush1.msra.mxu0 0.0
      %1415 = vmatprep.subr.mxu0 0.0
      %1416 = vmatpush1.msra.mxu0 0.0
      %1417 = vmatprep.mubr.f32.mxu0 0.0
      %1418 = vmatmul.mubr.f32.gmra.mrb[0].mxu0 %v1351
      %v1419 = vpop.f32.mrb[0].mxu0
      %v1420 = vadd.f32 0.0, %v1419
      %v1421 = vpop.f32.mrb[0].mxu0
      %1422 = vdwg.mxu0
      %v1423 = vadd.f32 %v1344, %v1420
      %s1424 = scalar_lea.vmem %s8, 48
      %v1425 = vld [vmem:[%s1424] sm:$0xff]
      %v1426 = vld [vmem:[%s1424 + $0x8] sm:$0xff]
      %v1428 = vsel %vm804, %v1193, 0
      %1430 = vmatprep.subr.mxu0 0.0
      %1431 = vmatpush1.msra.mxu0 %v1425
      %1432 = vmatprep.subr.mxu0 0.0
      %1433 = vmatpush1.msra.mxu0 %v1426
      %1434 = vmatprep.subr.mxu0 0.0
      %1435 = vmatpush1.msra.mxu0 0.0
      %1436 = vmatprep.subr.mxu0 0.0
      %1437 = vmatpush1.msra.mxu0 0.0
      %1438 = vmatprep.subr.mxu0 0.0
      %1439 = vmatpush1.msra.mxu0 0.0
      %1440 = vmatprep.subr.mxu0 0.0
      %1441 = vmatpush1.msra.mxu0 0.0
      %1442 = vmatprep.subr.mxu0 0.0
      %1443 = vmatpush1.msra.mxu0 0.0
      %1444 = vmatprep.subr.mxu0 0.0
      %1445 = vmatpush1.msra.mxu0 0.0
      %1446 = vmatprep.subr.mxu0 0.0
      %1447 = vmatpush1.msra.mxu0 0.0
      %1448 = vmatprep.subr.mxu0 0.0
      %1449 = vmatpush1.msra.mxu0 0.0
      %1450 = vmatprep.subr.mxu0 0.0
      %1451 = vmatpush1.msra.mxu0 0.0
      %1452 = vmatprep.subr.mxu0 0.0
      %1453 = vmatpush1.msra.mxu0 0.0
      %1454 = vmatprep.subr.mxu0 0.0
      %1455 = vmatpush1.msra.mxu0 0.0
      %1456 = vmatprep.subr.mxu0 0.0
      %1457 = vmatpush1.msra.mxu0 0.0
      %1458 = vmatprep.subr.mxu0 0.0
      %1459 = vmatpush1.msra.mxu0 0.0
      %1460 = vmatprep.subr.mxu0 0.0
      %1461 = vmatpush1.msra.mxu0 0.0
      %1462 = vmatprep.subr.mxu0 0.0
      %1463 = vmatpush1.msra.mxu0 0.0
      %1464 = vmatprep.subr.mxu0 0.0
      %1465 = vmatpush1.msra.mxu0 0.0
      %1466 = vmatprep.subr.mxu0 0.0
      %1467 = vmatpush1.msra.mxu0 0.0
      %1468 = vmatprep.subr.mxu0 0.0
      %1469 = vmatpush1.msra.mxu0 0.0
      %1470 = vmatprep.subr.mxu0 0.0
      %1471 = vmatpush1.msra.mxu0 0.0
      %1472 = vmatprep.subr.mxu0 0.0
      %1473 = vmatpush1.msra.mxu0 0.0
      %1474 = vmatprep.subr.mxu0 0.0
      %1475 = vmatpush1.msra.mxu0 0.0
      %1476 = vmatprep.subr.mxu0 0.0
      %1477 = vmatpush1.msra.mxu0 0.0
      %1478 = vmatprep.subr.mxu0 0.0
      %1479 = vmatpush1.msra.mxu0 0.0
      %1480 = vmatprep.subr.mxu0 0.0
      %1481 = vmatpush1.msra.mxu0 0.0
      %1482 = vmatprep.subr.mxu0 0.0
      %1483 = vmatpush1.msra.mxu0 0.0
      %1484 = vmatprep.subr.mxu0 0.0
      %1485 = vmatpush1.msra.mxu0 0.0
      %1486 = vmatprep.subr.mxu0 0.0
      %1487 = vmatpush1.msra.mxu0 0.0
      %1488 = vmatprep.subr.mxu0 0.0
      %1489 = vmatpush1.msra.mxu0 0.0
      %1490 = vmatprep.subr.mxu0 0.0
      %1491 = vmatpush1.msra.mxu0 0.0
      %1492 = vmatprep.subr.mxu0 0.0
      %1493 = vmatpush1.msra.mxu0 0.0
      %1494 = vmatprep.mubr.f32.mxu0 0.0
      %1495 = vmatmul.mubr.f32.gmra.mrb[0].mxu0 %v1428
      %v1496 = vpop.f32.mrb[0].mxu0
      %v1497 = vadd.f32 0.0, %v1496
      %v1498 = vpop.f32.mrb[0].mxu0
      %1499 = vdwg.mxu0
      %v1500 = vadd.f32 %v1423, %v1497
      %1502 = vset.pattern.permute.xlu0 0
      %1503 = vperm.xlu0 %1502, %v692
      %v1504 = vpop.permute.xlu0 %1503
      %v1506 = vmul.f32 %v1500, %v1504
      %v1507 = vadd.f32 %v1506, %v1010
      %v1508 = vmul.f32 %v1507, 0.2
      %v1509 = vmax.f32 %v1507, %v1508
      %v1510 = vmul.f32 %v1509, 1.4142135
      %v1511 = vmax.f32 %v1510, -256.0
      %v1512 = vmin.f32 %v1511, 256.0
      %v1513 = vld [vmem:[%s10] sm:$0xff]
      %v1514 = vld [vmem:[%s11] sm:$0xff]
      %1516 = vset.pattern.permute.xlu0 0
      %1517 = vperm.xlu0 %1516, %v693
      %v1518 = vpop.permute.xlu0 %1517
      %v1520 = vmul.f32 %v1512, %v1518
      %1522 = vrot.lane.b32.xlu0 %v1520, 9
      %v1523 = vpop.permute.xlu0 %1522
      %vm1525 = vcmask 72704
      %v1526 = vsel %vm1525, 0.0, %v1523
      %vm1527 = vcmask 596992
      %v1528 = vsel %vm1527, %v1526, 0.0
      %v1529 = vand.u32 %v734, 7
      %vm1530 = vcmp.gt.s32.totalorder %v1529, 0
      %v1531 = vsel %vm1530, 1, 0
      %vm1532 = vcmp.eq.s32.totalorder %v1531, 1
      %v1533 = vsel %vm1532, %v1528, 0.0
      %vm1534 = vcmp.lt.s32.totalorder %v1529, 7
      %v1535 = vsel %vm1534, 1, 0
      %vm1536 = vcmp.eq.s32.totalorder %v1535, 1
      %1538 = vrot.lane.b32.xlu0 %v1528, 126
      %v1539 = vpop.permute.xlu0 %1538
      %v1541 = vsel %vm1536, %v1539, 0.0
      %1542 = vrot.lane.b32.xlu0 %v1528, 120
      %v1543 = vpop.permute.xlu0 %1542
      %v1545 = vsel %vm1532, %v1543, 0.0
      %1546 = vrot.lane.b32.xlu0 %v1528, 118
      %v1547 = vpop.permute.xlu0 %1546
      %v1549 = vsel %vm1536, %v1547, 0.0
      %1550 = vrot.lane.b32.xlu0 %v1528, 112
      %v1551 = vpop.permute.xlu0 %1550
      %v1553 = vsel %vm1532, %v1551, 0.0
      %1554 = vrot.lane.b32.xlu0 %v1528, 110
      %v1555 = vpop.permute.xlu0 %1554
      %v1557 = vsel %vm1536, %v1555, 0.0
      %1558 = vrot.lane.b32.xlu0 %v1528, 127
      %v1559 = vpop.permute.xlu0 %1558
      %1561 = vrot.lane.b32.xlu0 %v1528, 119
      %v1562 = vpop.permute.xlu0 %1561
      %1564 = vrot.lane.b32.xlu0 %v1528, 111
      %v1565 = vpop.permute.xlu0 %1564
      %vm1567 = vcmask 588800
      %v1569 = vsel %vm1567, %v1513, 0
      %1571 = vmatprep.subr.mxu0 0.0
      %1572 = vmatpush1.msra.mxu0 %v1533
      %1573 = vmatprep.subr.mxu0 0.0
      %1574 = vmatpush1.msra.mxu0 %v1559
      %1575 = vmatprep.subr.mxu0 0.0
      %1576 = vmatpush1.msra.mxu0 %v1541
      %1577 = vmatprep.subr.mxu0 0.0
      %1578 = vmatpush1.msra.mxu0 %v1545
      %1579 = vmatprep.subr.mxu0 0.0
      %1580 = vmatpush1.msra.mxu0 %v1562
      %1581 = vmatprep.subr.mxu0 0.0
      %1582 = vmatpush1.msra.mxu0 %v1549
      %1583 = vmatprep.subr.mxu0 0.0
      %1584 = vmatpush1.msra.mxu0 %v1553
      %1585 = vmatprep.subr.mxu0 0.0
      %1586 = vmatpush1.msra.mxu0 %v1565
      %1587 = vmatprep.subr.mxu0 0.0
      %1588 = vmatpush1.msra.mxu0 %v1557
      %1589 = vmatprep.subr.mxu0 0.0
      %1590 = vmatpush1.msra.mxu0 0.0
      %1591 = vmatprep.subr.mxu0 0.0
      %1592 = vmatpush1.msra.mxu0 0.0
      %1593 = vmatprep.subr.mxu0 0.0
      %1594 = vmatpush1.msra.mxu0 0.0
      %1595 = vmatprep.subr.mxu0 0.0
      %1596 = vmatpush1.msra.mxu0 0.0
      %1597 = vmatprep.subr.mxu0 0.0
      %1598 = vmatpush1.msra.mxu0 0.0
      %1599 = vmatprep.subr.mxu0 0.0
      %1600 = vmatpush1.msra.mxu0 0.0
      %1601 = vmatprep.subr.mxu0 0.0
      %1602 = vmatpush1.msra.mxu0 0.0
      %1603 = vmatprep.subr.mxu0 0.0
      %1604 = vmatpush1.msra.mxu0 0.0
      %1605 = vmatprep.subr.mxu0 0.0
      %1606 = vmatpush1.msra.mxu0 0.0
      %1607 = vmatprep.subr.mxu0 0.0
      %1608 = vmatpush1.msra.mxu0 0.0
      %1609 = vmatprep.subr.mxu0 0.0
      %1610 = vmatpush1.msra.mxu0 0.0
      %1611 = vmatprep.subr.mxu0 0.0
      %1612 = vmatpush1.msra.mxu0 0.0
      %1613 = vmatprep.subr.mxu0 0.0
      %1614 = vmatpush1.msra.mxu0 0.0
      %1615 = vmatprep.subr.mxu0 0.0
      %1616 = vmatpush1.msra.mxu0 0.0
      %1617 = vmatprep.subr.mxu0 0.0
      %1618 = vmatpush1.msra.mxu0 0.0
      %1619 = vmatprep.subr.mxu0 0.0
      %1620 = vmatpush1.msra.mxu0 0.0
      %1621 = vmatprep.subr.mxu0 0.0
      %1622 = vmatpush1.msra.mxu0 0.0
      %1623 = vmatprep.subr.mxu0 0.0
      %1624 = vmatpush1.msra.mxu0 0.0
      %1625 = vmatprep.subr.mxu0 0.0
      %1626 = vmatpush1.msra.mxu0 0.0
      %1627 = vmatprep.subr.mxu0 0.0
      %1628 = vmatpush1.msra.mxu0 0.0
      %1629 = vmatprep.subr.mxu0 0.0
      %1630 = vmatpush1.msra.mxu0 0.0
      %1631 = vmatprep.subr.mxu0 0.0
      %1632 = vmatpush1.msra.mxu0 0.0
      %1633 = vmatprep.subr.mxu0 0.0
      %1634 = vmatpush1.msra.mxu0 0.0
      %1635 = vmatprep.mubr.f32.mxu0 0.0
      %1636 = vmatmul.mubr.f32.gmra.mrb[0].mxu0 %v1569
      %v1637 = vpop.f32.mrb[0].mxu0
      %v1638 = vadd.f32 0.0, %v1637
      %v1639 = vpop.f32.mrb[0].mxu0
      %1640 = vdwg.mxu0
      %1642 = vset.pattern.permute.xlu0 0
      %1643 = vperm.xlu0 %1642, %v694
      %v1644 = vpop.permute.xlu0 %1643
      %v1646 = vmul.f32 %v1638, %v1644
      %v1647 = vadd.f32 %v1646, %v1514
      %v1648 = vmul.f32 %v1647, 0.2
      %v1649 = vmax.f32 %v1647, %v1648
      %v1650 = vmul.f32 %v1649, 1.4142135
      %v1651 = vmax.f32 %v1650, -256.0
      %v1652 = vmin.f32 %v1651, 256.0
      %v1653 = vld [vmem:[%s12] sm:$0x7]
      %v1654 = vld [vmem:[%s13] sm:$0x7]
      %1656 = vset.pattern.permute.xlu0 0
      %1657 = vperm.xlu0 %1656, %v695
      %v1658 = vpop.permute.xlu0 %1657
      %v1660 = vmul.f32 %v1652, %v1658
      %1662 = vset.pattern.permute.xlu0 0
      %1663 = vperm.xlu0 %1662, %v1654
      %v1664 = vpop.permute.xlu0 %1663
      %vm1666 = vcmask 64512
      %v1668 = vsel %vm1666, %v1653, 0
      %1670 = vmatprep.subr.mxu0 0.0
      %1671 = vmatpush1.msra.mxu0 %v1660
      %1672 = vmatprep.subr.mxu0 0.0
      %1673 = vmatpush1.msra.mxu0 0.0
      %1674 = vmatprep.subr.mxu0 0.0
      %1675 = vmatpush1.msra.mxu0 0.0
      %1676 = vmatprep.subr.mxu0 0.0
      %1677 = vmatpush1.msra.mxu0 0.0
      %1678 = vmatprep.subr.mxu0 0.0
      %1679 = vmatpush1.msra.mxu0 0.0
      %1680 = vmatprep.subr.mxu0 0.0
      %1681 = vmatpush1.msra.mxu0 0.0
      %1682 = vmatprep.subr.mxu0 0.0
      %1683 = vmatpush1.msra.mxu0 0.0
      %1684 = vmatprep.subr.mxu0 0.0
      %1685 = vmatpush1.msra.mxu0 0.0
      %1686 = vmatprep.subr.mxu0 0.0
      %1687 = vmatpush1.msra.mxu0 0.0
      %1688 = vmatprep.subr.mxu0 0.0
      %1689 = vmatpush1.msra.mxu0 0.0
      %1690 = vmatprep.subr.mxu0 0.0
      %1691 = vmatpush1.msra.mxu0 0.0
      %1692 = vmatprep.subr.mxu0 0.0
      %1693 = vmatpush1.msra.mxu0 0.0
      %1694 = vmatprep.subr.mxu0 0.0
      %1695 = vmatpush1.msra.mxu0 0.0
      %1696 = vmatprep.subr.mxu0 0.0
      %1697 = vmatpush1.msra.mxu0 0.0
      %1698 = vmatprep.subr.mxu0 0.0
      %1699 = vmatpush1.msra.mxu0 0.0
      %1700 = vmatprep.subr.mxu0 0.0
      %1701 = vmatpush1.msra.mxu0 0.0
      %1702 = vmatprep.subr.mxu0 0.0
      %1703 = vmatpush1.msra.mxu0 0.0
      %1704 = vmatprep.subr.mxu0 0.0
      %1705 = vmatpush1.msra.mxu0 0.0
      %1706 = vmatprep.subr.mxu0 0.0
      %1707 = vmatpush1.msra.mxu0 0.0
      %1708 = vmatprep.subr.mxu0 0.0
      %1709 = vmatpush1.msra.mxu0 0.0
      %1710 = vmatprep.subr.mxu0 0.0
      %1711 = vmatpush1.msra.mxu0 0.0
      %1712 = vmatprep.subr.mxu0 0.0
      %1713 = vmatpush1.msra.mxu0 0.0
      %1714 = vmatprep.subr.mxu0 0.0
      %1715 = vmatpush1.msra.mxu0 0.0
      %1716 = vmatprep.subr.mxu0 0.0
      %1717 = vmatpush1.msra.mxu0 0.0
      %1718 = vmatprep.subr.mxu0 0.0
      %1719 = vmatpush1.msra.mxu0 0.0
      %1720 = vmatprep.subr.mxu0 0.0
      %1721 = vmatpush1.msra.mxu0 0.0
      %1722 = vmatprep.subr.mxu0 0.0
      %1723 = vmatpush1.msra.mxu0 0.0
      %1724 = vmatprep.subr.mxu0 0.0
      %1725 = vmatpush1.msra.mxu0 0.0
      %1726 = vmatprep.subr.mxu0 0.0
      %1727 = vmatpush1.msra.mxu0 0.0
      %1728 = vmatprep.subr.mxu0 0.0
      %1729 = vmatpush1.msra.mxu0 0.0
      %1730 = vmatprep.subr.mxu0 0.0
      %1731 = vmatpush1.msra.mxu0 0.0
      %1732 = vmatprep.subr.mxu0 0.0
      %1733 = vmatpush1.msra.mxu0 0.0
      %1734 = vmatprep.mubr.f32.mxu0 0.0
      %1735 = vmatmul.mubr.f32.gmra.mrb[0].mxu0 %v1668
      %v1736 = vpop.f32.mrb[0].mxu0
      %v1737 = vadd.f32 %v1664, %v1736
      %v1738 = vpop.f32.mrb[0].mxu0
      %1739 = vdwg.mxu0
      %v1741 = vsel %vm804, %v999, 0
      %1743 = vmatprep.subr.mxu0 0.0
      %1744 = vmatpush1.msra.mxu0 %v1011
      %1745 = vmatprep.subr.mxu0 0.0
      %1746 = vmatpush1.msra.mxu0 %v1012
      %1747 = vmatprep.subr.mxu0 0.0
      %1748 = vmatpush1.msra.mxu0 0.0
      %1749 = vmatprep.subr.mxu0 0.0
      %1750 = vmatpush1.msra.mxu0 0.0
      %1751 = vmatprep.subr.mxu0 0.0
      %1752 = vmatpush1.msra.mxu0 0.0
      %1753 = vmatprep.subr.mxu0 0.0
      %1754 = vmatpush1.msra.mxu0 0.0
      %1755 = vmatprep.subr.mxu0 0.0
      %1756 = vmatpush1.msra.mxu0 0.0
      %1757 = vmatprep.subr.mxu0 0.0
      %1758 = vmatpush1.msra.mxu0 0.0
      %1759 = vmatprep.subr.mxu0 0.0
      %1760 = vmatpush1.msra.mxu0 0.0
      %1761 = vmatprep.subr.mxu0 0.0
      %1762 = vmatpush1.msra.mxu0 0.0
      %1763 = vmatprep.subr.mxu0 0.0
      %1764 = vmatpush1.msra.mxu0 0.0
      %1765 = vmatprep.subr.mxu0 0.0
      %1766 = vmatpush1.msra.mxu0 0.0
      %1767 = vmatprep.subr.mxu0 0.0
      %1768 = vmatpush1.msra.mxu0 0.0
      %1769 = vmatprep.subr.mxu0 0.0
      %1770 = vmatpush1.msra.mxu0 0.0
      %1771 = vmatprep.subr.mxu0 0.0
      %1772 = vmatpush1.msra.mxu0 0.0
      %1773 = vmatprep.subr.mxu0 0.0
      %1774 = vmatpush1.msra.mxu0 0.0
      %1775 = vmatprep.subr.mxu0 0.0
      %1776 = vmatpush1.msra.mxu0 0.0
      %1777 = vmatprep.subr.mxu0 0.0
      %1778 = vmatpush1.msra.mxu0 0.0
      %1779 = vmatprep.subr.mxu0 0.0
      %1780 = vmatpush1.msra.mxu0 0.0
      %1781 = vmatprep.subr.mxu0 0.0
      %1782 = vmatpush1.msra.mxu0 0.0
      %1783 = vmatprep.subr.mxu0 0.0
      %1784 = vmatpush1.msra.mxu0 0.0
      %1785 = vmatprep.subr.mxu0 0.0
      %1786 = vmatpush1.msra.mxu0 0.0
      %1787 = vmatprep.subr.mxu0 0.0
      %1788 = vmatpush1.msra.mxu0 0.0
      %1789 = vmatprep.subr.mxu0 0.0
      %1790 = vmatpush1.msra.mxu0 0.0
      %1791 = vmatprep.subr.mxu0 0.0
      %1792 = vmatpush1.msra.mxu0 0.0
      %1793 = vmatprep.subr.mxu0 0.0
      %1794 = vmatpush1.msra.mxu0 0.0
      %1795 = vmatprep.subr.mxu0 0.0
      %1796 = vmatpush1.msra.mxu0 0.0
      %1797 = vmatprep.subr.mxu0 0.0
      %1798 = vmatpush1.msra.mxu0 0.0
      %1799 = vmatprep.subr.mxu0 0.0
      %1800 = vmatpush1.msra.mxu0 0.0
      %1801 = vmatprep.subr.mxu0 0.0
      %1802 = vmatpush1.msra.mxu0 0.0
      %1803 = vmatprep.subr.mxu0 0.0
      %1804 = vmatpush1.msra.mxu0 0.0
      %1805 = vmatprep.subr.mxu0 0.0
      %1806 = vmatpush1.msra.mxu0 0.0
      %1807 = vmatprep.mubr.f32.mxu0 0.0
      %1808 = vmatmul.mubr.f32.gmra.mrb[0].mxu0 %v1741
      %v1809 = vpop.f32.mrb[0].mxu0
      %v1810 = vadd.f32 %v1737, %v1809
      %v1811 = vpop.f32.mrb[0].mxu0
      %1812 = vdwg.mxu0
      %v1813 = vld [vmem:[%s14] sm:$0xff]
      %v1814 = vld [vmem:[%s14 + $0x8] sm:$0xff]
      %v1815 = vld [vmem:[%s15] sm:$0xff]
      %v1816 = vld [vmem:[%s17] sm:$0xff]
      %v1817 = vld [vmem:[%s17 + $0x8] sm:$0xff]
      %v1818 = vld [vmem:[%s17 + $0x10] sm:$0xff]
      %v1819 = vld [vmem:[%s17 + $0x18] sm:$0xff]
      %v1820 = vld [vmem:[%s17 + $0x20] sm:$0xff]
      %v1821 = vld [vmem:[%s17 + $0x28] sm:$0xff]
      %v1822 = vld [vmem:[%s17 + $0x30] sm:$0xff]
      %v1823 = vld [vmem:[%s17 + $0x38] sm:$0xff]
      %v1824 = vld [vmem:[%s17 + $0x40] sm:$0xff]
      %v1825 = vld [vmem:[%s17 + $0x48] sm:$0xff]
      %v1826 = vld [vmem:[%s17 + $0x50] sm:$0xff]
      %v1827 = vld [vmem:[%s17 + $0x58] sm:$0xff]
      %v1828 = vld [vmem:[%s17 + $0x60] sm:$0xff]
      %v1829 = vld [vmem:[%s17 + $0x68] sm:$0xff]
      %v1830 = vld [vmem:[%s17 + $0x70] sm:$0xff]
      %v1831 = vld [vmem:[%s17 + $0x78] sm:$0xff]
      %1833 = vset.pattern.permute.xlu0 0
      %1834 = vperm.xlu0 %1833, %v696
      %v1835 = vpop.permute.xlu0 %1834
      %v1837 = vmul.f32 %v1652, %v1835
      %1839 = vrot.lane.b32.xlu0 %v1837, 9
      %v1840 = vpop.permute.xlu0 %1839
      %v1842 = vsel %vm1525, 0.0, %v1840
      %v1843 = vsel %vm1527, %v1842, 0.0
      %v1844 = vsel %vm1532, %v1843, 0.0
      %1846 = vrot.lane.b32.xlu0 %v1843, 126
      %v1847 = vpop.permute.xlu0 %1846
      %v1849 = vsel %vm1536, %v1847, 0.0
      %1850 = vrot.lane.b32.xlu0 %v1843, 120
      %v1851 = vpop.permute.xlu0 %1850
      %v1853 = vsel %vm1532, %v1851, 0.0
      %1854 = vrot.lane.b32.xlu0 %v1843, 118
      %v1855 = vpop.permute.xlu0 %1854
      %v1857 = vsel %vm1536, %v1855, 0.0
      %1858 = vrot.lane.b32.xlu0 %v1843, 112
      %v1859 = vpop.permute.xlu0 %1858
      %v1861 = vsel %vm1532, %v1859, 0.0
      %1862 = vrot.lane.b32.xlu0 %v1843, 110
      %v1863 = vpop.permute.xlu0 %1862
      %v1865 = vsel %vm1536, %v1863, 0.0
      %1866 = vrot.lane.b32.xlu0 %v1843, 127
      %v1867 = vpop.permute.xlu0 %1866
      %1869 = vrot.lane.b32.xlu0 %v1843, 119
      %v1870 = vpop.permute.xlu0 %1869
      %1872 = vrot.lane.b32.xlu0 %v1843, 111
      %v1873 = vpop.permute.xlu0 %1872
      %v1876 = vsel %vm1567, %v1813, 0
      %v1879 = vsel %vm1567, %v1814, 0
      %1881 = vmatprep.subr.mxu0 0.0
      %1882 = vmatpush1.msra.mxu0 %v1844
      %1883 = vmatprep.subr.mxu0 0.0
      %1884 = vmatpush1.msra.mxu0 %v1867
      %1885 = vmatprep.subr.mxu0 0.0
      %1886 = vmatpush1.msra.mxu0 %v1849
      %1887 = vmatprep.subr.mxu0 0.0
      %1888 = vmatpush1.msra.mxu0 %v1853
      %1889 = vmatprep.subr.mxu0 0.0
      %1890 = vmatpush1.msra.mxu0 %v1870
      %1891 = vmatprep.subr.mxu0 0.0
      %1892 = vmatpush1.msra.mxu0 %v1857
      %1893 = vmatprep.subr.mxu0 0.0
      %1894 = vmatpush1.msra.mxu0 %v1861
      %1895 = vmatprep.subr.mxu0 0.0
      %1896 = vmatpush1.msra.mxu0 %v1873
      %1897 = vmatprep.subr.mxu0 0.0
      %1898 = vmatpush1.msra.mxu0 %v1865
      %1899 = vmatprep.subr.mxu0 0.0
      %1900 = vmatpush1.msra.mxu0 0.0
      %1901 = vmatprep.subr.mxu0 0.0
      %1902 = vmatpush1.msra.mxu0 0.0
      %1903 = vmatprep.subr.mxu0 0.0
      %1904 = vmatpush1.msra.mxu0 0.0
      %1905 = vmatprep.subr.mxu0 0.0
      %1906 = vmatpush1.msra.mxu0 0.0
      %1907 = vmatprep.subr.mxu0 0.0
      %1908 = vmatpush1.msra.mxu0 0.0
      %1909 = vmatprep.subr.mxu0 0.0
      %1910 = vmatpush1.msra.mxu0 0.0
      %1911 = vmatprep.subr.mxu0 0.0
      %1912 = vmatpush1.msra.mxu0 0.0
      %1913 = vmatprep.subr.mxu0 0.0
      %1914 = vmatpush1.msra.mxu0 0.0
      %1915 = vmatprep.subr.mxu0 0.0
      %1916 = vmatpush1.msra.mxu0 0.0
      %1917 = vmatprep.subr.mxu0 0.0
      %1918 = vmatpush1.msra.mxu0 0.0
      %1919 = vmatprep.subr.mxu0 0.0
      %1920 = vmatpush1.msra.mxu0 0.0
      %1921 = vmatprep.subr.mxu0 0.0
      %1922 = vmatpush1.msra.mxu0 0.0
      %1923 = vmatprep.subr.mxu0 0.0
      %1924 = vmatpush1.msra.mxu0 0.0
      %1925 = vmatprep.subr.mxu0 0.0
      %1926 = vmatpush1.msra.mxu0 0.0
      %1927 = vmatprep.subr.mxu0 0.0
      %1928 = vmatpush1.msra.mxu0 0.0
      %1929 = vmatprep.subr.mxu0 0.0
      %1930 = vmatpush1.msra.mxu0 0.0
      %1931 = vmatprep.subr.mxu0 0.0
      %1932 = vmatpush1.msra.mxu0 0.0
      %1933 = vmatprep.subr.mxu0 0.0
      %1934 = vmatpush1.msra.mxu0 0.0
      %1935 = vmatprep.subr.mxu0 0.0
      %1936 = vmatpush1.msra.mxu0 0.0
      %1937 = vmatprep.subr.mxu0 0.0
      %1938 = vmatpush1.msra.mxu0 0.0
      %1939 = vmatprep.subr.mxu0 0.0
      %1940 = vmatpush1.msra.mxu0 0.0
      %1941 = vmatprep.subr.mxu0 0.0
      %1942 = vmatpush1.msra.mxu0 0.0
      %1943 = vmatprep.subr.mxu0 0.0
      %1944 = vmatpush1.msra.mxu0 0.0
      %1945 = vmatprep.mubr.f32.mxu0 0.0
      %1946 = vmatmul.mubr.f32.gmra.mrb[0].mxu0 %v1876
      %v1947 = vpop.f32.mrb[0].mxu0
      %v1948 = vadd.f32 0.0, %v1947
      %v1949 = vpop.f32.mrb[0].mxu0
      %1950 = vmatprep.mubr.f32.mxu0 0.0
      %1951 = vmatmul.mubr.f32.gmra.mrb[0].mxu0 %v1879
      %v1952 = vpop.f32.mrb[0].mxu0
      %v1953 = vadd.f32 0.0, %v1952
      %v1954 = vpop.f32.mrb[0].mxu0
      %1955 = vdwg.mxu0
      %v1956 = vld [vmem:[%s16] sm:$0xff]
      %v1957 = vld [vmem:[%s16 + $0x8] sm:$0xff]
      %v1958 = vld [vmem:[%s16 + $0x10] sm:$0xff]
      %v1959 = vld [vmem:[%s16 + $0x18] sm:$0xff]
      %v1960 = vld [vmem:[%s16 + $0x20] sm:$0xff]
      %v1961 = vld [vmem:[%s16 + $0x28] sm:$0xff]
      %v1962 = vld [vmem:[%s16 + $0x30] sm:$0xff]
      %v1963 = vld [vmem:[%s16 + $0x38] sm:$0xff]
      %v1964 = vld [vmem:[%s16 + $0x40] sm:$0xff]
      %v1965 = vld [vmem:[%s16 + $0x48] sm:$0xff]
      %v1966 = vld [vmem:[%s16 + $0x50] sm:$0xff]
      %v1967 = vld [vmem:[%s16 + $0x58] sm:$0xff]
      %v1968 = vld [vmem:[%s16 + $0x60] sm:$0xff]
      %v1969 = vld [vmem:[%s16 + $0x68] sm:$0xff]
      %v1970 = vld [vmem:[%s16 + $0x70] sm:$0xff]
      %v1971 = vld [vmem:[%s16 + $0x78] sm:$0xff]
      %s1972 = scalar_lea.vmem %s16, 128
      %v1973 = vld [vmem:[%s1972] sm:$0xff]
      %v1974 = vld [vmem:[%s1972 + $0x8] sm:$0xff]
      %v1975 = vld [vmem:[%s1972 + $0x10] sm:$0xff]
      %v1976 = vld [vmem:[%s1972 + $0x18] sm:$0xff]
      %v1977 = vld [vmem:[%s1972 + $0x20] sm:$0xff]
      %v1978 = vld [vmem:[%s1972 + $0x28] sm:$0xff]
      %v1979 = vld [vmem:[%s1972 + $0x30] sm:$0xff]
      %v1980 = vld [vmem:[%s1972 + $0x38] sm:$0xff]
      %v1981 = vld [vmem:[%s1972 + $0x40] sm:$0xff]
      %v1982 = vld [vmem:[%s1972 + $0x48] sm:$0xff]
      %v1983 = vld [vmem:[%s1972 + $0x50] sm:$0xff]
      %v1984 = vld [vmem:[%s1972 + $0x58] sm:$0xff]
      %v1985 = vld [vmem:[%s1972 + $0x60] sm:$0xff]
      %v1986 = vld [vmem:[%s1972 + $0x68] sm:$0xff]
      %v1987 = vld [vmem:[%s1972 + $0x70] sm:$0xff]
      %v1988 = vld [vmem:[%s1972 + $0x78] sm:$0xff]
      %v1990 = vrot.slane %v1948, 4
      %vm1991 = vcmask 523264
      %v1992 = vsel %vm1991, %v1990, 0
      %1994 = vmatprep.subr.mxu0 %v1974
      %1995 = vmatpush1.msra.mxu0 %v1973
      %1996 = vmatprep.subr.mxu0 %v1976
      %1997 = vmatpush1.msra.mxu0 %v1975
      %1998 = vmatprep.subr.mxu0 %v1978
      %1999 = vmatpush1.msra.mxu0 %v1977
      %2000 = vmatprep.subr.mxu0 %v1980
      %2001 = vmatpush1.msra.mxu0 %v1979
      %2002 = vmatprep.subr.mxu0 %v1982
      %2003 = vmatpush1.msra.mxu0 %v1981
      %2004 = vmatprep.subr.mxu0 %v1984
      %2005 = vmatpush1.msra.mxu0 %v1983
      %2006 = vmatprep.subr.mxu0 %v1986
      %2007 = vmatpush1.msra.mxu0 %v1985
      %2008 = vmatprep.subr.mxu0 %v1988
      %2009 = vmatpush1.msra.mxu0 %v1987
      %2010 = vmatprep.subr.mxu0 0.0
      %2011 = vmatpush1.msra.mxu0 0.0
      %2012 = vmatprep.subr.mxu0 0.0
      %2013 = vmatpush1.msra.mxu0 0.0
      %2014 = vmatprep.subr.mxu0 0.0
      %2015 = vmatpush1.msra.mxu0 0.0
      %2016 = vmatprep.subr.mxu0 0.0
      %2017 = vmatpush1.msra.mxu0 0.0
      %2018 = vmatprep.subr.mxu0 0.0
      %2019 = vmatpush1.msra.mxu0 0.0
      %2020 = vmatprep.subr.mxu0 0.0
      %2021 = vmatpush1.msra.mxu0 0.0
      %2022 = vmatprep.subr.mxu0 0.0
      %2023 = vmatpush1.msra.mxu0 0.0
      %2024 = vmatprep.subr.mxu0 0.0
      %2025 = vmatpush1.msra.mxu0 0.0
      %2026 = vmatprep.subr.mxu0 0.0
      %2027 = vmatpush1.msra.mxu0 0.0
      %2028 = vmatprep.subr.mxu0 0.0
      %2029 = vmatpush1.msra.mxu0 0.0
      %2030 = vmatprep.subr.mxu0 0.0
      %2031 = vmatpush1.msra.mxu0 0.0
      %2032 = vmatprep.subr.mxu0 0.0
      %2033 = vmatpush1.msra.mxu0 0.0
      %2034 = vmatprep.subr.mxu0 0.0
      %2035 = vmatpush1.msra.mxu0 0.0
      %2036 = vmatprep.subr.mxu0 0.0
      %2037 = vmatpush1.msra.mxu0 0.0
      %2038 = vmatprep.subr.mxu0 0.0
      %2039 = vmatpush1.msra.mxu0 0.0
      %2040 = vmatprep.subr.mxu0 0.0
      %2041 = vmatpush1.msra.mxu0 0.0
      %2042 = vmatprep.subr.mxu0 0.0
      %2043 = vmatpush1.msra.mxu0 0.0
      %2044 = vmatprep.subr.mxu0 0.0
      %2045 = vmatpush1.msra.mxu0 0.0
      %2046 = vmatprep.subr.mxu0 0.0
      %2047 = vmatpush1.msra.mxu0 0.0
      %2048 = vmatprep.subr.mxu0 0.0
      %2049 = vmatpush1.msra.mxu0 0.0
      %2050 = vmatprep.subr.mxu0 0.0
      %2051 = vmatpush1.msra.mxu0 0.0
      %2052 = vmatprep.subr.mxu0 0.0
      %2053 = vmatpush1.msra.mxu0 0.0
      %2054 = vmatprep.subr.mxu0 0.0
      %2055 = vmatpush1.msra.mxu0 0.0
      %2056 = vmatprep.subr.mxu0 0.0
      %2057 = vmatpush1.msra.mxu0 0.0
      %2058 = vmatprep.mubr.f32.mxu0 0.0
      %2059 = vmatmul.mubr.f32.gmra.mrb[0].mxu0 %v1992
      %v2060 = vpop.f32.mrb[0].mxu0
      %v2061 = vadd.f32 0.0, %v2060
      %v2062 = vpop.f32.mrb[0].mxu0
      %v2063 = vadd.f32 0.0, %v2062
      %2064 = vdwg.mxu0
      %v2065 = vsel %vm1991, %v1948, 0
      %2067 = vmatprep.subr.mxu0 %v1957
      %2068 = vmatpush1.msra.mxu0 %v1956
      %2069 = vmatprep.subr.mxu0 %v1959
      %2070 = vmatpush1.msra.mxu0 %v1958
      %2071 = vmatprep.subr.mxu0 %v1961
      %2072 = vmatpush1.msra.mxu0 %v1960
      %2073 = vmatprep.subr.mxu0 %v1963
      %2074 = vmatpush1.msra.mxu0 %v1962
      %2075 = vmatprep.subr.mxu0 %v1965
      %2076 = vmatpush1.msra.mxu0 %v1964
      %2077 = vmatprep.subr.mxu0 %v1967
      %2078 = vmatpush1.msra.mxu0 %v1966
      %2079 = vmatprep.subr.mxu0 %v1969
      %2080 = vmatpush1.msra.mxu0 %v1968
      %2081 = vmatprep.subr.mxu0 %v1971
      %2082 = vmatpush1.msra.mxu0 %v1970
      %2083 = vmatprep.subr.mxu0 0.0
      %2084 = vmatpush1.msra.mxu0 0.0
      %2085 = vmatprep.subr.mxu0 0.0
      %2086 = vmatpush1.msra.mxu0 0.0
      %2087 = vmatprep.subr.mxu0 0.0
      %2088 = vmatpush1.msra.mxu0 0.0
      %2089 = vmatprep.subr.mxu0 0.0
      %2090 = vmatpush1.msra.mxu0 0.0
      %2091 = vmatprep.subr.mxu0 0.0
      %2092 = vmatpush1.msra.mxu0 0.0
      %2093 = vmatprep.subr.mxu0 0.0
      %2094 = vmatpush1.msra.mxu0 0.0
      %2095 = vmatprep.subr.mxu0 0.0
      %2096 = vmatpush1.msra.mxu0 0.0
      %2097 = vmatprep.subr.mxu0 0.0
      %2098 = vmatpush1.msra.mxu0 0.0
      %2099 = vmatprep.subr.mxu0 0.0
      %2100 = vmatpush1.msra.mxu0 0.0
      %2101 = vmatprep.subr.mxu0 0.0
      %2102 = vmatpush1.msra.mxu0 0.0
      %2103 = vmatprep.subr.mxu0 0.0
      %2104 = vmatpush1.msra.mxu0 0.0
      %2105 = vmatprep.subr.mxu0 0.0
      %2106 = vmatpush1.msra.mxu0 0.0
      %2107 = vmatprep.subr.mxu0 0.0
      %2108 = vmatpush1.msra.mxu0 0.0
      %2109 = vmatprep.subr.mxu0 0.0
      %2110 = vmatpush1.msra.mxu0 0.0
      %2111 = vmatprep.subr.mxu0 0.0
      %2112 = vmatpush1.msra.mxu0 0.0
      %2113 = vmatprep.subr.mxu0 0.0
      %2114 = vmatpush1.msra.mxu0 0.0
      %2115 = vmatprep.subr.mxu0 0.0
      %2116 = vmatpush1.msra.mxu0 0.0
      %2117 = vmatprep.subr.mxu0 0.0
      %2118 = vmatpush1.msra.mxu0 0.0
      %2119 = vmatprep.subr.mxu0 0.0
      %2120 = vmatpush1.msra.mxu0 0.0
      %2121 = vmatprep.subr.mxu0 0.0
      %2122 = vmatpush1.msra.mxu0 0.0
      %2123 = vmatprep.subr.mxu0 0.0
      %2124 = vmatpush1.msra.mxu0 0.0
      %2125 = vmatprep.subr.mxu0 0.0
      %2126 = vmatpush1.msra.mxu0 0.0
      %2127 = vmatprep.subr.mxu0 0.0
      %2128 = vmatpush1.msra.mxu0 0.0
      %2129 = vmatprep.subr.mxu0 0.0
      %2130 = vmatpush1.msra.mxu0 0.0
      %2131 = vmatprep.mubr.f32.mxu0 0.0
      %2132 = vmatmul.mubr.f32.gmra.mrb[0].mxu0 %v2065
      %v2133 = vpop.f32.mrb[0].mxu0
      %v2134 = vadd.f32 %v2061, %v2133
      %v2135 = vpop.f32.mrb[0].mxu0
      %v2136 = vadd.f32 %v2063, %v2135
      %2137 = vdwg.mxu0
      %s2138 = scalar_lea.vmem %s16, 256
      %v2139 = vld [vmem:[%s2138] sm:$0xff]
      %v2140 = vld [vmem:[%s2138 + $0x8] sm:$0xff]
      %v2141 = vld [vmem:[%s2138 + $0x10] sm:$0xff]
      %v2142 = vld [vmem:[%s2138 + $0x18] sm:$0xff]
      %v2143 = vld [vmem:[%s2138 + $0x20] sm:$0xff]
      %v2144 = vld [vmem:[%s2138 + $0x28] sm:$0xff]
      %v2145 = vld [vmem:[%s2138 + $0x30] sm:$0xff]
      %v2146 = vld [vmem:[%s2138 + $0x38] sm:$0xff]
      %v2147 = vld [vmem:[%s2138 + $0x40] sm:$0xff]
      %v2148 = vld [vmem:[%s2138 + $0x48] sm:$0xff]
      %v2149 = vld [vmem:[%s2138 + $0x50] sm:$0xff]
      %v2150 = vld [vmem:[%s2138 + $0x58] sm:$0xff]
      %v2151 = vld [vmem:[%s2138 + $0x60] sm:$0xff]
      %v2152 = vld [vmem:[%s2138 + $0x68] sm:$0xff]
      %v2153 = vld [vmem:[%s2138 + $0x70] sm:$0xff]
      %v2154 = vld [vmem:[%s2138 + $0x78] sm:$0xff]
      %v2156 = vsel %vm1991, %v1953, 0
      %2158 = vmatprep.subr.mxu0 %v2140
      %2159 = vmatpush1.msra.mxu0 %v2139
      %2160 = vmatprep.subr.mxu0 %v2142
      %2161 = vmatpush1.msra.mxu0 %v2141
      %2162 = vmatprep.subr.mxu0 %v2144
      %2163 = vmatpush1.msra.mxu0 %v2143
      %2164 = vmatprep.subr.mxu0 %v2146
      %2165 = vmatpush1.msra.mxu0 %v2145
      %2166 = vmatprep.subr.mxu0 %v2148
      %2167 = vmatpush1.msra.mxu0 %v2147
      %2168 = vmatprep.subr.mxu0 %v2150
      %2169 = vmatpush1.msra.mxu0 %v2149
      %2170 = vmatprep.subr.mxu0 %v2152
      %2171 = vmatpush1.msra.mxu0 %v2151
      %2172 = vmatprep.subr.mxu0 %v2154
      %2173 = vmatpush1.msra.mxu0 %v2153
      %2174 = vmatprep.subr.mxu0 0.0
      %2175 = vmatpush1.msra.mxu0 0.0
      %2176 = vmatprep.subr.mxu0 0.0
      %2177 = vmatpush1.msra.mxu0 0.0
      %2178 = vmatprep.subr.mxu0 0.0
      %2179 = vmatpush1.msra.mxu0 0.0
      %2180 = vmatprep.subr.mxu0 0.0
      %2181 = vmatpush1.msra.mxu0 0.0
      %2182 = vmatprep.subr.mxu0 0.0
      %2183 = vmatpush1.msra.mxu0 0.0
      %2184 = vmatprep.subr.mxu0 0.0
      %2185 = vmatpush1.msra.mxu0 0.0
      %2186 = vmatprep.subr.mxu0 0.0
      %2187 = vmatpush1.msra.mxu0 0.0
      %2188 = vmatprep.subr.mxu0 0.0
      %2189 = vmatpush1.msra.mxu0 0.0
      %2190 = vmatprep.subr.mxu0 0.0
      %2191 = vmatpush1.msra.mxu0 0.0
      %2192 = vmatprep.subr.mxu0 0.0
      %2193 = vmatpush1.msra.mxu0 0.0
      %2194 = vmatprep.subr.mxu0 0.0
      %2195 = vmatpush1.msra.mxu0 0.0
      %2196 = vmatprep.subr.mxu0 0.0
      %2197 = vmatpush1.msra.mxu0 0.0
      %2198 = vmatprep.subr.mxu0 0.0
      %2199 = vmatpush1.msra.mxu0 0.0
      %2200 = vmatprep.subr.mxu0 0.0
      %2201 = vmatpush1.msra.mxu0 0.0
      %2202 = vmatprep.subr.mxu0 0.0
      %2203 = vmatpush1.msra.mxu0 0.0
      %2204 = vmatprep.subr.mxu0 0.0
      %2205 = vmatpush1.msra.mxu0 0.0
      %2206 = vmatprep.subr.mxu0 0.0
      %2207 = vmatpush1.msra.mxu0 0.0
      %2208 = vmatprep.subr.mxu0 0.0
      %2209 = vmatpush1.msra.mxu0 0.0
      %2210 = vmatprep.subr.mxu0 0.0
      %2211 = vmatpush1.msra.mxu0 0.0
      %2212 = vmatprep.subr.mxu0 0.0
      %2213 = vmatpush1.msra.mxu0 0.0
      %2214 = vmatprep.subr.mxu0 0.0
      %2215 = vmatpush1.msra.mxu0 0.0
      %2216 = vmatprep.subr.mxu0 0.0
      %2217 = vmatpush1.msra.mxu0 0.0
      %2218 = vmatprep.subr.mxu0 0.0
      %2219 = vmatpush1.msra.mxu0 0.0
      %2220 = vmatprep.subr.mxu0 0.0
      %2221 = vmatpush1.msra.mxu0 0.0
      %2222 = vmatprep.mubr.f32.mxu0 0.0
      %2223 = vmatmul.mubr.f32.gmra.mrb[0].mxu0 %v2156
      %v2224 = vpop.f32.mrb[0].mxu0
      %v2225 = vadd.f32 0.0, %v2224
      %v2226 = vpop.f32.mrb[0].mxu0
      %v2227 = vadd.f32 0.0, %v2226
      %2228 = vdwg.mxu0
      %v2229 = vadd.f32 %v2134, %v2225
      %v2230 = vadd.f32 %v2136, %v2227
      %s2231 = scalar_lea.vmem %s16, 384
      %v2232 = vld [vmem:[%s2231] sm:$0xff]
      %v2233 = vld [vmem:[%s2231 + $0x8] sm:$0xff]
      %v2234 = vld [vmem:[%s2231 + $0x10] sm:$0xff]
      %v2235 = vld [vmem:[%s2231 + $0x18] sm:$0xff]
      %v2236 = vld [vmem:[%s2231 + $0x20] sm:$0xff]
      %v2237 = vld [vmem:[%s2231 + $0x28] sm:$0xff]
      %v2238 = vld [vmem:[%s2231 + $0x30] sm:$0xff]
      %v2239 = vld [vmem:[%s2231 + $0x38] sm:$0xff]
      %v2240 = vld [vmem:[%s2231 + $0x40] sm:$0xff]
      %v2241 = vld [vmem:[%s2231 + $0x48] sm:$0xff]
      %v2242 = vld [vmem:[%s2231 + $0x50] sm:$0xff]
      %v2243 = vld [vmem:[%s2231 + $0x58] sm:$0xff]
      %v2244 = vld [vmem:[%s2231 + $0x60] sm:$0xff]
      %v2245 = vld [vmem:[%s2231 + $0x68] sm:$0xff]
      %v2246 = vld [vmem:[%s2231 + $0x70] sm:$0xff]
      %v2247 = vld [vmem:[%s2231 + $0x78] sm:$0xff]
      %v2248 = vrot.slane %v1953, 4
      %v2249 = vsel %vm1991, %v2248, 0
      %2251 = vmatprep.subr.mxu0 %v2233
      %2252 = vmatpush1.msra.mxu0 %v2232
      %2253 = vmatprep.subr.mxu0 %v2235
      %2254 = vmatpush1.msra.mxu0 %v2234
      %2255 = vmatprep.subr.mxu0 %v2237
      %2256 = vmatpush1.msra.mxu0 %v2236
      %2257 = vmatprep.subr.mxu0 %v2239
      %2258 = vmatpush1.msra.mxu0 %v2238
      %2259 = vmatprep.subr.mxu0 %v2241
      %2260 = vmatpush1.msra.mxu0 %v2240
      %2261 = vmatprep.subr.mxu0 %v2243
      %2262 = vmatpush1.msra.mxu0 %v2242
      %2263 = vmatprep.subr.mxu0 %v2245
      %2264 = vmatpush1.msra.mxu0 %v2244
      %2265 = vmatprep.subr.mxu0 %v2247
      %2266 = vmatpush1.msra.mxu0 %v2246
      %2267 = vmatprep.subr.mxu0 0.0
      %2268 = vmatpush1.msra.mxu0 0.0
      %2269 = vmatprep.subr.mxu0 0.0
      %2270 = vmatpush1.msra.mxu0 0.0
      %2271 = vmatprep.subr.mxu0 0.0
      %2272 = vmatpush1.msra.mxu0 0.0
      %2273 = vmatprep.subr.mxu0 0.0
      %2274 = vmatpush1.msra.mxu0 0.0
      %2275 = vmatprep.subr.mxu0 0.0
      %2276 = vmatpush1.msra.mxu0 0.0
      %2277 = vmatprep.subr.mxu0 0.0
      %2278 = vmatpush1.msra.mxu0 0.0
      %2279 = vmatprep.subr.mxu0 0.0
      %2280 = vmatpush1.msra.mxu0 0.0
      %2281 = vmatprep.subr.mxu0 0.0
      %2282 = vmatpush1.msra.mxu0 0.0
      %2283 = vmatprep.subr.mxu0 0.0
      %2284 = vmatpush1.msra.mxu0 0.0
      %2285 = vmatprep.subr.mxu0 0.0
      %2286 = vmatpush1.msra.mxu0 0.0
      %2287 = vmatprep.subr.mxu0 0.0
      %2288 = vmatpush1.msra.mxu0 0.0
      %2289 = vmatprep.subr.mxu0 0.0
      %2290 = vmatpush1.msra.mxu0 0.0
      %2291 = vmatprep.subr.mxu0 0.0
      %2292 = vmatpush1.msra.mxu0 0.0
      %2293 = vmatprep.subr.mxu0 0.0
      %2294 = vmatpush1.msra.mxu0 0.0
      %2295 = vmatprep.subr.mxu0 0.0
      %2296 = vmatpush1.msra.mxu0 0.0
      %2297 = vmatprep.subr.mxu0 0.0
      %2298 = vmatpush1.msra.mxu0 0.0
      %2299 = vmatprep.subr.mxu0 0.0
      %2300 = vmatpush1.msra.mxu0 0.0
      %2301 = vmatprep.subr.mxu0 0.0
      %2302 = vmatpush1.msra.mxu0 0.0
      %2303 = vmatprep.subr.mxu0 0.0
      %2304 = vmatpush1.msra.mxu0 0.0
      %2305 = vmatprep.subr.mxu0 0.0
      %2306 = vmatpush1.msra.mxu0 0.0
      %2307 = vmatprep.subr.mxu0 0.0
      %2308 = vmatpush1.msra.mxu0 0.0
      %2309 = vmatprep.subr.mxu0 0.0
      %2310 = vmatpush1.msra.mxu0 0.0
      %2311 = vmatprep.subr.mxu0 0.0
      %2312 = vmatpush1.msra.mxu0 0.0
      %2313 = vmatprep.subr.mxu0 0.0
      %2314 = vmatpush1.msra.mxu0 0.0
      %2315 = vmatprep.mubr.f32.mxu0 0.0
      %2316 = vmatmul.mubr.f32.gmra.mrb[0].mxu0 %v2249
      %v2317 = vpop.f32.mrb[0].mxu0
      %v2318 = vadd.f32 0.0, %v2317
      %v2319 = vpop.f32.mrb[0].mxu0
      %v2320 = vadd.f32 0.0, %v2319
      %2321 = vdwg.mxu0
      %v2322 = vadd.f32 %v2229, %v2318
      %v2323 = vadd.f32 %v2230, %v2320
      %2325 = vset.pattern.permute.xlu0 0
      %2326 = vperm.xlu0 %2325, %v697
      %v2327 = vpop.permute.xlu0 %2326
      %v2329 = vmul.f32 %v2322, %v2327
      %v2330 = vmul.f32 %v2323, %v2327
      %v2332 = vcombine.high %v1815, %v1815
      %v2334 = vadd.f32 %v2329, %v1815
      %v2335 = vadd.f32 %v2330, %v2332
      %v2336 = vmul.f32 %v2334, 0.2
      %v2337 = vmul.f32 %v2335, 0.2
      %v2338 = vmax.f32 %v2334, %v2336
      %v2339 = vmax.f32 %v2335, %v2337
      %v2340 = vmul.f32 %v2338, 1.4142135
      %v2341 = vmul.f32 %v2339, 1.4142135
      %v2342 = vmax.f32 %v2340, -256.0
      %v2343 = vmax.f32 %v2341, -256.0
      %v2344 = vmin.f32 %v2342, 256.0
      %v2345 = vmin.f32 %v2343, 256.0
      %v2346 = vld [vmem:[%s18] sm:$0xf]
      %v2347 = vld [vmem:[%s19] sm:$0xff]
      %v2348 = vrot.slane %v2327, 4
      %v2350 = vmul.f32 %v2344, %v2348
      %v2351 = vmul.f32 %v2345, %v2348
      %2354 = vrot.lane.b32.xlu0 %v2350, 17
      %v2355 = vpop.permute.xlu0 %2354
      %2356 = vrot.lane.b32.xlu0 %v2351, 17
      %v2357 = vpop.permute.xlu0 %2356
      %vm2358 = vcmask 138240
      %v2359 = vsel %vm2358, %v2355, %v2357
      %v2363 = vsel %vm2358, 0.0, %v2355
      %v2364 = vsel %vm2358, %v2357, 0.0
      %v2365 = vadd.s32 %v734, 128
      %v2366 = vand.u32 %v734, 15
      %v2367 = vand.u32 %v2365, 15
      %vm2368 = vcmp.gt.s32.totalorder %v2366, 0
      %vm2369 = vcmp.gt.s32.totalorder %v2367, 0
      %v2370 = vsel %vm2368, 1, 0
      %v2371 = vsel %vm2369, 1, 0
      %vm2372 = vcmp.eq.s32.totalorder %v2370, 1
      %vm2373 = vcmp.eq.s32.totalorder %v2371, 1
      %v2374 = vsel %vm2372, %v2363, 0.0
      %v2375 = vsel %vm2373, %v2359, 0.0
      %vm2376 = vcmp.lt.s32.totalorder %v2366, 15
      %vm2377 = vcmp.lt.s32.totalorder %v2367, 15
      %v2378 = vsel %vm2376, 1, 0
      %v2379 = vsel %vm2377, 1, 0
      %vm2380 = vcmp.eq.s32.totalorder %v2378, 1
      %vm2381 = vcmp.eq.s32.totalorder %v2379, 1
      %2384 = vrot.lane.b32.xlu0 %v2363, 126
      %v2385 = vpop.permute.xlu0 %2384
      %2386 = vrot.lane.b32.xlu0 %v2359, 126
      %v2387 = vpop.permute.xlu0 %2386
      %2388 = vrot.lane.b32.xlu0 %v2364, 126
      %v2389 = vpop.permute.xlu0 %2388
      %vm2390 = vcmask 1031168
      %v2391 = vsel %vm2390, %v2385, %v2387
      %v2392 = vsel %vm2390, %v2387, %v2389
      %v2395 = vsel %vm2380, %v2391, 0.0
      %v2396 = vsel %vm2381, %v2392, 0.0
      %2397 = vrot.lane.b32.xlu0 %v2363, 112
      %v2398 = vpop.permute.xlu0 %2397
      %2399 = vrot.lane.b32.xlu0 %v2359, 112
      %v2400 = vpop.permute.xlu0 %2399
      %2401 = vrot.lane.b32.xlu0 %v2364, 112
      %v2402 = vpop.permute.xlu0 %2401
      %vm2403 = vcmask 916480
      %v2404 = vsel %vm2403, %v2398, %v2400
      %v2405 = vsel %vm2403, %v2400, %v2402
      %v2408 = vsel %vm2372, %v2404, 0.0
      %v2409 = vsel %vm2373, %v2405, 0.0
      %2410 = vrot.lane.b32.xlu0 %v2363, 110
      %v2411 = vpop.permute.xlu0 %2410
      %2412 = vrot.lane.b32.xlu0 %v2359, 110
      %v2413 = vpop.permute.xlu0 %2412
      %2414 = vrot.lane.b32.xlu0 %v2364, 110
      %v2415 = vpop.permute.xlu0 %2414
      %vm2416 = vcmask 900096
      %v2417 = vsel %vm2416, %v2411, %v2413
      %v2418 = vsel %vm2416, %v2413, %v2415
      %v2421 = vsel %vm2380, %v2417, 0.0
      %v2422 = vsel %vm2381, %v2418, 0.0
      %2423 = vrot.lane.b32.xlu0 %v2363, 96
      %v2424 = vpop.permute.xlu0 %2423
      %2425 = vrot.lane.b32.xlu0 %v2359, 96
      %v2426 = vpop.permute.xlu0 %2425
      %2427 = vrot.lane.b32.xlu0 %v2364, 96
      %v2428 = vpop.permute.xlu0 %2427
      %vm2429 = vcmask 785408
      %v2430 = vsel %vm2429, %v2424, %v2426
      %v2431 = vsel %vm2429, %v2426, %v2428
      %v2434 = vsel %vm2372, %v2430, 0.0
      %v2435 = vsel %vm2373, %v2431, 0.0
      %2436 = vrot.lane.b32.xlu0 %v2363, 94
      %v2437 = vpop.permute.xlu0 %2436
      %2438 = vrot.lane.b32.xlu0 %v2359, 94
      %v2439 = vpop.permute.xlu0 %2438
      %2440 = vrot.lane.b32.xlu0 %v2364, 94
      %v2441 = vpop.permute.xlu0 %2440
      %vm2442 = vcmask 769024
      %v2443 = vsel %vm2442, %v2437, %v2439
      %v2444 = vsel %vm2442, %v2439, %v2441
      %v2447 = vsel %vm2380, %v2443, 0.0
      %v2448 = vsel %vm2381, %v2444, 0.0
      %v2449 = vrot.slane %v2363, 4
      %v2450 = vrot.slane %v2359, 4
      %v2451 = vrot.slane %v2364, 4
      %2452 = vrot.lane.b32.xlu0 %v2449, 127
      %v2453 = vpop.permute.xlu0 %2452
      %2454 = vrot.lane.b32.xlu0 %v2450, 127
      %v2455 = vpop.permute.xlu0 %2454
      %2456 = vrot.lane.b32.xlu0 %v2451, 127
      %v2457 = vpop.permute.xlu0 %2456
      %vm2458 = vcmask 1039360
      %v2459 = vsel %vm2458, %v2453, %v2455
      %v2460 = vsel %vm2458, %v2455, %v2457
      %v2465 = vrot.slane %v2408, 4
      %v2466 = vrot.slane %v2409, 4
      %2469 = vrot.lane.b32.xlu0 %v2363, 111
      %v2470 = vpop.permute.xlu0 %2469
      %2471 = vrot.lane.b32.xlu0 %v2359, 111
      %v2472 = vpop.permute.xlu0 %2471
      %2473 = vrot.lane.b32.xlu0 %v2364, 111
      %v2474 = vpop.permute.xlu0 %2473
      %vm2475 = vcmask 908288
      %v2476 = vsel %vm2475, %v2470, %v2472
      %v2477 = vsel %vm2475, %v2472, %v2474
      %v2482 = vrot.slane %v2421, 4
      %v2483 = vrot.slane %v2422, 4
      %2486 = vrot.lane.b32.xlu0 %v2449, 95
      %v2487 = vpop.permute.xlu0 %2486
      %2488 = vrot.lane.b32.xlu0 %v2450, 95
      %v2489 = vpop.permute.xlu0 %2488
      %2490 = vrot.lane.b32.xlu0 %v2451, 95
      %v2491 = vpop.permute.xlu0 %2490
      %vm2492 = vcmask 777216
      %v2493 = vsel %vm2492, %v2487, %v2489
      %v2494 = vsel %vm2492, %v2489, %v2491
      %vm2497 = vcmask 1043456
      %v2498 = vsel %vm2497, %v2374, %v2459
      %v2499 = vsel %vm2497, %v2375, %v2460
      %v2500 = vsel %vm2497, %v2395, %v2465
      %v2501 = vsel %vm2497, %v2396, %v2466
      %v2502 = vsel %vm2497, %v2476, %v2482
      %v2503 = vsel %vm2497, %v2477, %v2483
      %v2504 = vsel %vm2497, %v2434, %v2493
      %v2505 = vsel %vm2497, %v2435, %v2494
      %vm2506 = vcmask 293888
      %v2508 = vsel %vm2506, %v2346, 0
      %v2511 = vsel %vm2497, %v2447, 0
      %v2514 = vsel %vm2497, %v2448, 0
      %2516 = vmatprep.subr.mxu0 %v2499
      %2517 = vmatpush1.msra.mxu0 %v2498
      %2518 = vmatprep.subr.mxu0 %v2501
      %2519 = vmatpush1.msra.mxu0 %v2500
      %2520 = vmatprep.subr.mxu0 %v2503
      %2521 = vmatpush1.msra.mxu0 %v2502
      %2522 = vmatprep.subr.mxu0 %v2505
      %2523 = vmatpush1.msra.mxu0 %v2504
      %2524 = vmatprep.subr.mxu0 %v2514
      %2525 = vmatpush1.msra.mxu0 %v2511
      %2526 = vmatprep.subr.mxu0 0.0
      %2527 = vmatpush1.msra.mxu0 0.0
      %2528 = vmatprep.subr.mxu0 0.0
      %2529 = vmatpush1.msra.mxu0 0.0
      %2530 = vmatprep.subr.mxu0 0.0
      %2531 = vmatpush1.msra.mxu0 0.0
      %2532 = vmatprep.subr.mxu0 0.0
      %2533 = vmatpush1.msra.mxu0 0.0
      %2534 = vmatprep.subr.mxu0 0.0
      %2535 = vmatpush1.msra.mxu0 0.0
      %2536 = vmatprep.subr.mxu0 0.0
      %2537 = vmatpush1.msra.mxu0 0.0
      %2538 = vmatprep.subr.mxu0 0.0
      %2539 = vmatpush1.msra.mxu0 0.0
      %2540 = vmatprep.subr.mxu0 0.0
      %2541 = vmatpush1.msra.mxu0 0.0
      %2542 = vmatprep.subr.mxu0 0.0
      %2543 = vmatpush1.msra.mxu0 0.0
      %2544 = vmatprep.subr.mxu0 0.0
      %2545 = vmatpush1.msra.mxu0 0.0
      %2546 = vmatprep.subr.mxu0 0.0
      %2547 = vmatpush1.msra.mxu0 0.0
      %2548 = vmatprep.subr.mxu0 0.0
      %2549 = vmatpush1.msra.mxu0 0.0
      %2550 = vmatprep.subr.mxu0 0.0
      %2551 = vmatpush1.msra.mxu0 0.0
      %2552 = vmatprep.subr.mxu0 0.0
      %2553 = vmatpush1.msra.mxu0 0.0
      %2554 = vmatprep.subr.mxu0 0.0
      %2555 = vmatpush1.msra.mxu0 0.0
      %2556 = vmatprep.subr.mxu0 0.0
      %2557 = vmatpush1.msra.mxu0 0.0
      %2558 = vmatprep.subr.mxu0 0.0
      %2559 = vmatpush1.msra.mxu0 0.0
      %2560 = vmatprep.subr.mxu0 0.0
      %2561 = vmatpush1.msra.mxu0 0.0
      %2562 = vmatprep.subr.mxu0 0.0
      %2563 = vmatpush1.msra.mxu0 0.0
      %2564 = vmatprep.subr.mxu0 0.0
      %2565 = vmatpush1.msra.mxu0 0.0
      %2566 = vmatprep.subr.mxu0 0.0
      %2567 = vmatpush1.msra.mxu0 0.0
      %2568 = vmatprep.subr.mxu0 0.0
      %2569 = vmatpush1.msra.mxu0 0.0
      %2570 = vmatprep.subr.mxu0 0.0
      %2571 = vmatpush1.msra.mxu0 0.0
      %2572 = vmatprep.subr.mxu0 0.0
      %2573 = vmatpush1.msra.mxu0 0.0
      %2574 = vmatprep.subr.mxu0 0.0
      %2575 = vmatpush1.msra.mxu0 0.0
      %2576 = vmatprep.subr.mxu0 0.0
      %2577 = vmatpush1.msra.mxu0 0.0
      %2578 = vmatprep.subr.mxu0 0.0
      %2579 = vmatpush1.msra.mxu0 0.0
      %2580 = vmatprep.mubr.f32.mxu0 0.0
      %2581 = vmatmul.mubr.f32.gmra.mrb[0].mxu0 %v2508
      %v2582 = vpop.f32.mrb[0].mxu0
      %v2583 = vadd.f32 0.0, %v2582
      %v2584 = vpop.f32.mrb[0].mxu0
      %v2585 = vadd.f32 0.0, %v2584
      %2586 = vdwg.mxu0
      %2588 = vset.pattern.permute.xlu0 0
      %2589 = vperm.xlu0 %2588, %v698
      %v2590 = vpop.permute.xlu0 %2589
      %v2592 = vmul.f32 %v2583, %v2590
      %v2593 = vmul.f32 %v2585, %v2590
      %v2595 = vcombine.high %v2347, %v2347
      %v2597 = vadd.f32 %v2592, %v2347
      %v2598 = vadd.f32 %v2593, %v2595
      %v2599 = vmul.f32 %v2597, 0.2
      %v2600 = vmul.f32 %v2598, 0.2
      %v2601 = vmax.f32 %v2597, %v2599
      %v2602 = vmax.f32 %v2598, %v2600
      %v2603 = vmul.f32 %v2601, 1.4142135
      %v2604 = vmul.f32 %v2602, 1.4142135
      %v2605 = vmax.f32 %v2603, -256.0
      %v2606 = vmax.f32 %v2604, -256.0
      %v2607 = vmin.f32 %v2605, 256.0
      %v2608 = vmin.f32 %v2606, 256.0
      %v2609 = vld [vmem:[%s20] sm:$0x7]
      %v2610 = vld [vmem:[%s21] sm:$0x7]
      %v2611 = vrot.slane %v2590, 4
      %v2613 = vmul.f32 %v2607, %v2611
      %v2614 = vmul.f32 %v2608, %v2611
      %2616 = vset.pattern.permute.xlu0 0
      %2617 = vperm.xlu0 %2616, %v2610
      %v2618 = vpop.permute.xlu0 %2617
      %vm2620 = vcmask 31744
      %v2622 = vsel %vm2620, %v2609, 0
      %v2625 = vsel %vm2497, %v2613, 0
      %v2628 = vsel %vm2497, %v2614, 0
      %2630 = vmatprep.subr.mxu0 %v2628
      %2631 = vmatpush1.msra.mxu0 %v2625
      %2632 = vmatprep.subr.mxu0 0.0
      %2633 = vmatpush1.msra.mxu0 0.0
      %2634 = vmatprep.subr.mxu0 0.0
      %2635 = vmatpush1.msra.mxu0 0.0
      %2636 = vmatprep.subr.mxu0 0.0
      %2637 = vmatpush1.msra.mxu0 0.0
      %2638 = vmatprep.subr.mxu0 0.0
      %2639 = vmatpush1.msra.mxu0 0.0
      %2640 = vmatprep.subr.mxu0 0.0
      %2641 = vmatpush1.msra.mxu0 0.0
      %2642 = vmatprep.subr.mxu0 0.0
      %2643 = vmatpush1.msra.mxu0 0.0
      %2644 = vmatprep.subr.mxu0 0.0
      %2645 = vmatpush1.msra.mxu0 0.0
      %2646 = vmatprep.subr.mxu0 0.0
      %2647 = vmatpush1.msra.mxu0 0.0
      %2648 = vmatprep.subr.mxu0 0.0
      %2649 = vmatpush1.msra.mxu0 0.0
      %2650 = vmatprep.subr.mxu0 0.0
      %2651 = vmatpush1.msra.mxu0 0.0
      %2652 = vmatprep.subr.mxu0 0.0
      %2653 = vmatpush1.msra.mxu0 0.0
      %2654 = vmatprep.subr.mxu0 0.0
      %2655 = vmatpush1.msra.mxu0 0.0
      %2656 = vmatprep.subr.mxu0 0.0
      %2657 = vmatpush1.msra.mxu0 0.0
      %2658 = vmatprep.subr.mxu0 0.0
      %2659 = vmatpush1.msra.mxu0 0.0
      %2660 = vmatprep.subr.mxu0 0.0
      %2661 = vmatpush1.msra.mxu0 0.0
      %2662 = vmatprep.subr.mxu0 0.0
      %2663 = vmatpush1.msra.mxu0 0.0
      %2664 = vmatprep.subr.mxu0 0.0
      %2665 = vmatpush1.msra.mxu0 0.0
      %2666 = vmatprep.subr.mxu0 0.0
      %2667 = vmatpush1.msra.mxu0 0.0
      %2668 = vmatprep.subr.mxu0 0.0
      %2669 = vmatpush1.msra.mxu0 0.0
      %2670 = vmatprep.subr.mxu0 0.0
      %2671 = vmatpush1.msra.mxu0 0.0
      %2672 = vmatprep.subr.mxu0 0.0
      %2673 = vmatpush1.msra.mxu0 0.0
      %2674 = vmatprep.subr.mxu0 0.0
      %2675 = vmatpush1.msra.mxu0 0.0
      %2676 = vmatprep.subr.mxu0 0.0
      %2677 = vmatpush1.msra.mxu0 0.0
      %2678 = vmatprep.subr.mxu0 0.0
      %2679 = vmatpush1.msra.mxu0 0.0
      %2680 = vmatprep.subr.mxu0 0.0
      %2681 = vmatpush1.msra.mxu0 0.0
      %2682 = vmatprep.subr.mxu0 0.0
      %2683 = vmatpush1.msra.mxu0 0.0
      %2684 = vmatprep.subr.mxu0 0.0
      %2685 = vmatpush1.msra.mxu0 0.0
      %2686 = vmatprep.subr.mxu0 0.0
      %2687 = vmatpush1.msra.mxu0 0.0
      %2688 = vmatprep.subr.mxu0 0.0
      %2689 = vmatpush1.msra.mxu0 0.0
      %2690 = vmatprep.subr.mxu0 0.0
      %2691 = vmatpush1.msra.mxu0 0.0
      %2692 = vmatprep.subr.mxu0 0.0
      %2693 = vmatpush1.msra.mxu0 0.0
      %2694 = vmatprep.mubr.f32.mxu0 0.0
      %2695 = vmatmul.mubr.f32.gmra.mrb[0].mxu0 %v2622
      %v2696 = vpop.f32.mrb[0].mxu0
      %v2697 = vadd.f32 %v2618, %v2696
      %v2698 = vpop.f32.mrb[0].mxu0
      %v2699 = vadd.f32 %v2618, %v2698
      %2700 = vdwg.mxu0
      %v2702 = vsel %vm1991, %v1810, 0
      %2704 = vmatprep.subr.mxu0 %v1817
      %2705 = vmatpush1.msra.mxu0 %v1816
      %2706 = vmatprep.subr.mxu0 %v1819
      %2707 = vmatpush1.msra.mxu0 %v1818
      %2708 = vmatprep.subr.mxu0 %v1821
      %2709 = vmatpush1.msra.mxu0 %v1820
      %2710 = vmatprep.subr.mxu0 %v1823
      %2711 = vmatpush1.msra.mxu0 %v1822
      %2712 = vmatprep.subr.mxu0 %v1825
      %2713 = vmatpush1.msra.mxu0 %v1824
      %2714 = vmatprep.subr.mxu0 %v1827
      %2715 = vmatpush1.msra.mxu0 %v1826
      %2716 = vmatprep.subr.mxu0 %v1829
      %2717 = vmatpush1.msra.mxu0 %v1828
      %2718 = vmatprep.subr.mxu0 %v1831
      %2719 = vmatpush1.msra.mxu0 %v1830
      %2720 = vmatprep.subr.mxu0 0.0
      %2721 = vmatpush1.msra.mxu0 0.0
      %2722 = vmatprep.subr.mxu0 0.0
      %2723 = vmatpush1.msra.mxu0 0.0
      %2724 = vmatprep.subr.mxu0 0.0
      %2725 = vmatpush1.msra.mxu0 0.0
      %2726 = vmatprep.subr.mxu0 0.0
      %2727 = vmatpush1.msra.mxu0 0.0
      %2728 = vmatprep.subr.mxu0 0.0
      %2729 = vmatpush1.msra.mxu0 0.0
      %2730 = vmatprep.subr.mxu0 0.0
      %2731 = vmatpush1.msra.mxu0 0.0
      %2732 = vmatprep.subr.mxu0 0.0
      %2733 = vmatpush1.msra.mxu0 0.0
      %2734 = vmatprep.subr.mxu0 0.0
      %2735 = vmatpush1.msra.mxu0 0.0
      %2736 = vmatprep.subr.mxu0 0.0
      %2737 = vmatpush1.msra.mxu0 0.0
      %2738 = vmatprep.subr.mxu0 0.0
      %2739 = vmatpush1.msra.mxu0 0.0
      %2740 = vmatprep.subr.mxu0 0.0
      %2741 = vmatpush1.msra.mxu0 0.0
      %2742 = vmatprep.subr.mxu0 0.0
      %2743 = vmatpush1.msra.mxu0 0.0
      %2744 = vmatprep.subr.mxu0 0.0
      %2745 = vmatpush1.msra.mxu0 0.0
      %2746 = vmatprep.subr.mxu0 0.0
      %2747 = vmatpush1.msra.mxu0 0.0
      %2748 = vmatprep.subr.mxu0 0.0
      %2749 = vmatpush1.msra.mxu0 0.0
      %2750 = vmatprep.subr.mxu0 0.0
      %2751 = vmatpush1.msra.mxu0 0.0
      %2752 = vmatprep.subr.mxu0 0.0
      %2753 = vmatpush1.msra.mxu0 0.0
      %2754 = vmatprep.subr.mxu0 0.0
      %2755 = vmatpush1.msra.mxu0 0.0
      %2756 = vmatprep.subr.mxu0 0.0
      %2757 = vmatpush1.msra.mxu0 0.0
      %2758 = vmatprep.subr.mxu0 0.0
      %2759 = vmatpush1.msra.mxu0 0.0
      %2760 = vmatprep.subr.mxu0 0.0
      %2761 = vmatpush1.msra.mxu0 0.0
      %2762 = vmatprep.subr.mxu0 0.0
      %2763 = vmatpush1.msra.mxu0 0.0
      %2764 = vmatprep.subr.mxu0 0.0
      %2765 = vmatpush1.msra.mxu0 0.0
      %2766 = vmatprep.subr.mxu0 0.0
      %2767 = vmatpush1.msra.mxu0 0.0
      %2768 = vmatprep.mubr.f32.mxu0 0.0
      %2769 = vmatmul.mubr.f32.gmra.mrb[0].mxu0 %v2702
      %v2770 = vpop.f32.mrb[0].mxu0
      %v2771 = vadd.f32 %v2697, %v2770
      %v2772 = vpop.f32.mrb[0].mxu0
      %v2773 = vadd.f32 %v2699, %v2772
      %2774 = vdwg.mxu0
      %v2777 = vcombine.low %v2771, %v2773
      %2779 = vst [vmem:[%s683] sm:$0x77] %v2777
      %p2780 = scmp.lt.s32.totalorder %s33, 1
      %s2781 = scalar_select %p2780, %s33, 1
      %s2782 = smul.addr %s2781, 2
      %s2783 = smul.addr %s2782, 4
      %s2784 = scalar_lea.vmem %s22, %s2783
      // Predicated region
      $region109: #{synthesis_fwd.1} parent=107 // pred_check
        %p2785 = pneg %p518
      $region110: #{synthesis_fwd.1} parent=107 // pred_check_branch
        %2787 = sbr.rel (%p2785) target = $region112
      $region111: #{synthesis_fwd.1} parent=107 // pred_region
        _
      $region112: #{synthesis_fwd.1} parent=107 // pred_fallthru
        _
    $region108: #{synthesis_fwd.1} parent=5 // pred_fallthru
      _
    %p2788 = scmp.le.s32.totalorder 2, %s28
    // Predicated region
    $region113: #{synthesis_fwd.1} parent=5 // pred_check
      %p2789 = pneg %p2788
    $region114: #{synthesis_fwd.1} parent=5 // pred_check_branch
      %2791 = sbr.rel (%p2789) target = $region116
    $region115: #{synthesis_fwd.1} parent=5 // pred_region
      %s2792 = ssub.s32 %s28, 2
      // Predicated region
      $region117: #{synthesis_fwd.1} parent=115 // pred_check
        %p2793 = pneg %p524
      $region118: #{synthesis_fwd.1} parent=115 // pred_check_branch
        %2795 = sbr.rel (%p2793) target = $region120
      $region119: #{synthesis_fwd.1} parent=115 // pred_region
        %p2796 = scmp.lt.s32.totalorder %s34, 1
        %s2797 = scalar_select %p2796, %s34, 1
        %s2798 = smul.addr %s2797, 2
        %s2799 = smul.addr %s2798, 4
        %s2800 = scalar_lea.vmem %s22, %s2799
      $region120: #{synthesis_fwd.1} parent=115 // pred_fallthru
        _
    $region116: #{synthesis_fwd.1} parent=5 // pred_fallthru
      _
  $region6: #{synthesis_fwd.1} parent=0 // loop_footer
    %s32 = sadd.s32 1, %s28
  $region7: #{synthesis_fwd.1} parent=0 // loop_footer_branch
    %27 = sbr.rel target = $region3
  $region8: #{synthesis_fwd.1} parent=0 // loop_exit
    _

</llo_original>
